<compile_context>
chip_gen: v5e
topology: v5e:2x2
jax: 0.10.0
libtpu: 0.0.40
codegen_flags: <defaults>
</compile_context>

<pallas_src>
import functools

import jax
import jax.numpy as jnp
from jax.experimental import pallas as pl
from jax.experimental.pallas import tpu as pltpu


# -----------------------------------------------------------------------------
# Kernel 1: masked bidirectional LSTM recurrence with fused input projection
# and fused BatchNorm statistics.
# Grid = (direction, time-block); direction is 'parallel' (v7x core split),
# time is 'arbitrary' (sequential recurrence).
# -----------------------------------------------------------------------------
def _bilstm_kernel(lx_ref, x_ref, wih_ref, whh_ref, b_ref,
                   o_ref, ssum_ref, ssq_ref, h_ref, c_ref, gx_ref):
    d = pl.program_id(0)            # 0 = forward, 1 = backward
    s = pl.program_id(1)            # time-block index
    nb = pl.num_programs(1)
    ts, bp, _ = x_ref.shape
    H = h_ref.shape[1]

    @pl.when(s == 0)
    def _init():
        h_ref[...] = jnp.zeros_like(h_ref)
        c_ref[...] = jnp.zeros_like(c_ref)
        ssum_ref[...] = jnp.zeros_like(ssum_ref)
        ssq_ref[...] = jnp.zeros_like(ssq_ref)

    lx = lx_ref[...]                # (bp, 1) int32 valid lengths
    whh = whh_ref[0]                # (H, 4H) compute dtype, resident

    # Hoisted input projection for the whole time block: one MXU GEMM with
    # M = ts*bp; biases folded in; result staged in f32 VMEM scratch.
    gx_ref[...] = (
        jnp.dot(x_ref[...].reshape(ts * bp, x_ref.shape[2]), wih_ref[0],
                preferred_element_type=jnp.float32)
        + b_ref[0])

    def sig(v):
        # sigmoid(x) = 0.5*(1 + tanh(x/2)): one EUP push instead of exp+recip.
        return 0.5 * jnp.tanh(0.5 * v) + 0.5

    def step(local, t):
        # h/c live in VMEM scratch (re-read/updated each step) so the unrolled
        # loop does not carry 4 (bp,H) live values through the register file.
        h = h_ref[...]
        c = c_ref[...]
        gates = (gx_ref[local * bp:(local + 1) * bp, :]
                 + jnp.dot(h.astype(whh.dtype), whh,
                           preferred_element_type=jnp.float32))
        i = sig(gates[:, 0:H])
        f = sig(gates[:, H:2 * H])
        g = jnp.tanh(gates[:, 2 * H:3 * H])
        o = sig(gates[:, 3 * H:4 * H])
        c_new = f * c + i * g
        h_new = o * jnp.tanh(c_new)
        valid = jnp.broadcast_to(t < lx, (bp, H))    # mask hoisted, reused 3x
        h_m = jnp.where(valid, h_new, 0.0)           # packed-seq: zero past lx
        h_ref[...] = jnp.where(valid, h_new, h)      # freeze state past lx
        c_ref[...] = jnp.where(valid, c_new, c)
        # batch-major output block (bp, ts, H) -> no transpose pass later.
        o_ref[0, :, local:local + 1, :] = (
            h_m.reshape(bp, 1, H).astype(o_ref.dtype))
        # Fused BN statistics: cheap VPU adds into resident accumulators.
        ssum_ref[0] = ssum_ref[0] + h_m
        ssq_ref[0] = ssq_ref[0] + h_m * h_m

    @pl.when(d == 0)
    def _fwd():
        t0 = s * ts
        for j in range(ts):
            step(j, t0 + j)

    @pl.when(d == 1)
    def _bwd():
        t0 = (nb - 1 - s) * ts
        for j in range(ts):
            step(ts - 1 - j, t0 + ts - 1 - j)


def _bilstm_pallas(lx_p, x_tm, wih, whh, b, H, ts):
    t_pad, bp, I = x_tm.shape
    g4 = 4 * H
    nb = t_pad // ts
    cdt = x_tm.dtype
    csz = jnp.dtype(cdt).itemsize

    def tmap(d, s):  # direction-dependent time-block index
        return (1 - d) * s + d * (nb - 1 - s)

    out_shape = (
        jax.ShapeDtypeStruct((2, bp, t_pad, H), jnp.float32),   # hidden states
        jax.ShapeDtypeStruct((2, bp, H), jnp.float32),          # per-dir sum
        jax.ShapeDtypeStruct((2, bp, H), jnp.float32),          # per-dir sum^2
    )
    # VMEM working-set estimate (double-buffered inputs/outputs + scratch);
    # explicit limit with 2x headroom, capped below every generation's budget.
    est = (2 * ts * bp * I * csz + 2 * (I + H) * g4 * csz + 2 * g4 * 4
           + 2 * bp * 4 + 2 * bp * ts * H * 4 + 4 * 2 * bp * H * 4
           + 2 * bp * H * 4 + ts * bp * g4 * 4)
    vmem_limit = int(min(max(2 * est, 8 * 2 ** 20), 48 * 2 ** 20))

    return pl.pallas_call(
        _bilstm_kernel,
        out_shape=out_shape,
        grid_spec=pltpu.PrefetchScalarGridSpec(
            num_scalar_prefetch=0,
            grid=(2, nb),
            in_specs=[
                pl.BlockSpec((bp, 1), lambda d, s: (0, 0)),              # lengths
                pl.BlockSpec((ts, bp, I), lambda d, s: (tmap(d, s), 0, 0)),   # x
                pl.BlockSpec((1, I, g4), lambda d, s: (d, 0, 0)),        # W_ih
                pl.BlockSpec((1, H, g4), lambda d, s: (d, 0, 0)),        # W_hh
                pl.BlockSpec((1, 1, g4), lambda d, s: (d, 0, 0)),        # bias
            ],
            out_specs=[
                pl.BlockSpec((1, bp, ts, H), lambda d, s: (d, 0, tmap(d, s), 0)),
                pl.BlockSpec((1, bp, H), lambda d, s: (d, 0, 0)),
                pl.BlockSpec((1, bp, H), lambda d, s: (d, 0, 0)),
            ],
            scratch_shapes=[
                pltpu.VMEM((bp, H), jnp.float32),          # h
                pltpu.VMEM((bp, H), jnp.float32),          # c
                pltpu.VMEM((ts * bp, g4), jnp.float32),    # block gate pre-acts
            ],
        ),
        compiler_params=pltpu.CompilerParams(
            dimension_semantics=("parallel", "arbitrary"),
            vmem_limit_bytes=vmem_limit),
    )(lx_p, x_tm, wih, whh, b)


# -----------------------------------------------------------------------------
# Kernel 2: streaming BatchNorm apply + direction concat, batch-first output.
# -----------------------------------------------------------------------------
def _bn_apply_kernel(scale_ref, shift_ref, x_ref, o_ref):
    H = x_ref.shape[-1]
    sf = scale_ref[0:1, :].reshape(1, 1, H)
    tf = shift_ref[0:1, :].reshape(1, 1, H)
    sb = scale_ref[1:2, :].reshape(1, 1, H)
    tb = shift_ref[1:2, :].reshape(1, 1, H)
    o_ref[:, :, 0:H] = (x_ref[0] * sf + tf).astype(o_ref.dtype)
    o_ref[:, :, H:] = (x_ref[1] * sb + tb).astype(o_ref.dtype)


def _bn_apply_pallas(scale2, shift2, lstm_out, *, max_block_bytes=8 * 2 ** 20):
    _, bp, t_pad, H = lstm_out.shape
    # Largest time tile (multiple of 8, divisor of t_pad) fitting the budget;
    # decoupled from the LSTM time_block so this mem-bound kernel runs near
    # HBM roofline instead of paying per-step overhead on tiny tiles.
    ts_bn = 8
    c = 8
    while c <= t_pad:
        if t_pad % c == 0 and 2 * (2 * bp * c * H + bp * c * 2 * H) * 4 <= max_block_bytes:
            ts_bn = c
        c += 8
    nb = t_pad // ts_bn
    return pl.pallas_call(
        _bn_apply_kernel,
        out_shape=jax.ShapeDtypeStruct((bp, t_pad, 2 * H), jnp.float32),
        grid_spec=pltpu.PrefetchScalarGridSpec(
            num_scalar_prefetch=0,
            grid=(nb,),
            in_specs=[
                pl.BlockSpec((2, H), lambda s: (0, 0)),
                pl.BlockSpec((2, H), lambda s: (0, 0)),
                pl.BlockSpec((2, bp, ts_bn, H), lambda s: (0, 0, s, 0)),
            ],
            out_specs=pl.BlockSpec((bp, ts_bn, 2 * H), lambda s: (0, s, 0)),
        ),
        compiler_params=pltpu.CompilerParams(
            dimension_semantics=("parallel",)),
    )(scale2, shift2, lstm_out)


# -----------------------------------------------------------------------------
# Full module forward.
# -----------------------------------------------------------------------------
def rnn_bn_act_forward(x, lx, params, *, time_block=8,
                       compute_dtype=jnp.bfloat16):
    """RNNBNAct forward: x (B,T,I) f32, lx (B,) int32 -> ((B,T,2H) f32, lx)."""
    B, T, I = x.shape
    H = params["whh_f"].shape[0]
    eps = 1e-5
    cdt = compute_dtype
    time_block = max(8, ((time_block + 7) // 8) * 8)

    bp = max(8, ((B + 7) // 8) * 8)
    t_pad = ((T + time_block - 1) // time_block) * time_block

    # Time-major padded input, cast once to the MXU compute dtype.
    x_tm = jnp.transpose(x.astype(jnp.float32), (1, 0, 2))
    x_tm = jnp.pad(x_tm, ((0, t_pad - T), (0, bp - B), (0, 0))).astype(cdt)
    lx_p = jnp.pad(lx.astype(jnp.int32), (0, bp - B)).reshape(bp, 1)

    # Stacked per-direction weights; MXU operands in compute dtype, bias f32
    # (added after the f32-accumulated dot), cell math stays f32.
    wih = jnp.stack([params["wih_f"], params["wih_b"]]).astype(cdt)      # (2,I,4H)
    whh = jnp.stack([params["whh_f"], params["whh_b"]]).astype(cdt)      # (2,H,4H)
    b = jnp.stack([params["b_f"], params["b_b"]]).astype(jnp.float32)    # (2,1,4H)

    lstm_out, ssum, ssq = _bilstm_pallas(lx_p, x_tm, wih, whh, b, H, time_block)

    # Finalize BatchNorm statistics (training mode: biased batch stats over all
    # B*T positions; padded-to-zero positions contribute 0 to the sums).
    n = jnp.float32(B * T)
    sum_c = jnp.concatenate([jnp.sum(ssum[0], axis=0), jnp.sum(ssum[1], axis=0)])
    sq_c = jnp.concatenate([jnp.sum(ssq[0], axis=0), jnp.sum(ssq[1], axis=0)])
    mean = sum_c / n
    var = jnp.maximum(sq_c / n - mean * mean, 0.0)
    inv = jax.lax.rsqrt(var + eps)
    scale = params["bn_gamma"] * inv
    shift = params["bn_beta"] - mean * scale

    y = _bn_apply_pallas(scale.reshape(2, H), shift.reshape(2, H), lstm_out)
    out = y[:B, :T, :]                      # already batch-first (no transpose)
    # NOTE: self.act (GELU) is constructed but never applied in the PyTorch
    # forward, and dropout is a no-op with num_layers=1 -> neither is applied.
    return out, lx


# -----------------------------------------------------------------------------
# Pure-JAX reference (for correctness check).
# -----------------------------------------------------------------------------
def reference_forward(x, lx, params):
    hi = jax.lax.Precision.HIGHEST

    def run_dir(wih, whh, b, reverse):
        B, T, _ = x.shape
        H = whh.shape[0]

        def cell(carry, inputs):
            h, c = carry
            xt, t = inputs
            gates = (jnp.dot(xt, wih, precision=hi)
                     + jnp.dot(h, whh, precision=hi) + b)
            i = jax.nn.sigmoid(gates[:, :H])
            f = jax.nn.sigmoid(gates[:, H:2 * H])
            g = jnp.tanh(gates[:, 2 * H:3 * H])
            o = jax.nn.sigmoid(gates[:, 3 * H:])
            c_new = f * c + i * g
            h_new = o * jnp.tanh(c_new)
            valid = (t < lx)[:, None]
            h2 = jnp.where(valid, h_new, h)
            c2 = jnp.where(valid, c_new, c)
            return (h2, c2), jnp.where(valid, h_new, 0.0)

        ts = jnp.arange(T)
        xs = jnp.transpose(x, (1, 0, 2))
        if reverse:
            ts = ts[::-1]
            xs = xs[::-1]
        init = (jnp.zeros((B, H), jnp.float32), jnp.zeros((B, H), jnp.float32))
        _, outs = jax.lax.scan(cell, init, (xs, ts))
        outs = jnp.transpose(outs, (1, 0, 2))
        return outs[:, ::-1, :] if reverse else outs

    out_f = run_dir(params["wih_f"], params["whh_f"], params["b_f"], False)
    out_b = run_dir(params["wih_b"], params["whh_b"], params["b_b"], True)
    rnn_out = jnp.concatenate([out_f, out_b], axis=-1)
    mean = jnp.mean(rnn_out, axis=(0, 1), keepdims=True)
    var = jnp.mean((rnn_out - mean) ** 2, axis=(0, 1), keepdims=True)
    out = (rnn_out - mean) * jax.lax.rsqrt(var + 1e-5)
    out = out * params["bn_gamma"].reshape(1, 1, -1) + params["bn_beta"].reshape(1, 1, -1)
    return out, lx


# -----------------------------------------------------------------------------
if __name__ == "__main__":
    def make_params(key, I, H):
        keys = jax.random.split(key, 8)
        bound = 1.0 / jnp.sqrt(jnp.float32(H))
        uni = lambda k, shape: jax.random.uniform(k, shape, jnp.float32, -bound, bound)
        return {
            "wih_f": uni(keys[0], (I, 4 * H)),
            "whh_f": uni(keys[1], (H, 4 * H)),
            "b_f":   uni(keys[2], (1, 4 * H)) + uni(keys[3], (1, 4 * H)),
            "wih_b": uni(keys[4], (I, 4 * H)),
            "whh_b": uni(keys[5], (H, 4 * H)),
            "b_b":   uni(keys[6], (1, 4 * H)) + uni(keys[7], (1, 4 * H)),
            "bn_gamma": jnp.ones((2 * H,), jnp.float32),
            "bn_beta":  jnp.zeros((2 * H,), jnp.float32),
        }

    key = jax.random.PRNGKey(0)

    # --- config 1: tiny, unaligned H; exact-numerics f32 path checked tightly,
    #               bf16 production path checked loosely ---------------------
    B, T, I, H = 4, 10, 16, 32
    k1, k2, key = jax.random.split(key, 3)
    params = make_params(k1, I, H)
    x = jax.random.normal(k2, (B, T, I), jnp.float32)
    lx = jnp.array([T, 5, 9, 3], jnp.int32)

    ref_out, _ = reference_forward(x, lx, params)

    out32, l32 = jax.jit(functools.partial(
        rnn_bn_act_forward, params=params, compute_dtype=jnp.float32))(x, lx)
    out32 = jax.block_until_ready(out32)
    assert out32.shape == (B, T, 2 * H), out32.shape
    assert jnp.array_equal(l32, lx)
    err32 = float(jnp.max(jnp.abs(out32 - ref_out)))
    assert err32 < 1e-3, f"f32 path mismatch vs ref, max|d|={err32}"

    outbf, _ = jax.jit(functools.partial(
        rnn_bn_act_forward, params=params, compute_dtype=jnp.bfloat16))(x, lx)
    outbf = jax.block_until_ready(outbf)
    errbf = float(jnp.max(jnp.abs(outbf - ref_out)))
    merrbf = float(jnp.mean(jnp.abs(outbf - ref_out)))
    assert errbf < 0.5 and merrbf < 0.1, f"bf16 path mismatch: max={errbf} mean={merrbf}"

    # --- config 2: lane-aligned (production-shaped) H on the bf16 path -------
    B, T, I, H = 3, 13, 64, 128
    k1, k2, key = jax.random.split(key, 3)
    params = make_params(k1, I, H)
    x = jax.random.normal(k2, (B, T, I), jnp.float32)
    lx = jnp.array([13, 7, 2], jnp.int32)
    ref_out, _ = reference_forward(x, lx, params)
    outbf2, _ = jax.jit(functools.partial(
        rnn_bn_act_forward, params=params, compute_dtype=jnp.bfloat16))(x, lx)
    outbf2 = jax.block_until_ready(outbf2)
    assert outbf2.shape == (B, T, 2 * H), outbf2.shape
    errbf2 = float(jnp.max(jnp.abs(outbf2 - ref_out)))
    merrbf2 = float(jnp.mean(jnp.abs(outbf2 - ref_out)))
    assert errbf2 < 0.5 and merrbf2 < 0.1, \
        f"bf16 aligned-path mismatch: max={errbf2} mean={merrbf2}"

    print("KERNEL_OK")
</pallas_src>

<mosaic_0001>
module attributes {stable_mosaic.version = 11 : i64} {
  func.func @_bn_apply_kernel(%arg0: i32, %arg1: memref<2x32xf32, #tpu.memory_space<vmem>>, %arg2: memref<2x32xf32, #tpu.memory_space<vmem>>, %arg3: memref<2x8x16x32xf32, #tpu.memory_space<vmem>>, %arg4: memref<8x16x64xf32, #tpu.memory_space<vmem>>) attributes {dimension_semantics = [#tpu.dimension_semantics<parallel>], iteration_bounds = array<i64: 1>, scalar_prefetch = 0 : i64, scratch_operands = 0 : i64, tpu.core_type = #tpu.core_type<tc>, window_params = [{pipeline_mode = #tpu.pipeline_mode<synchronous>, transform_indices = @transform_0, window_bounds = array<i64: 2, 32>}, {pipeline_mode = #tpu.pipeline_mode<synchronous>, transform_indices = @transform_1, window_bounds = array<i64: 2, 32>}, {transform_indices = @transform_2, window_bounds = array<i64: 2, 8, 16, 32>}, {transform_indices = @transform_3, window_bounds = array<i64: 8, 16, 64>}]} {
    %c0 = arith.constant 0 : index
    %c0_0 = arith.constant 0 : index
    %0 = vector.load %arg1[%c0, %c0_0] : memref<2x32xf32, #tpu.memory_space<vmem>>, vector<1x32xf32>
    %1 = vector.shape_cast %0 : vector<1x32xf32> to vector<1x1x32xf32>
    %c0_1 = arith.constant 0 : index
    %c0_2 = arith.constant 0 : index
    %2 = vector.load %arg2[%c0_1, %c0_2] : memref<2x32xf32, #tpu.memory_space<vmem>>, vector<1x32xf32>
    %3 = vector.shape_cast %2 : vector<1x32xf32> to vector<1x1x32xf32>
    %c1 = arith.constant 1 : index
    %c0_3 = arith.constant 0 : index
    %4 = vector.load %arg1[%c1, %c0_3] : memref<2x32xf32, #tpu.memory_space<vmem>>, vector<1x32xf32>
    %5 = vector.shape_cast %4 : vector<1x32xf32> to vector<1x1x32xf32>
    %c1_4 = arith.constant 1 : index
    %c0_5 = arith.constant 0 : index
    %6 = vector.load %arg2[%c1_4, %c0_5] : memref<2x32xf32, #tpu.memory_space<vmem>>, vector<1x32xf32>
    %7 = vector.shape_cast %6 : vector<1x32xf32> to vector<1x1x32xf32>
    %c0_6 = arith.constant 0 : index
    %c0_7 = arith.constant 0 : index
    %c0_8 = arith.constant 0 : index
    %c0_9 = arith.constant 0 : index
    %8 = vector.load %arg3[%c0_6, %c0_7, %c0_8, %c0_9] : memref<2x8x16x32xf32, #tpu.memory_space<vmem>>, vector<1x8x16x32xf32>
    %9 = vector.shape_cast %8 : vector<1x8x16x32xf32> to vector<8x16x32xf32>
    %10 = vector.broadcast %1 : vector<1x1x32xf32> to vector<8x16x32xf32>
    %11 = arith.mulf %9, %10 : vector<8x16x32xf32>
    %12 = vector.broadcast %3 : vector<1x1x32xf32> to vector<8x16x32xf32>
    %13 = arith.addf %11, %12 : vector<8x16x32xf32>
    %c0_10 = arith.constant 0 : index
    %c0_11 = arith.constant 0 : index
    %c0_12 = arith.constant 0 : index
    %14 = vector.load %arg4[%c0_10, %c0_11, %c0_12] : memref<8x16x64xf32, #tpu.memory_space<vmem>>, vector<8x16x32xf32>
    tpu.vector_store %arg4[%c0_10, %c0_11, %c0_12], %13 {strides = array<i32>} : memref<8x16x64xf32, #tpu.memory_space<vmem>>, vector<8x16x32xf32>,
    %c1_13 = arith.constant 1 : index
    %c0_14 = arith.constant 0 : index
    %c0_15 = arith.constant 0 : index
    %c0_16 = arith.constant 0 : index
    %15 = vector.load %arg3[%c1_13, %c0_14, %c0_15, %c0_16] : memref<2x8x16x32xf32, #tpu.memory_space<vmem>>, vector<1x8x16x32xf32>
    %16 = vector.shape_cast %15 : vector<1x8x16x32xf32> to vector<8x16x32xf32>
    %17 = vector.broadcast %5 : vector<1x1x32xf32> to vector<8x16x32xf32>
    %18 = arith.mulf %16, %17 : vector<8x16x32xf32>
    %19 = vector.broadcast %7 : vector<1x1x32xf32> to vector<8x16x32xf32>
    %20 = arith.addf %18, %19 : vector<8x16x32xf32>
    %c0_17 = arith.constant 0 : index
    %c0_18 = arith.constant 0 : index
    %c32 = arith.constant 32 : index
    %21 = vector.load %arg4[%c0_17, %c0_18, %c32] : memref<8x16x64xf32, #tpu.memory_space<vmem>>, vector<8x16x32xf32>
    tpu.vector_store %arg4[%c0_17, %c0_18, %c32], %20 {strides = array<i32>} : memref<8x16x64xf32, #tpu.memory_space<vmem>>, vector<8x16x32xf32>,
    return
  }
  func.func @transform_0(%arg0: i32) -> (i32, i32) {
    %c0_i32 = arith.constant 0 : i32
    %c0_i32_0 = arith.constant 0 : i32
    %c0_i32_1 = arith.constant 0 : i32
    return %c0_i32, %c0_i32_0 : i32, i32
  }
  func.func @transform_1(%arg0: i32) -> (i32, i32) {
    %c0_i32 = arith.constant 0 : i32
    %c0_i32_0 = arith.constant 0 : i32
    %c0_i32_1 = arith.constant 0 : i32
    return %c0_i32, %c0_i32_0 : i32, i32
  }
  func.func @transform_2(%arg0: i32) -> (i32, i32, i32, i32) {
    %c0_i32 = arith.constant 0 : i32
    %c0_i32_0 = arith.constant 0 : i32
    %c0_i32_1 = arith.constant 0 : i32
    %c0_i32_2 = arith.constant 0 : i32
    return %c0_i32, %c0_i32_0, %arg0, %c0_i32_1 : i32, i32, i32, i32
  }
  func.func @transform_3(%arg0: i32) -> (i32, i32, i32) {
    %c0_i32 = arith.constant 0 : i32
    %c0_i32_0 = arith.constant 0 : i32
    %c0_i32_1 = arith.constant 0 : i32
    return %c0_i32, %arg0, %c0_i32_0 : i32, i32, i32
  }
}

module attributes {stable_mosaic.version = 11 : i64} {
  func.func @_bilstm_kernel(%arg0: i32, %arg1: i32, %arg2: memref<8x1xi32, #tpu.memory_space<vmem>>, %arg3: memref<8x8x16xf32, #tpu.memory_space<vmem>>, %arg4: memref<1x16x128xf32, #tpu.memory_space<vmem>>, %arg5: memref<1x32x128xf32, #tpu.memory_space<vmem>>, %arg6: memref<1x1x128xf32, #tpu.memory_space<vmem>>, %arg7: memref<1x8x8x32xf32, #tpu.memory_space<vmem>>, %arg8: memref<1x8x32xf32, #tpu.memory_space<vmem>>, %arg9: memref<1x8x32xf32, #tpu.memory_space<vmem>>, %arg10: memref<8x32xf32, #tpu.memory_space<vmem>>, %arg11: memref<8x32xf32, #tpu.memory_space<vmem>>, %arg12: memref<64x128xf32, #tpu.memory_space<vmem>>) attributes {dimension_semantics = [#tpu.dimension_semantics<parallel>, #tpu.dimension_semantics<arbitrary>], iteration_bounds = array<i64: 2, 2>, scalar_prefetch = 0 : i64, scratch_operands = 3 : i64, tpu.core_type = #tpu.core_type<tc>, window_params = [{pipeline_mode = #tpu.pipeline_mode<synchronous>, transform_indices = @transform_0, window_bounds = array<i64: 8, 1>}, {transform_indices = @transform_1, window_bounds = array<i64: 8, 8, 16>}, {transform_indices = @transform_2, window_bounds = array<i64: 1, 16, 128>}, {transform_indices = @transform_3, window_bounds = array<i64: 1, 32, 128>}, {transform_indices = @transform_4, window_bounds = array<i64: 1, 1, 128>}, {transform_indices = @transform_5, window_bounds = array<i64: 1, 8, 8, 32>}, {transform_indices = @transform_6, window_bounds = array<i64: 1, 8, 32>}, {transform_indices = @transform_7, window_bounds = array<i64: 1, 8, 32>}]} {
    %c0_i32 = arith.constant 0 : i32
    %0 = arith.cmpi eq, %arg1, %c0_i32 : i32
    %1 = arith.extui %0 : i1 to i32
    %c0_i32_0 = arith.constant 0 : i32
    %2 = arith.cmpi ne, %1, %c0_i32_0 : i32
    scf.if %2 {
      %cst_19 = arith.constant 0.000000e+00 : f32
      %22 = vector.broadcast %cst_19 : f32 to vector<8x32xf32>
      %c0_20 = arith.constant 0 : index
      %c0_21 = arith.constant 0 : index
      %23 = vector.load %arg10[%c0_20, %c0_21] : memref<8x32xf32, #tpu.memory_space<vmem>>, vector<8x32xf32>
      tpu.vector_store %arg10[%c0_20, %c0_21], %22 {strides = array<i32>} : memref<8x32xf32, #tpu.memory_space<vmem>>, vector<8x32xf32>,
      %cst_22 = arith.constant 0.000000e+00 : f32
      %24 = vector.broadcast %cst_22 : f32 to vector<8x32xf32>
      %c0_23 = arith.constant 0 : index
      %c0_24 = arith.constant 0 : index
      %25 = vector.load %arg11[%c0_23, %c0_24] : memref<8x32xf32, #tpu.memory_space<vmem>>, vector<8x32xf32>
      tpu.vector_store %arg11[%c0_23, %c0_24], %24 {strides = array<i32>} : memref<8x32xf32, #tpu.memory_space<vmem>>, vector<8x32xf32>,
      %cst_25 = arith.constant 0.000000e+00 : f32
      %26 = vector.broadcast %cst_25 : f32 to vector<1x8x32xf32>
      %c0_26 = arith.constant 0 : index
      %c0_27 = arith.constant 0 : index
      %c0_28 = arith.constant 0 : index
      %27 = vector.load %arg8[%c0_26, %c0_27, %c0_28] : memref<1x8x32xf32, #tpu.memory_space<vmem>>, vector<1x8x32xf32>
      tpu.vector_store %arg8[%c0_26, %c0_27, %c0_28], %26 {strides = array<i32>} : memref<1x8x32xf32, #tpu.memory_space<vmem>>, vector<1x8x32xf32>,
      %cst_29 = arith.constant 0.000000e+00 : f32
      %28 = vector.broadcast %cst_29 : f32 to vector<1x8x32xf32>
      %c0_30 = arith.constant 0 : index
      %c0_31 = arith.constant 0 : index
      %c0_32 = arith.constant 0 : index
      %29 = vector.load %arg9[%c0_30, %c0_31, %c0_32] : memref<1x8x32xf32, #tpu.memory_space<vmem>>, vector<1x8x32xf32>
      tpu.vector_store %arg9[%c0_30, %c0_31, %c0_32], %28 {strides = array<i32>} : memref<1x8x32xf32, #tpu.memory_space<vmem>>, vector<1x8x32xf32>,
    } else {
    }
    %c0 = arith.constant 0 : index
    %c0_1 = arith.constant 0 : index
    %3 = vector.load %arg2[%c0, %c0_1] : memref<8x1xi32, #tpu.memory_space<vmem>>, vector<8x1xi32>
    %c0_2 = arith.constant 0 : index
    %c0_3 = arith.constant 0 : index
    %c0_4 = arith.constant 0 : index
    %4 = vector.load %arg5[%c0_2, %c0_3, %c0_4] : memref<1x32x128xf32, #tpu.memory_space<vmem>>, vector<1x32x128xf32>
    %5 = vector.shape_cast %4 : vector<1x32x128xf32> to vector<32x128xf32>
    %c0_5 = arith.constant 0 : index
    %c0_6 = arith.constant 0 : index
    %c0_7 = arith.constant 0 : index
    %6 = vector.load %arg3[%c0_5, %c0_6, %c0_7] : memref<8x8x16xf32, #tpu.memory_space<vmem>>, vector<8x8x16xf32>
    %7 = vector.shape_cast %6 : vector<8x8x16xf32> to vector<64x16xf32>
    %c0_8 = arith.constant 0 : index
    %c0_9 = arith.constant 0 : index
    %c0_10 = arith.constant 0 : index
    %8 = vector.load %arg4[%c0_8, %c0_9, %c0_10] : memref<1x16x128xf32, #tpu.memory_space<vmem>>, vector<1x16x128xf32>
    %9 = vector.shape_cast %8 : vector<1x16x128xf32> to vector<16x128xf32>
    %cst = arith.constant dense<0.000000e+00> : vector<64x128xf32>
    %10 = tpu.matmul %7, %9, %cst {dimension_numbers = #tpu.dot_dimension_numbers<[1], [0], [0], [1], [0, 0, 1, 1], [], []>} : vector<64x16xf32>, vector<16x128xf32>, vector<64x128xf32> -> vector<64x128xf32>
    %c0_11 = arith.constant 0 : index
    %c0_12 = arith.constant 0 : index
    %c0_13 = arith.constant 0 : index
    %11 = vector.load %arg6[%c0_11, %c0_12, %c0_13] : memref<1x1x128xf32, #tpu.memory_space<vmem>>, vector<1x1x128xf32>
    %12 = vector.shape_cast %11 : vector<1x1x128xf32> to vector<1x128xf32>
    %13 = vector.broadcast %12 : vector<1x128xf32> to vector<64x128xf32>
    %14 = arith.addf %10, %13 : vector<64x128xf32>
    %c0_14 = arith.constant 0 : index
    %c0_15 = arith.constant 0 : index
    %15 = vector.load %arg12[%c0_14, %c0_15] : memref<64x128xf32, #tpu.memory_space<vmem>>, vector<64x128xf32>
    tpu.vector_store %arg12[%c0_14, %c0_15], %14 {strides = array<i32>} : memref<64x128xf32, #tpu.memory_space<vmem>>, vector<64x128xf32>,
    %c0_i32_16 = arith.constant 0 : i32
    %16 = arith.cmpi eq, %arg0, %c0_i32_16 : i32
    %17 = arith.extui %16 : i1 to i32
    %c0_i32_17 = arith.constant 0 : i32
    %18 = arith.cmpi ne, %17, %c0_i32_17 : i32
    scf.if %18 {
      %c8_i32 = arith.constant 8 : i32
      %22 = arith.muli %arg1, %c8_i32 : i32
      %c0_i32_19 = arith.constant 0 : i32
      %23 = arith.addi %22, %c0_i32_19 : i32
      %c0_20 = arith.constant 0 : index
      %c0_21 = arith.constant 0 : index
      %24 = vector.load %arg10[%c0_20, %c0_21] : memref<8x32xf32, #tpu.memory_space<vmem>>, vector<8x32xf32>
      %c0_22 = arith.constant 0 : index
      %c0_23 = arith.constant 0 : index
      %25 = vector.load %arg11[%c0_22, %c0_23] : memref<8x32xf32, #tpu.memory_space<vmem>>, vector<8x32xf32>
      %c0_24 = arith.constant 0 : index
      %c0_25 = arith.constant 0 : index
      %26 = vector.load %arg12[%c0_24, %c0_25] : memref<64x128xf32, #tpu.memory_space<vmem>>, vector<8x128xf32>
      %cst_26 = arith.constant dense<0.000000e+00> : vector<8x128xf32>
      %27 = tpu.matmul %24, %5, %cst_26 {dimension_numbers = #tpu.dot_dimension_numbers<[1], [0], [0], [1], [0, 0, 1, 1], [], []>} : vector<8x32xf32>, vector<32x128xf32>, vector<8x128xf32> -> vector<8x128xf32>
      %28 = arith.addf %26, %27 : vector<8x128xf32>
      %29 = vector.extract_strided_slice %28 {offsets = [0, 0], sizes = [8, 32], strides = [1, 1]} : vector<8x128xf32> to vector<8x32xf32>
      %cst_27 = arith.constant 5.000000e-01 : f32
      %30 = vector.broadcast %cst_27 : f32 to vector<8x32xf32>
      %31 = arith.mulf %30, %29 : vector<8x32xf32>
      %32 = math.tanh %31 : vector<8x32xf32>
      %cst_28 = arith.constant 5.000000e-01 : f32
      %33 = vector.broadcast %cst_28 : f32 to vector<8x32xf32>
      %34 = arith.mulf %33, %32 : vector<8x32xf32>
      %cst_29 = arith.constant 5.000000e-01 : f32
      %35 = vector.broadcast %cst_29 : f32 to vector<8x32xf32>
      %36 = arith.addf %34, %35 : vector<8x32xf32>
      %37 = vector.extract_strided_slice %28 {offsets = [0, 32], sizes = [8, 32], strides = [1, 1]} : vector<8x128xf32> to vector<8x32xf32>
      %cst_30 = arith.constant 5.000000e-01 : f32
      %38 = vector.broadcast %cst_30 : f32 to vector<8x32xf32>
      %39 = arith.mulf %38, %37 : vector<8x32xf32>
      %40 = math.tanh %39 : vector<8x32xf32>
      %cst_31 = arith.constant 5.000000e-01 : f32
      %41 = vector.broadcast %cst_31 : f32 to vector<8x32xf32>
      %42 = arith.mulf %41, %40 : vector<8x32xf32>
      %cst_32 = arith.constant 5.000000e-01 : f32
      %43 = vector.broadcast %cst_32 : f32 to vector<8x32xf32>
      %44 = arith.addf %42, %43 : vector<8x32xf32>
      %45 = vector.extract_strided_slice %28 {offsets = [0, 64], sizes = [8, 32], strides = [1, 1]} : vector<8x128xf32> to vector<8x32xf32>
      %46 = math.tanh %45 : vector<8x32xf32>
      %47 = vector.extract_strided_slice %28 {offsets = [0, 96], sizes = [8, 32], strides = [1, 1]} : vector<8x128xf32> to vector<8x32xf32>
      %cst_33 = arith.constant 5.000000e-01 : f32
      %48 = vector.broadcast %cst_33 : f32 to vector<8x32xf32>
      %49 = arith.mulf %48, %47 : vector<8x32xf32>
      %50 = math.tanh %49 : vector<8x32xf32>
      %cst_34 = arith.constant 5.000000e-01 : f32
      %51 = vector.broadcast %cst_34 : f32 to vector<8x32xf32>
      %52 = arith.mulf %51, %50 : vector<8x32xf32>
      %cst_35 = arith.constant 5.000000e-01 : f32
      %53 = vector.broadcast %cst_35 : f32 to vector<8x32xf32>
      %54 = arith.addf %52, %53 : vector<8x32xf32>
      %55 = arith.mulf %44, %25 : vector<8x32xf32>
      %56 = arith.mulf %36, %46 : vector<8x32xf32>
      %57 = arith.addf %55, %56 : vector<8x32xf32>
      %58 = math.tanh %57 : vector<8x32xf32>
      %59 = arith.mulf %54, %58 : vector<8x32xf32>
      %60 = vector.broadcast %23 : i32 to vector<8x1xi32>
      %61 = arith.cmpi slt, %60, %3 : vector<8x1xi32>
      %62 = vector.shape_cast %61 : vector<8x1xi1> to vector<8x1xi1>
      %63 = vector.broadcast %62 : vector<8x1xi1> to vector<8x32xi1>
      %cst_36 = arith.constant 0.000000e+00 : f32
      %64 = vector.broadcast %cst_36 : f32 to vector<8x32xf32>
      %65 = arith.select %63, %59, %64 : vector<8x32xi1>, vector<8x32xf32>
      %66 = arith.select %63, %59, %24 : vector<8x32xi1>, vector<8x32xf32>
      %c0_37 = arith.constant 0 : index
      %c0_38 = arith.constant 0 : index
      %67 = vector.load %arg10[%c0_37, %c0_38] : memref<8x32xf32, #tpu.memory_space<vmem>>, vector<8x32xf32>
      tpu.vector_store %arg10[%c0_37, %c0_38], %66 {strides = array<i32>} : memref<8x32xf32, #tpu.memory_space<vmem>>, vector<8x32xf32>,
      %68 = arith.select %63, %57, %25 : vector<8x32xi1>, vector<8x32xf32>
      %c0_39 = arith.constant 0 : index
      %c0_40 = arith.constant 0 : index
      %69 = vector.load %arg11[%c0_39, %c0_40] : memref<8x32xf32, #tpu.memory_space<vmem>>, vector<8x32xf32>
      tpu.vector_store %arg11[%c0_39, %c0_40], %68 {strides = array<i32>} : memref<8x32xf32, #tpu.memory_space<vmem>>, vector<8x32xf32>,
      %70 = vector.shape_cast %65 : vector<8x32xf32> to vector<8x1x32xf32>
      %c0_41 = arith.constant 0 : index
      %c0_42 = arith.constant 0 : index
      %c0_43 = arith.constant 0 : index
      %c0_44 = arith.constant 0 : index
      %71 = vector.load %arg7[%c0_41, %c0_42, %c0_43, %c0_44] : memref<1x8x8x32xf32, #tpu.memory_space<vmem>>, vector<1x8x1x32xf32>
      %72 = vector.shape_cast %71 : vector<1x8x1x32xf32> to vector<8x1x32xf32>
      %73 = vector.shape_cast %70 : vector<8x1x32xf32> to vector<1x8x1x32xf32>
      tpu.vector_store %arg7[%c0_41, %c0_42, %c0_43, %c0_44], %73 {strides = array<i32>} : memref<1x8x8x32xf32, #tpu.memory_space<vmem>>, vector<1x8x1x32xf32>,
      %c0_45 = arith.constant 0 : index
      %c0_46 = arith.constant 0 : index
      %c0_47 = arith.constant 0 : index
      %74 = vector.load %arg8[%c0_45, %c0_46, %c0_47] : memref<1x8x32xf32, #tpu.memory_space<vmem>>, vector<1x8x32xf32>
      %75 = vector.shape_cast %74 : vector<1x8x32xf32> to vector<8x32xf32>
      %76 = arith.addf %75, %65 : vector<8x32xf32>
      %c0_48 = arith.constant 0 : index
      %c0_49 = arith.constant 0 : index
      %c0_50 = arith.constant 0 : index
      %77 = vector.load %arg8[%c0_48, %c0_49, %c0_50] : memref<1x8x32xf32, #tpu.memory_space<vmem>>, vector<1x8x32xf32>
      %78 = vector.shape_cast %77 : vector<1x8x32xf32> to vector<8x32xf32>
      %79 = vector.shape_cast %76 : vector<8x32xf32> to vector<1x8x32xf32>
      tpu.vector_store %arg8[%c0_48, %c0_49, %c0_50], %79 {strides = array<i32>} : memref<1x8x32xf32, #tpu.memory_space<vmem>>, vector<1x8x32xf32>,
      %c0_51 = arith.constant 0 : index
      %c0_52 = arith.constant 0 : index
      %c0_53 = arith.constant 0 : index
      %80 = vector.load %arg9[%c0_51, %c0_52, %c0_53] : memref<1x8x32xf32, #tpu.memory_space<vmem>>, vector<1x8x32xf32>
      %81 = vector.shape_cast %80 : vector<1x8x32xf32> to vector<8x32xf32>
      %82 = arith.mulf %65, %65 : vector<8x32xf32>
      %83 = arith.addf %81, %82 : vector<8x32xf32>
      %c0_54 = arith.constant 0 : index
      %c0_55 = arith.constant 0 : index
      %c0_56 = arith.constant 0 : index
      %84 = vector.load %arg9[%c0_54, %c0_55, %c0_56] : memref<1x8x32xf32, #tpu.memory_space<vmem>>, vector<1x8x32xf32>
      %85 = vector.shape_cast %84 : vector<1x8x32xf32> to vector<8x32xf32>
      %86 = vector.shape_cast %83 : vector<8x32xf32> to vector<1x8x32xf32>
      tpu.vector_store %arg9[%c0_54, %c0_55, %c0_56], %86 {strides = array<i32>} : memref<1x8x32xf32, #tpu.memory_space<vmem>>, vector<1x8x32xf32>,
      %c1_i32_57 = arith.constant 1 : i32
      %87 = arith.addi %22, %c1_i32_57 : i32
      %c0_58 = arith.constant 0 : index
      %c0_59 = arith.constant 0 : index
      %88 = vector.load %arg10[%c0_58, %c0_59] : memref<8x32xf32, #tpu.memory_space<vmem>>, vector<8x32xf32>
      %c0_60 = arith.constant 0 : index
      %c0_61 = arith.constant 0 : index
      %89 = vector.load %arg11[%c0_60, %c0_61] : memref<8x32xf32, #tpu.memory_space<vmem>>, vector<8x32xf32>
      %c8 = arith.constant 8 : index
      %c0_62 = arith.constant 0 : index
      %90 = vector.load %arg12[%c8, %c0_62] : memref<64x128xf32, #tpu.memory_space<vmem>>, vector<8x128xf32>
      %cst_63 = arith.constant dense<0.000000e+00> : vector<8x128xf32>
      %91 = tpu.matmul %88, %5, %cst_63 {dimension_numbers = #tpu.dot_dimension_numbers<[1], [0], [0], [1], [0, 0, 1, 1], [], []>} : vector<8x32xf32>, vector<32x128xf32>, vector<8x128xf32> -> vector<8x128xf32>
      %92 = arith.addf %90, %91 : vector<8x128xf32>
      %93 = vector.extract_strided_slice %92 {offsets = [0, 0], sizes = [8, 32], strides = [1, 1]} : vector<8x128xf32> to vector<8x32xf32>
      %cst_64 = arith.constant 5.000000e-01 : f32
      %94 = vector.broadcast %cst_64 : f32 to vector<8x32xf32>
      %95 = arith.mulf %94, %93 : vector<8x32xf32>
      %96 = math.tanh %95 : vector<8x32xf32>
      %cst_65 = arith.constant 5.000000e-01 : f32
      %97 = vector.broadcast %cst_65 : f32 to vector<8x32xf32>
      %98 = arith.mulf %97, %96 : vector<8x32xf32>
      %cst_66 = arith.constant 5.000000e-01 : f32
      %99 = vector.broadcast %cst_66 : f32 to vector<8x32xf32>
      %100 = arith.addf %98, %99 : vector<8x32xf32>
      %101 = vector.extract_strided_slice %92 {offsets = [0, 32], sizes = [8, 32], strides = [1, 1]} : vector<8x128xf32> to vector<8x32xf32>
      %cst_67 = arith.constant 5.000000e-01 : f32
      %102 = vector.broadcast %cst_67 : f32 to vector<8x32xf32>
      %103 = arith.mulf %102, %101 : vector<8x32xf32>
      %104 = math.tanh %103 : vector<8x32xf32>
      %cst_68 = arith.constant 5.000000e-01 : f32
      %105 = vector.broadcast %cst_68 : f32 to vector<8x32xf32>
      %106 = arith.mulf %105, %104 : vector<8x32xf32>
      %cst_69 = arith.constant 5.000000e-01 : f32
      %107 = vector.broadcast %cst_69 : f32 to vector<8x32xf32>
      %108 = arith.addf %106, %107 : vector<8x32xf32>
      %109 = vector.extract_strided_slice %92 {offsets = [0, 64], sizes = [8, 32], strides = [1, 1]} : vector<8x128xf32> to vector<8x32xf32>
      %110 = math.tanh %109 : vector<8x32xf32>
      %111 = vector.extract_strided_slice %92 {offsets = [0, 96], sizes = [8, 32], strides = [1, 1]} : vector<8x128xf32> to vector<8x32xf32>
      %cst_70 = arith.constant 5.000000e-01 : f32
      %112 = vector.broadcast %cst_70 : f32 to vector<8x32xf32>
      %113 = arith.mulf %112, %111 : vector<8x32xf32>
      %114 = math.tanh %113 : vector<8x32xf32>
      %cst_71 = arith.constant 5.000000e-01 : f32
      %115 = vector.broadcast %cst_71 : f32 to vector<8x32xf32>
      %116 = arith.mulf %115, %114 : vector<8x32xf32>
      %cst_72 = arith.constant 5.000000e-01 : f32
      %117 = vector.broadcast %cst_72 : f32 to vector<8x32xf32>
      %118 = arith.addf %116, %117 : vector<8x32xf32>
      %119 = arith.mulf %108, %89 : vector<8x32xf32>
      %120 = arith.mulf %100, %110 : vector<8x32xf32>
      %121 = arith.addf %119, %120 : vector<8x32xf32>
      %122 = math.tanh %121 : vector<8x32xf32>
      %123 = arith.mulf %118, %122 : vector<8x32xf32>
      %124 = vector.broadcast %87 : i32 to vector<8x1xi32>
      %125 = arith.cmpi slt, %124, %3 : vector<8x1xi32>
      %126 = vector.shape_cast %125 : vector<8x1xi1> to vector<8x1xi1>
      %127 = vector.broadcast %126 : vector<8x1xi1> to vector<8x32xi1>
      %cst_73 = arith.constant 0.000000e+00 : f32
      %128 = vector.broadcast %cst_73 : f32 to vector<8x32xf32>
      %129 = arith.select %127, %123, %128 : vector<8x32xi1>, vector<8x32xf32>
      %130 = arith.select %127, %123, %88 : vector<8x32xi1>, vector<8x32xf32>
      %c0_74 = arith.constant 0 : index
      %c0_75 = arith.constant 0 : index
      %131 = vector.load %arg10[%c0_74, %c0_75] : memref<8x32xf32, #tpu.memory_space<vmem>>, vector<8x32xf32>
      tpu.vector_store %arg10[%c0_74, %c0_75], %130 {strides = array<i32>} : memref<8x32xf32, #tpu.memory_space<vmem>>, vector<8x32xf32>,
      %132 = arith.select %127, %121, %89 : vector<8x32xi1>, vector<8x32xf32>
      %c0_76 = arith.constant 0 : index
      %c0_77 = arith.constant 0 : index
      %133 = vector.load %arg11[%c0_76, %c0_77] : memref<8x32xf32, #tpu.memory_space<vmem>>, vector<8x32xf32>
      tpu.vector_store %arg11[%c0_76, %c0_77], %132 {strides = array<i32>} : memref<8x32xf32, #tpu.memory_space<vmem>>, vector<8x32xf32>,
      %134 = vector.shape_cast %129 : vector<8x32xf32> to vector<8x1x32xf32>
      %c0_78 = arith.constant 0 : index
      %c0_79 = arith.constant 0 : index
      %c1 = arith.constant 1 : index
      %c0_80 = arith.constant 0 : index
      %135 = vector.load %arg7[%c0_78, %c0_79, %c1, %c0_80] : memref<1x8x8x32xf32, #tpu.memory_space<vmem>>, vector<1x8x1x32xf32>
      %136 = vector.shape_cast %135 : vector<1x8x1x32xf32> to vector<8x1x32xf32>
      %137 = vector.shape_cast %134 : vector<8x1x32xf32> to vector<1x8x1x32xf32>
      tpu.vector_store %arg7[%c0_78, %c0_79, %c1, %c0_80], %137 {strides = array<i32>} : memref<1x8x8x32xf32, #tpu.memory_space<vmem>>, vector<1x8x1x32xf32>,
      %c0_81 = arith.constant 0 : index
      %c0_82 = arith.constant 0 : index
      %c0_83 = arith.constant 0 : index
      %138 = vector.load %arg8[%c0_81, %c0_82, %c0_83] : memref<1x8x32xf32, #tpu.memory_space<vmem>>, vector<1x8x32xf32>
      %139 = vector.shape_cast %138 : vector<1x8x32xf32> to vector<8x32xf32>
      %140 = arith.addf %139, %129 : vector<8x32xf32>
      %c0_84 = arith.constant 0 : index
      %c0_85 = arith.constant 0 : index
      %c0_86 = arith.constant 0 : index
      %141 = vector.load %arg8[%c0_84, %c0_85, %c0_86] : memref<1x8x32xf32, #tpu.memory_space<vmem>>, vector<1x8x32xf32>
      %142 = vector.shape_cast %141 : vector<1x8x32xf32> to vector<8x32xf32>
      %143 = vector.shape_cast %140 : vector<8x32xf32> to vector<1x8x32xf32>
      tpu.vector_store %arg8[%c0_84, %c0_85, %c0_86], %143 {strides = array<i32>} : memref<1x8x32xf32, #tpu.memory_space<vmem>>, vector<1x8x32xf32>,
      %c0_87 = arith.constant 0 : index
      %c0_88 = arith.constant 0 : index
      %c0_89 = arith.constant 0 : index
      %144 = vector.load %arg9[%c0_87, %c0_88, %c0_89] : memref<1x8x32xf32, #tpu.memory_space<vmem>>, vector<1x8x32xf32>
      %145 = vector.shape_cast %144 : vector<1x8x32xf32> to vector<8x32xf32>
      %146 = arith.mulf %129, %129 : vector<8x32xf32>
      %147 = arith.addf %145, %146 : vector<8x32xf32>
      %c0_90 = arith.constant 0 : index
      %c0_91 = arith.constant 0 : index
      %c0_92 = arith.constant 0 : index
      %148 = vector.load %arg9[%c0_90, %c0_91, %c0_92] : memref<1x8x32xf32, #tpu.memory_space<vmem>>, vector<1x8x32xf32>
      %149 = vector.shape_cast %148 : vector<1x8x32xf32> to vector<8x32xf32>
      %150 = vector.shape_cast %147 : vector<8x32xf32> to vector<1x8x32xf32>
      tpu.vector_store %arg9[%c0_90, %c0_91, %c0_92], %150 {strides = array<i32>} : memref<1x8x32xf32, #tpu.memory_space<vmem>>, vector<1x8x32xf32>,
      %c2_i32 = arith.constant 2 : i32
      %151 = arith.addi %22, %c2_i32 : i32
      %c0_93 = arith.constant 0 : index
      %c0_94 = arith.constant 0 : index
      %152 = vector.load %arg10[%c0_93, %c0_94] : memref<8x32xf32, #tpu.memory_space<vmem>>, vector<8x32xf32>
      %c0_95 = arith.constant 0 : index
      %c0_96 = arith.constant 0 : index
      %153 = vector.load %arg11[%c0_95, %c0_96] : memref<8x32xf32, #tpu.memory_space<vmem>>, vector<8x32xf32>
      %c16 = arith.constant 16 : index
      %c0_97 = arith.constant 0 : index
      %154 = vector.load %arg12[%c16, %c0_97] : memref<64x128xf32, #tpu.memory_space<vmem>>, vector<8x128xf32>
      %cst_98 = arith.constant dense<0.000000e+00> : vector<8x128xf32>
      %155 = tpu.matmul %152, %5, %cst_98 {dimension_numbers = #tpu.dot_dimension_numbers<[1], [0], [0], [1], [0, 0, 1, 1], [], []>} : vector<8x32xf32>, vector<32x128xf32>, vector<8x128xf32> -> vector<8x128xf32>
      %156 = arith.addf %154, %155 : vector<8x128xf32>
      %157 = vector.extract_strided_slice %156 {offsets = [0, 0], sizes = [8, 32], strides = [1, 1]} : vector<8x128xf32> to vector<8x32xf32>
      %cst_99 = arith.constant 5.000000e-01 : f32
      %158 = vector.broadcast %cst_99 : f32 to vector<8x32xf32>
      %159 = arith.mulf %158, %157 : vector<8x32xf32>
      %160 = math.tanh %159 : vector<8x32xf32>
      %cst_100 = arith.constant 5.000000e-01 : f32
      %161 = vector.broadcast %cst_100 : f32 to vector<8x32xf32>
      %162 = arith.mulf %161, %160 : vector<8x32xf32>
      %cst_101 = arith.constant 5.000000e-01 : f32
      %163 = vector.broadcast %cst_101 : f32 to vector<8x32xf32>
      %164 = arith.addf %162, %163 : vector<8x32xf32>
      %165 = vector.extract_strided_slice %156 {offsets = [0, 32], sizes = [8, 32], strides = [1, 1]} : vector<8x128xf32> to vector<8x32xf32>
      %cst_102 = arith.constant 5.000000e-01 : f32
      %166 = vector.broadcast %cst_102 : f32 to vector<8x32xf32>
      %167 = arith.mulf %166, %165 : vector<8x32xf32>
      %168 = math.tanh %167 : vector<8x32xf32>
      %cst_103 = arith.constant 5.000000e-01 : f32
      %169 = vector.broadcast %cst_103 : f32 to vector<8x32xf32>
      %170 = arith.mulf %169, %168 : vector<8x32xf32>
      %cst_104 = arith.constant 5.000000e-01 : f32
      %171 = vector.broadcast %cst_104 : f32 to vector<8x32xf32>
      %172 = arith.addf %170, %171 : vector<8x32xf32>
      %173 = vector.extract_strided_slice %156 {offsets = [0, 64], sizes = [8, 32], strides = [1, 1]} : vector<8x128xf32> to vector<8x32xf32>
      %174 = math.tanh %173 : vector<8x32xf32>
      %175 = vector.extract_strided_slice %156 {offsets = [0, 96], sizes = [8, 32], strides = [1, 1]} : vector<8x128xf32> to vector<8x32xf32>
      %cst_105 = arith.constant 5.000000e-01 : f32
      %176 = vector.broadcast %cst_105 : f32 to vector<8x32xf32>
      %177 = arith.mulf %176, %175 : vector<8x32xf32>
      %178 = math.tanh %177 : vector<8x32xf32>
      %cst_106 = arith.constant 5.000000e-01 : f32
      %179 = vector.broadcast %cst_106 : f32 to vector<8x32xf32>
      %180 = arith.mulf %179, %178 : vector<8x32xf32>
      %cst_107 = arith.constant 5.000000e-01 : f32
      %181 = vector.broadcast %cst_107 : f32 to vector<8x32xf32>
      %182 = arith.addf %180, %181 : vector<8x32xf32>
      %183 = arith.mulf %172, %153 : vector<8x32xf32>
      %184 = arith.mulf %164, %174 : vector<8x32xf32>
      %185 = arith.addf %183, %184 : vector<8x32xf32>
      %186 = math.tanh %185 : vector<8x32xf32>
      %187 = arith.mulf %182, %186 : vector<8x32xf32>
      %188 = vector.broadcast %151 : i32 to vector<8x1xi32>
      %189 = arith.cmpi slt, %188, %3 : vector<8x1xi32>
      %190 = vector.shape_cast %189 : vector<8x1xi1> to vector<8x1xi1>
      %191 = vector.broadcast %190 : vector<8x1xi1> to vector<8x32xi1>
      %cst_108 = arith.constant 0.000000e+00 : f32
      %192 = vector.broadcast %cst_108 : f32 to vector<8x32xf32>
      %193 = arith.select %191, %187, %192 : vector<8x32xi1>, vector<8x32xf32>
      %194 = arith.select %191, %187, %152 : vector<8x32xi1>, vector<8x32xf32>
      %c0_109 = arith.constant 0 : index
      %c0_110 = arith.constant 0 : index
      %195 = vector.load %arg10[%c0_109, %c0_110] : memref<8x32xf32, #tpu.memory_space<vmem>>, vector<8x32xf32>
      tpu.vector_store %arg10[%c0_109, %c0_110], %194 {strides = array<i32>} : memref<8x32xf32, #tpu.memory_space<vmem>>, vector<8x32xf32>,
      %196 = arith.select %191, %185, %153 : vector<8x32xi1>, vector<8x32xf32>
      %c0_111 = arith.constant 0 : index
      %c0_112 = arith.constant 0 : index
      %197 = vector.load %arg11[%c0_111, %c0_112] : memref<8x32xf32, #tpu.memory_space<vmem>>, vector<8x32xf32>
      tpu.vector_store %arg11[%c0_111, %c0_112], %196 {strides = array<i32>} : memref<8x32xf32, #tpu.memory_space<vmem>>, vector<8x32xf32>,
      %198 = vector.shape_cast %193 : vector<8x32xf32> to vector<8x1x32xf32>
      %c0_113 = arith.constant 0 : index
      %c0_114 = arith.constant 0 : index
      %c2 = arith.constant 2 : index
      %c0_115 = arith.constant 0 : index
      %199 = vector.load %arg7[%c0_113, %c0_114, %c2, %c0_115] : memref<1x8x8x32xf32, #tpu.memory_space<vmem>>, vector<1x8x1x32xf32>
      %200 = vector.shape_cast %199 : vector<1x8x1x32xf32> to vector<8x1x32xf32>
      %201 = vector.shape_cast %198 : vector<8x1x32xf32> to vector<1x8x1x32xf32>
      tpu.vector_store %arg7[%c0_113, %c0_114, %c2, %c0_115], %201 {strides = array<i32>} : memref<1x8x8x32xf32, #tpu.memory_space<vmem>>, vector<1x8x1x32xf32>,
      %c0_116 = arith.constant 0 : index
      %c0_117 = arith.constant 0 : index
      %c0_118 = arith.constant 0 : index
      %202 = vector.load %arg8[%c0_116, %c0_117, %c0_118] : memref<1x8x32xf32, #tpu.memory_space<vmem>>, vector<1x8x32xf32>
      %203 = vector.shape_cast %202 : vector<1x8x32xf32> to vector<8x32xf32>
      %204 = arith.addf %203, %193 : vector<8x32xf32>
      %c0_119 = arith.constant 0 : index
      %c0_120 = arith.constant 0 : index
      %c0_121 = arith.constant 0 : index
      %205 = vector.load %arg8[%c0_119, %c0_120, %c0_121] : memref<1x8x32xf32, #tpu.memory_space<vmem>>, vector<1x8x32xf32>
      %206 = vector.shape_cast %205 : vector<1x8x32xf32> to vector<8x32xf32>
      %207 = vector.shape_cast %204 : vector<8x32xf32> to vector<1x8x32xf32>
      tpu.vector_store %arg8[%c0_119, %c0_120, %c0_121], %207 {strides = array<i32>} : memref<1x8x32xf32, #tpu.memory_space<vmem>>, vector<1x8x32xf32>,
      %c0_122 = arith.constant 0 : index
      %c0_123 = arith.constant 0 : index
      %c0_124 = arith.constant 0 : index
      %208 = vector.load %arg9[%c0_122, %c0_123, %c0_124] : memref<1x8x32xf32, #tpu.memory_space<vmem>>, vector<1x8x32xf32>
      %209 = vector.shape_cast %208 : vector<1x8x32xf32> to vector<8x32xf32>
      %210 = arith.mulf %193, %193 : vector<8x32xf32>
      %211 = arith.addf %209, %210 : vector<8x32xf32>
      %c0_125 = arith.constant 0 : index
      %c0_126 = arith.constant 0 : index
      %c0_127 = arith.constant 0 : index
      %212 = vector.load %arg9[%c0_125, %c0_126, %c0_127] : memref<1x8x32xf32, #tpu.memory_space<vmem>>, vector<1x8x32xf32>
      %213 = vector.shape_cast %212 : vector<1x8x32xf32> to vector<8x32xf32>
      %214 = vector.shape_cast %211 : vector<8x32xf32> to vector<1x8x32xf32>
      tpu.vector_store %arg9[%c0_125, %c0_126, %c0_127], %214 {strides = array<i32>} : memref<1x8x32xf32, #tpu.memory_space<vmem>>, vector<1x8x32xf32>,
      %c3_i32 = arith.constant 3 : i32
      %215 = arith.addi %22, %c3_i32 : i32
      %c0_128 = arith.constant 0 : index
      %c0_129 = arith.constant 0 : index
      %216 = vector.load %arg10[%c0_128, %c0_129] : memref<8x32xf32, #tpu.memory_space<vmem>>, vector<8x32xf32>
      %c0_130 = arith.constant 0 : index
      %c0_131 = arith.constant 0 : index
      %217 = vector.load %arg11[%c0_130, %c0_131] : memref<8x32xf32, #tpu.memory_space<vmem>>, vector<8x32xf32>
      %c24 = arith.constant 24 : index
      %c0_132 = arith.constant 0 : index
      %218 = vector.load %arg12[%c24, %c0_132] : memref<64x128xf32, #tpu.memory_space<vmem>>, vector<8x128xf32>
      %cst_133 = arith.constant dense<0.000000e+00> : vector<8x128xf32>
      %219 = tpu.matmul %216, %5, %cst_133 {dimension_numbers = #tpu.dot_dimension_numbers<[1], [0], [0], [1], [0, 0, 1, 1], [], []>} : vector<8x32xf32>, vector<32x128xf32>, vector<8x128xf32> -> vector<8x128xf32>
      %220 = arith.addf %218, %219 : vector<8x128xf32>
      %221 = vector.extract_strided_slice %220 {offsets = [0, 0], sizes = [8, 32], strides = [1, 1]} : vector<8x128xf32> to vector<8x32xf32>
      %cst_134 = arith.constant 5.000000e-01 : f32
      %222 = vector.broadcast %cst_134 : f32 to vector<8x32xf32>
      %223 = arith.mulf %222, %221 : vector<8x32xf32>
      %224 = math.tanh %223 : vector<8x32xf32>
      %cst_135 = arith.constant 5.000000e-01 : f32
      %225 = vector.broadcast %cst_135 : f32 to vector<8x32xf32>
      %226 = arith.mulf %225, %224 : vector<8x32xf32>
      %cst_136 = arith.constant 5.000000e-01 : f32
      %227 = vector.broadcast %cst_136 : f32 to vector<8x32xf32>
      %228 = arith.addf %226, %227 : vector<8x32xf32>
      %229 = vector.extract_strided_slice %220 {offsets = [0, 32], sizes = [8, 32], strides = [1, 1]} : vector<8x128xf32> to vector<8x32xf32>
      %cst_137 = arith.constant 5.000000e-01 : f32
      %230 = vector.broadcast %cst_137 : f32 to vector<8x32xf32>
      %231 = arith.mulf %230, %229 : vector<8x32xf32>
      %232 = math.tanh %231 : vector<8x32xf32>
      %cst_138 = arith.constant 5.000000e-01 : f32
      %233 = vector.broadcast %cst_138 : f32 to vector<8x32xf32>
      %234 = arith.mulf %233, %232 : vector<8x32xf32>
      %cst_139 = arith.constant 5.000000e-01 : f32
      %235 = vector.broadcast %cst_139 : f32 to vector<8x32xf32>
      %236 = arith.addf %234, %235 : vector<8x32xf32>
      %237 = vector.extract_strided_slice %220 {offsets = [0, 64], sizes = [8, 32], strides = [1, 1]} : vector<8x128xf32> to vector<8x32xf32>
      %238 = math.tanh %237 : vector<8x32xf32>
      %239 = vector.extract_strided_slice %220 {offsets = [0, 96], sizes = [8, 32], strides = [1, 1]} : vector<8x128xf32> to vector<8x32xf32>
      %cst_140 = arith.constant 5.000000e-01 : f32
      %240 = vector.broadcast %cst_140 : f32 to vector<8x32xf32>
      %241 = arith.mulf %240, %239 : vector<8x32xf32>
      %242 = math.tanh %241 : vector<8x32xf32>
      %cst_141 = arith.constant 5.000000e-01 : f32
      %243 = vector.broadcast %cst_141 : f32 to vector<8x32xf32>
      %244 = arith.mulf %243, %242 : vector<8x32xf32>
      %cst_142 = arith.constant 5.000000e-01 : f32
      %245 = vector.broadcast %cst_142 : f32 to vector<8x32xf32>
      %246 = arith.addf %244, %245 : vector<8x32xf32>
      %247 = arith.mulf %236, %217 : vector<8x32xf32>
      %248 = arith.mulf %228, %238 : vector<8x32xf32>
      %249 = arith.addf %247, %248 : vector<8x32xf32>
      %250 = math.tanh %249 : vector<8x32xf32>
      %251 = arith.mulf %246, %250 : vector<8x32xf32>
      %252 = vector.broadcast %215 : i32 to vector<8x1xi32>
      %253 = arith.cmpi slt, %252, %3 : vector<8x1xi32>
      %254 = vector.shape_cast %253 : vector<8x1xi1> to vector<8x1xi1>
      %255 = vector.broadcast %254 : vector<8x1xi1> to vector<8x32xi1>
      %cst_143 = arith.constant 0.000000e+00 : f32
      %256 = vector.broadcast %cst_143 : f32 to vector<8x32xf32>
      %257 = arith.select %255, %251, %256 : vector<8x32xi1>, vector<8x32xf32>
      %258 = arith.select %255, %251, %216 : vector<8x32xi1>, vector<8x32xf32>
      %c0_144 = arith.constant 0 : index
      %c0_145 = arith.constant 0 : index
      %259 = vector.load %arg10[%c0_144, %c0_145] : memref<8x32xf32, #tpu.memory_space<vmem>>, vector<8x32xf32>
      tpu.vector_store %arg10[%c0_144, %c0_145], %258 {strides = array<i32>} : memref<8x32xf32, #tpu.memory_space<vmem>>, vector<8x32xf32>,
      %260 = arith.select %255, %249, %217 : vector<8x32xi1>, vector<8x32xf32>
      %c0_146 = arith.constant 0 : index
      %c0_147 = arith.constant 0 : index
      %261 = vector.load %arg11[%c0_146, %c0_147] : memref<8x32xf32, #tpu.memory_space<vmem>>, vector<8x32xf32>
      tpu.vector_store %arg11[%c0_146, %c0_147], %260 {strides = array<i32>} : memref<8x32xf32, #tpu.memory_space<vmem>>, vector<8x32xf32>,
      %262 = vector.shape_cast %257 : vector<8x32xf32> to vector<8x1x32xf32>
      %c0_148 = arith.constant 0 : index
      %c0_149 = arith.constant 0 : index
      %c3 = arith.constant 3 : index
      %c0_150 = arith.constant 0 : index
      %263 = vector.load %arg7[%c0_148, %c0_149, %c3, %c0_150] : memref<1x8x8x32xf32, #tpu.memory_space<vmem>>, vector<1x8x1x32xf32>
      %264 = vector.shape_cast %263 : vector<1x8x1x32xf32> to vector<8x1x32xf32>
      %265 = vector.shape_cast %262 : vector<8x1x32xf32> to vector<1x8x1x32xf32>
      tpu.vector_store %arg7[%c0_148, %c0_149, %c3, %c0_150], %265 {strides = array<i32>} : memref<1x8x8x32xf32, #tpu.memory_space<vmem>>, vector<1x8x1x32xf32>,
      %c0_151 = arith.constant 0 : index
      %c0_152 = arith.constant 0 : index
      %c0_153 = arith.constant 0 : index
      %266 = vector.load %arg8[%c0_151, %c0_152, %c0_153] : memref<1x8x32xf32, #tpu.memory_space<vmem>>, vector<1x8x32xf32>
      %267 = vector.shape_cast %266 : vector<1x8x32xf32> to vector<8x32xf32>
      %268 = arith.addf %267, %257 : vector<8x32xf32>
      %c0_154 = arith.constant 0 : index
      %c0_155 = arith.constant 0 : index
      %c0_156 = arith.constant 0 : index
      %269 = vector.load %arg8[%c0_154, %c0_155, %c0_156] : memref<1x8x32xf32, #tpu.memory_space<vmem>>, vector<1x8x32xf32>
      %270 = vector.shape_cast %269 : vector<1x8x32xf32> to vector<8x32xf32>
      %271 = vector.shape_cast %268 : vector<8x32xf32> to vector<1x8x32xf32>
      tpu.vector_store %arg8[%c0_154, %c0_155, %c0_156], %271 {strides = array<i32>} : memref<1x8x32xf32, #tpu.memory_space<vmem>>, vector<1x8x32xf32>,
      %c0_157 = arith.constant 0 : index
      %c0_158 = arith.constant 0 : index
      %c0_159 = arith.constant 0 : index
      %272 = vector.load %arg9[%c0_157, %c0_158, %c0_159] : memref<1x8x32xf32, #tpu.memory_space<vmem>>, vector<1x8x32xf32>
      %273 = vector.shape_cast %272 : vector<1x8x32xf32> to vector<8x32xf32>
      %274 = arith.mulf %257, %257 : vector<8x32xf32>
      %275 = arith.addf %273, %274 : vector<8x32xf32>
      %c0_160 = arith.constant 0 : index
      %c0_161 = arith.constant 0 : index
      %c0_162 = arith.constant 0 : index
      %276 = vector.load %arg9[%c0_160, %c0_161, %c0_162] : memref<1x8x32xf32, #tpu.memory_space<vmem>>, vector<1x8x32xf32>
      %277 = vector.shape_cast %276 : vector<1x8x32xf32> to vector<8x32xf32>
      %278 = vector.shape_cast %275 : vector<8x32xf32> to vector<1x8x32xf32>
      tpu.vector_store %arg9[%c0_160, %c0_161, %c0_162], %278 {strides = array<i32>} : memref<1x8x32xf32, #tpu.memory_space<vmem>>, vector<1x8x32xf32>,
      %c4_i32 = arith.constant 4 : i32
      %279 = arith.addi %22, %c4_i32 : i32
      %c0_163 = arith.constant 0 : index
      %c0_164 = arith.constant 0 : index
      %280 = vector.load %arg10[%c0_163, %c0_164] : memref<8x32xf32, #tpu.memory_space<vmem>>, vector<8x32xf32>
      %c0_165 = arith.constant 0 : index
      %c0_166 = arith.constant 0 : index
      %281 = vector.load %arg11[%c0_165, %c0_166] : memref<8x32xf32, #tpu.memory_space<vmem>>, vector<8x32xf32>
      %c32 = arith.constant 32 : index
      %c0_167 = arith.constant 0 : index
      %282 = vector.load %arg12[%c32, %c0_167] : memref<64x128xf32, #tpu.memory_space<vmem>>, vector<8x128xf32>
      %cst_168 = arith.constant dense<0.000000e+00> : vector<8x128xf32>
      %283 = tpu.matmul %280, %5, %cst_168 {dimension_numbers = #tpu.dot_dimension_numbers<[1], [0], [0], [1], [0, 0, 1, 1], [], []>} : vector<8x32xf32>, vector<32x128xf32>, vector<8x128xf32> -> vector<8x128xf32>
      %284 = arith.addf %282, %283 : vector<8x128xf32>
      %285 = vector.extract_strided_slice %284 {offsets = [0, 0], sizes = [8, 32], strides = [1, 1]} : vector<8x128xf32> to vector<8x32xf32>
      %cst_169 = arith.constant 5.000000e-01 : f32
      %286 = vector.broadcast %cst_169 : f32 to vector<8x32xf32>
      %287 = arith.mulf %286, %285 : vector<8x32xf32>
      %288 = math.tanh %287 : vector<8x32xf32>
      %cst_170 = arith.constant 5.000000e-01 : f32
      %289 = vector.broadcast %cst_170 : f32 to vector<8x32xf32>
      %290 = arith.mulf %289, %288 : vector<8x32xf32>
      %cst_171 = arith.constant 5.000000e-01 : f32
      %291 = vector.broadcast %cst_171 : f32 to vector<8x32xf32>
      %292 = arith.addf %290, %291 : vector<8x32xf32>
      %293 = vector.extract_strided_slice %284 {offsets = [0, 32], sizes = [8, 32], strides = [1, 1]} : vector<8x128xf32> to vector<8x32xf32>
      %cst_172 = arith.constant 5.000000e-01 : f32
      %294 = vector.broadcast %cst_172 : f32 to vector<8x32xf32>
      %295 = arith.mulf %294, %293 : vector<8x32xf32>
      %296 = math.tanh %295 : vector<8x32xf32>
      %cst_173 = arith.constant 5.000000e-01 : f32
      %297 = vector.broadcast %cst_173 : f32 to vector<8x32xf32>
      %298 = arith.mulf %297, %296 : vector<8x32xf32>
      %cst_174 = arith.constant 5.000000e-01 : f32
      %299 = vector.broadcast %cst_174 : f32 to vector<8x32xf32>
      %300 = arith.addf %298, %299 : vector<8x32xf32>
      %301 = vector.extract_strided_slice %284 {offsets = [0, 64], sizes = [8, 32], strides = [1, 1]} : vector<8x128xf32> to vector<8x32xf32>
      %302 = math.tanh %301 : vector<8x32xf32>
      %303 = vector.extract_strided_slice %284 {offsets = [0, 96], sizes = [8, 32], strides = [1, 1]} : vector<8x128xf32> to vector<8x32xf32>
      %cst_175 = arith.constant 5.000000e-01 : f32
      %304 = vector.broadcast %cst_175 : f32 to vector<8x32xf32>
      %305 = arith.mulf %304, %303 : vector<8x32xf32>
      %306 = math.tanh %305 : vector<8x32xf32>
      %cst_176 = arith.constant 5.000000e-01 : f32
      %307 = vector.broadcast %cst_176 : f32 to vector<8x32xf32>
      %308 = arith.mulf %307, %306 : vector<8x32xf32>
      %cst_177 = arith.constant 5.000000e-01 : f32
      %309 = vector.broadcast %cst_177 : f32 to vector<8x32xf32>
      %310 = arith.addf %308, %309 : vector<8x32xf32>
      %311 = arith.mulf %300, %281 : vector<8x32xf32>
      %312 = arith.mulf %292, %302 : vector<8x32xf32>
      %313 = arith.addf %311, %312 : vector<8x32xf32>
      %314 = math.tanh %313 : vector<8x32xf32>
      %315 = arith.mulf %310, %314 : vector<8x32xf32>
      %316 = vector.broadcast %279 : i32 to vector<8x1xi32>
      %317 = arith.cmpi slt, %316, %3 : vector<8x1xi32>
      %318 = vector.shape_cast %317 : vector<8x1xi1> to vector<8x1xi1>
      %319 = vector.broadcast %318 : vector<8x1xi1> to vector<8x32xi1>
      %cst_178 = arith.constant 0.000000e+00 : f32
      %320 = vector.broadcast %cst_178 : f32 to vector<8x32xf32>
      %321 = arith.select %319, %315, %320 : vector<8x32xi1>, vector<8x32xf32>
      %322 = arith.select %319, %315, %280 : vector<8x32xi1>, vector<8x32xf32>
      %c0_179 = arith.constant 0 : index
      %c0_180 = arith.constant 0 : index
      %323 = vector.load %arg10[%c0_179, %c0_180] : memref<8x32xf32, #tpu.memory_space<vmem>>, vector<8x32xf32>
      tpu.vector_store %arg10[%c0_179, %c0_180], %322 {strides = array<i32>} : memref<8x32xf32, #tpu.memory_space<vmem>>, vector<8x32xf32>,
      %324 = arith.select %319, %313, %281 : vector<8x32xi1>, vector<8x32xf32>
      %c0_181 = arith.constant 0 : index
      %c0_182 = arith.constant 0 : index
      %325 = vector.load %arg11[%c0_181, %c0_182] : memref<8x32xf32, #tpu.memory_space<vmem>>, vector<8x32xf32>
      tpu.vector_store %arg11[%c0_181, %c0_182], %324 {strides = array<i32>} : memref<8x32xf32, #tpu.memory_space<vmem>>, vector<8x32xf32>,
      %326 = vector.shape_cast %321 : vector<8x32xf32> to vector<8x1x32xf32>
      %c0_183 = arith.constant 0 : index
      %c0_184 = arith.constant 0 : index
      %c4 = arith.constant 4 : index
      %c0_185 = arith.constant 0 : index
      %327 = vector.load %arg7[%c0_183, %c0_184, %c4, %c0_185] : memref<1x8x8x32xf32, #tpu.memory_space<vmem>>, vector<1x8x1x32xf32>
      %328 = vector.shape_cast %327 : vector<1x8x1x32xf32> to vector<8x1x32xf32>
      %329 = vector.shape_cast %326 : vector<8x1x32xf32> to vector<1x8x1x32xf32>
      tpu.vector_store %arg7[%c0_183, %c0_184, %c4, %c0_185], %329 {strides = array<i32>} : memref<1x8x8x32xf32, #tpu.memory_space<vmem>>, vector<1x8x1x32xf32>,
      %c0_186 = arith.constant 0 : index
      %c0_187 = arith.constant 0 : index
      %c0_188 = arith.constant 0 : index
      %330 = vector.load %arg8[%c0_186, %c0_187, %c0_188] : memref<1x8x32xf32, #tpu.memory_space<vmem>>, vector<1x8x32xf32>
      %331 = vector.shape_cast %330 : vector<1x8x32xf32> to vector<8x32xf32>
      %332 = arith.addf %331, %321 : vector<8x32xf32>
      %c0_189 = arith.constant 0 : index
      %c0_190 = arith.constant 0 : index
      %c0_191 = arith.constant 0 : index
      %333 = vector.load %arg8[%c0_189, %c0_190, %c0_191] : memref<1x8x32xf32, #tpu.memory_space<vmem>>, vector<1x8x32xf32>
      %334 = vector.shape_cast %333 : vector<1x8x32xf32> to vector<8x32xf32>
      %335 = vector.shape_cast %332 : vector<8x32xf32> to vector<1x8x32xf32>
      tpu.vector_store %arg8[%c0_189, %c0_190, %c0_191], %335 {strides = array<i32>} : memref<1x8x32xf32, #tpu.memory_space<vmem>>, vector<1x8x32xf32>,
      %c0_192 = arith.constant 0 : index
      %c0_193 = arith.constant 0 : index
      %c0_194 = arith.constant 0 : index
      %336 = vector.load %arg9[%c0_192, %c0_193, %c0_194] : memref<1x8x32xf32, #tpu.memory_space<vmem>>, vector<1x8x32xf32>
      %337 = vector.shape_cast %336 : vector<1x8x32xf32> to vector<8x32xf32>
      %338 = arith.mulf %321, %321 : vector<8x32xf32>
      %339 = arith.addf %337, %338 : vector<8x32xf32>
      %c0_195 = arith.constant 0 : index
      %c0_196 = arith.constant 0 : index
      %c0_197 = arith.constant 0 : index
      %340 = vector.load %arg9[%c0_195, %c0_196, %c0_197] : memref<1x8x32xf32, #tpu.memory_space<vmem>>, vector<1x8x32xf32>
      %341 = vector.shape_cast %340 : vector<1x8x32xf32> to vector<8x32xf32>
      %342 = vector.shape_cast %339 : vector<8x32xf32> to vector<1x8x32xf32>
      tpu.vector_store %arg9[%c0_195, %c0_196, %c0_197], %342 {strides = array<i32>} : memref<1x8x32xf32, #tpu.memory_space<vmem>>, vector<1x8x32xf32>,
      %c5_i32 = arith.constant 5 : i32
      %343 = arith.addi %22, %c5_i32 : i32
      %c0_198 = arith.constant 0 : index
      %c0_199 = arith.constant 0 : index
      %344 = vector.load %arg10[%c0_198, %c0_199] : memref<8x32xf32, #tpu.memory_space<vmem>>, vector<8x32xf32>
      %c0_200 = arith.constant 0 : index
      %c0_201 = arith.constant 0 : index
      %345 = vector.load %arg11[%c0_200, %c0_201] : memref<8x32xf32, #tpu.memory_space<vmem>>, vector<8x32xf32>
      %c40 = arith.constant 40 : index
      %c0_202 = arith.constant 0 : index
      %346 = vector.load %arg12[%c40, %c0_202] : memref<64x128xf32, #tpu.memory_space<vmem>>, vector<8x128xf32>
      %cst_203 = arith.constant dense<0.000000e+00> : vector<8x128xf32>
      %347 = tpu.matmul %344, %5, %cst_203 {dimension_numbers = #tpu.dot_dimension_numbers<[1], [0], [0], [1], [0, 0, 1, 1], [], []>} : vector<8x32xf32>, vector<32x128xf32>, vector<8x128xf32> -> vector<8x128xf32>
      %348 = arith.addf %346, %347 : vector<8x128xf32>
      %349 = vector.extract_strided_slice %348 {offsets = [0, 0], sizes = [8, 32], strides = [1, 1]} : vector<8x128xf32> to vector<8x32xf32>
      %cst_204 = arith.constant 5.000000e-01 : f32
      %350 = vector.broadcast %cst_204 : f32 to vector<8x32xf32>
      %351 = arith.mulf %350, %349 : vector<8x32xf32>
      %352 = math.tanh %351 : vector<8x32xf32>
      %cst_205 = arith.constant 5.000000e-01 : f32
      %353 = vector.broadcast %cst_205 : f32 to vector<8x32xf32>
      %354 = arith.mulf %353, %352 : vector<8x32xf32>
      %cst_206 = arith.constant 5.000000e-01 : f32
      %355 = vector.broadcast %cst_206 : f32 to vector<8x32xf32>
      %356 = arith.addf %354, %355 : vector<8x32xf32>
      %357 = vector.extract_strided_slice %348 {offsets = [0, 32], sizes = [8, 32], strides = [1, 1]} : vector<8x128xf32> to vector<8x32xf32>
      %cst_207 = arith.constant 5.000000e-01 : f32
      %358 = vector.broadcast %cst_207 : f32 to vector<8x32xf32>
      %359 = arith.mulf %358, %357 : vector<8x32xf32>
      %360 = math.tanh %359 : vector<8x32xf32>
      %cst_208 = arith.constant 5.000000e-01 : f32
      %361 = vector.broadcast %cst_208 : f32 to vector<8x32xf32>
      %362 = arith.mulf %361, %360 : vector<8x32xf32>
      %cst_209 = arith.constant 5.000000e-01 : f32
      %363 = vector.broadcast %cst_209 : f32 to vector<8x32xf32>
      %364 = arith.addf %362, %363 : vector<8x32xf32>
      %365 = vector.extract_strided_slice %348 {offsets = [0, 64], sizes = [8, 32], strides = [1, 1]} : vector<8x128xf32> to vector<8x32xf32>
      %366 = math.tanh %365 : vector<8x32xf32>
      %367 = vector.extract_strided_slice %348 {offsets = [0, 96], sizes = [8, 32], strides = [1, 1]} : vector<8x128xf32> to vector<8x32xf32>
      %cst_210 = arith.constant 5.000000e-01 : f32
      %368 = vector.broadcast %cst_210 : f32 to vector<8x32xf32>
      %369 = arith.mulf %368, %367 : vector<8x32xf32>
      %370 = math.tanh %369 : vector<8x32xf32>
      %cst_211 = arith.constant 5.000000e-01 : f32
      %371 = vector.broadcast %cst_211 : f32 to vector<8x32xf32>
      %372 = arith.mulf %371, %370 : vector<8x32xf32>
      %cst_212 = arith.constant 5.000000e-01 : f32
      %373 = vector.broadcast %cst_212 : f32 to vector<8x32xf32>
      %374 = arith.addf %372, %373 : vector<8x32xf32>
      %375 = arith.mulf %364, %345 : vector<8x32xf32>
      %376 = arith.mulf %356, %366 : vector<8x32xf32>
      %377 = arith.addf %375, %376 : vector<8x32xf32>
      %378 = math.tanh %377 : vector<8x32xf32>
      %379 = arith.mulf %374, %378 : vector<8x32xf32>
      %380 = vector.broadcast %343 : i32 to vector<8x1xi32>
      %381 = arith.cmpi slt, %380, %3 : vector<8x1xi32>
      %382 = vector.shape_cast %381 : vector<8x1xi1> to vector<8x1xi1>
      %383 = vector.broadcast %382 : vector<8x1xi1> to vector<8x32xi1>
      %cst_213 = arith.constant 0.000000e+00 : f32
      %384 = vector.broadcast %cst_213 : f32 to vector<8x32xf32>
      %385 = arith.select %383, %379, %384 : vector<8x32xi1>, vector<8x32xf32>
      %386 = arith.select %383, %379, %344 : vector<8x32xi1>, vector<8x32xf32>
      %c0_214 = arith.constant 0 : index
      %c0_215 = arith.constant 0 : index
      %387 = vector.load %arg10[%c0_214, %c0_215] : memref<8x32xf32, #tpu.memory_space<vmem>>, vector<8x32xf32>
      tpu.vector_store %arg10[%c0_214, %c0_215], %386 {strides = array<i32>} : memref<8x32xf32, #tpu.memory_space<vmem>>, vector<8x32xf32>,
      %388 = arith.select %383, %377, %345 : vector<8x32xi1>, vector<8x32xf32>
      %c0_216 = arith.constant 0 : index
      %c0_217 = arith.constant 0 : index
      %389 = vector.load %arg11[%c0_216, %c0_217] : memref<8x32xf32, #tpu.memory_space<vmem>>, vector<8x32xf32>
      tpu.vector_store %arg11[%c0_216, %c0_217], %388 {strides = array<i32>} : memref<8x32xf32, #tpu.memory_space<vmem>>, vector<8x32xf32>,
      %390 = vector.shape_cast %385 : vector<8x32xf32> to vector<8x1x32xf32>
      %c0_218 = arith.constant 0 : index
      %c0_219 = arith.constant 0 : index
      %c5 = arith.constant 5 : index
      %c0_220 = arith.constant 0 : index
      %391 = vector.load %arg7[%c0_218, %c0_219, %c5, %c0_220] : memref<1x8x8x32xf32, #tpu.memory_space<vmem>>, vector<1x8x1x32xf32>
      %392 = vector.shape_cast %391 : vector<1x8x1x32xf32> to vector<8x1x32xf32>
      %393 = vector.shape_cast %390 : vector<8x1x32xf32> to vector<1x8x1x32xf32>
      tpu.vector_store %arg7[%c0_218, %c0_219, %c5, %c0_220], %393 {strides = array<i32>} : memref<1x8x8x32xf32, #tpu.memory_space<vmem>>, vector<1x8x1x32xf32>,
      %c0_221 = arith.constant 0 : index
      %c0_222 = arith.constant 0 : index
      %c0_223 = arith.constant 0 : index
      %394 = vector.load %arg8[%c0_221, %c0_222, %c0_223] : memref<1x8x32xf32, #tpu.memory_space<vmem>>, vector<1x8x32xf32>
      %395 = vector.shape_cast %394 : vector<1x8x32xf32> to vector<8x32xf32>
      %396 = arith.addf %395, %385 : vector<8x32xf32>
      %c0_224 = arith.constant 0 : index
      %c0_225 = arith.constant 0 : index
      %c0_226 = arith.constant 0 : index
      %397 = vector.load %arg8[%c0_224, %c0_225, %c0_226] : memref<1x8x32xf32, #tpu.memory_space<vmem>>, vector<1x8x32xf32>
      %398 = vector.shape_cast %397 : vector<1x8x32xf32> to vector<8x32xf32>
      %399 = vector.shape_cast %396 : vector<8x32xf32> to vector<1x8x32xf32>
      tpu.vector_store %arg8[%c0_224, %c0_225, %c0_226], %399 {strides = array<i32>} : memref<1x8x32xf32, #tpu.memory_space<vmem>>, vector<1x8x32xf32>,
      %c0_227 = arith.constant 0 : index
      %c0_228 = arith.constant 0 : index
      %c0_229 = arith.constant 0 : index
      %400 = vector.load %arg9[%c0_227, %c0_228, %c0_229] : memref<1x8x32xf32, #tpu.memory_space<vmem>>, vector<1x8x32xf32>
      %401 = vector.shape_cast %400 : vector<1x8x32xf32> to vector<8x32xf32>
      %402 = arith.mulf %385, %385 : vector<8x32xf32>
      %403 = arith.addf %401, %402 : vector<8x32xf32>
      %c0_230 = arith.constant 0 : index
      %c0_231 = arith.constant 0 : index
      %c0_232 = arith.constant 0 : index
      %404 = vector.load %arg9[%c0_230, %c0_231, %c0_232] : memref<1x8x32xf32, #tpu.memory_space<vmem>>, vector<1x8x32xf32>
      %405 = vector.shape_cast %404 : vector<1x8x32xf32> to vector<8x32xf32>
      %406 = vector.shape_cast %403 : vector<8x32xf32> to vector<1x8x32xf32>
      tpu.vector_store %arg9[%c0_230, %c0_231, %c0_232], %406 {strides = array<i32>} : memref<1x8x32xf32, #tpu.memory_space<vmem>>, vector<1x8x32xf32>,
      %c6_i32 = arith.constant 6 : i32
      %407 = arith.addi %22, %c6_i32 : i32
      %c0_233 = arith.constant 0 : index
      %c0_234 = arith.constant 0 : index
      %408 = vector.load %arg10[%c0_233, %c0_234] : memref<8x32xf32, #tpu.memory_space<vmem>>, vector<8x32xf32>
      %c0_235 = arith.constant 0 : index
      %c0_236 = arith.constant 0 : index
      %409 = vector.load %arg11[%c0_235, %c0_236] : memref<8x32xf32, #tpu.memory_space<vmem>>, vector<8x32xf32>
      %c48 = arith.constant 48 : index
      %c0_237 = arith.constant 0 : index
      %410 = vector.load %arg12[%c48, %c0_237] : memref<64x128xf32, #tpu.memory_space<vmem>>, vector<8x128xf32>
      %cst_238 = arith.constant dense<0.000000e+00> : vector<8x128xf32>
      %411 = tpu.matmul %408, %5, %cst_238 {dimension_numbers = #tpu.dot_dimension_numbers<[1], [0], [0], [1], [0, 0, 1, 1], [], []>} : vector<8x32xf32>, vector<32x128xf32>, vector<8x128xf32> -> vector<8x128xf32>
      %412 = arith.addf %410, %411 : vector<8x128xf32>
      %413 = vector.extract_strided_slice %412 {offsets = [0, 0], sizes = [8, 32], strides = [1, 1]} : vector<8x128xf32> to vector<8x32xf32>
      %cst_239 = arith.constant 5.000000e-01 : f32
      %414 = vector.broadcast %cst_239 : f32 to vector<8x32xf32>
      %415 = arith.mulf %414, %413 : vector<8x32xf32>
      %416 = math.tanh %415 : vector<8x32xf32>
      %cst_240 = arith.constant 5.000000e-01 : f32
      %417 = vector.broadcast %cst_240 : f32 to vector<8x32xf32>
      %418 = arith.mulf %417, %416 : vector<8x32xf32>
      %cst_241 = arith.constant 5.000000e-01 : f32
      %419 = vector.broadcast %cst_241 : f32 to vector<8x32xf32>
      %420 = arith.addf %418, %419 : vector<8x32xf32>
      %421 = vector.extract_strided_slice %412 {offsets = [0, 32], sizes = [8, 32], strides = [1, 1]} : vector<8x128xf32> to vector<8x32xf32>
      %cst_242 = arith.constant 5.000000e-01 : f32
      %422 = vector.broadcast %cst_242 : f32 to vector<8x32xf32>
      %423 = arith.mulf %422, %421 : vector<8x32xf32>
      %424 = math.tanh %423 : vector<8x32xf32>
      %cst_243 = arith.constant 5.000000e-01 : f32
      %425 = vector.broadcast %cst_243 : f32 to vector<8x32xf32>
      %426 = arith.mulf %425, %424 : vector<8x32xf32>
      %cst_244 = arith.constant 5.000000e-01 : f32
      %427 = vector.broadcast %cst_244 : f32 to vector<8x32xf32>
      %428 = arith.addf %426, %427 : vector<8x32xf32>
      %429 = vector.extract_strided_slice %412 {offsets = [0, 64], sizes = [8, 32], strides = [1, 1]} : vector<8x128xf32> to vector<8x32xf32>
      %430 = math.tanh %429 : vector<8x32xf32>
      %431 = vector.extract_strided_slice %412 {offsets = [0, 96], sizes = [8, 32], strides = [1, 1]} : vector<8x128xf32> to vector<8x32xf32>
      %cst_245 = arith.constant 5.000000e-01 : f32
      %432 = vector.broadcast %cst_245 : f32 to vector<8x32xf32>
      %433 = arith.mulf %432, %431 : vector<8x32xf32>
      %434 = math.tanh %433 : vector<8x32xf32>
      %cst_246 = arith.constant 5.000000e-01 : f32
      %435 = vector.broadcast %cst_246 : f32 to vector<8x32xf32>
      %436 = arith.mulf %435, %434 : vector<8x32xf32>
      %cst_247 = arith.constant 5.000000e-01 : f32
      %437 = vector.broadcast %cst_247 : f32 to vector<8x32xf32>
      %438 = arith.addf %436, %437 : vector<8x32xf32>
      %439 = arith.mulf %428, %409 : vector<8x32xf32>
      %440 = arith.mulf %420, %430 : vector<8x32xf32>
      %441 = arith.addf %439, %440 : vector<8x32xf32>
      %442 = math.tanh %441 : vector<8x32xf32>
      %443 = arith.mulf %438, %442 : vector<8x32xf32>
      %444 = vector.broadcast %407 : i32 to vector<8x1xi32>
      %445 = arith.cmpi slt, %444, %3 : vector<8x1xi32>
      %446 = vector.shape_cast %445 : vector<8x1xi1> to vector<8x1xi1>
      %447 = vector.broadcast %446 : vector<8x1xi1> to vector<8x32xi1>
      %cst_248 = arith.constant 0.000000e+00 : f32
      %448 = vector.broadcast %cst_248 : f32 to vector<8x32xf32>
      %449 = arith.select %447, %443, %448 : vector<8x32xi1>, vector<8x32xf32>
      %450 = arith.select %447, %443, %408 : vector<8x32xi1>, vector<8x32xf32>
      %c0_249 = arith.constant 0 : index
      %c0_250 = arith.constant 0 : index
      %451 = vector.load %arg10[%c0_249, %c0_250] : memref<8x32xf32, #tpu.memory_space<vmem>>, vector<8x32xf32>
      tpu.vector_store %arg10[%c0_249, %c0_250], %450 {strides = array<i32>} : memref<8x32xf32, #tpu.memory_space<vmem>>, vector<8x32xf32>,
      %452 = arith.select %447, %441, %409 : vector<8x32xi1>, vector<8x32xf32>
      %c0_251 = arith.constant 0 : index
      %c0_252 = arith.constant 0 : index
      %453 = vector.load %arg11[%c0_251, %c0_252] : memref<8x32xf32, #tpu.memory_space<vmem>>, vector<8x32xf32>
      tpu.vector_store %arg11[%c0_251, %c0_252], %452 {strides = array<i32>} : memref<8x32xf32, #tpu.memory_space<vmem>>, vector<8x32xf32>,
      %454 = vector.shape_cast %449 : vector<8x32xf32> to vector<8x1x32xf32>
      %c0_253 = arith.constant 0 : index
      %c0_254 = arith.constant 0 : index
      %c6 = arith.constant 6 : index
      %c0_255 = arith.constant 0 : index
      %455 = vector.load %arg7[%c0_253, %c0_254, %c6, %c0_255] : memref<1x8x8x32xf32, #tpu.memory_space<vmem>>, vector<1x8x1x32xf32>
      %456 = vector.shape_cast %455 : vector<1x8x1x32xf32> to vector<8x1x32xf32>
      %457 = vector.shape_cast %454 : vector<8x1x32xf32> to vector<1x8x1x32xf32>
      tpu.vector_store %arg7[%c0_253, %c0_254, %c6, %c0_255], %457 {strides = array<i32>} : memref<1x8x8x32xf32, #tpu.memory_space<vmem>>, vector<1x8x1x32xf32>,
      %c0_256 = arith.constant 0 : index
      %c0_257 = arith.constant 0 : index
      %c0_258 = arith.constant 0 : index
      %458 = vector.load %arg8[%c0_256, %c0_257, %c0_258] : memref<1x8x32xf32, #tpu.memory_space<vmem>>, vector<1x8x32xf32>
      %459 = vector.shape_cast %458 : vector<1x8x32xf32> to vector<8x32xf32>
      %460 = arith.addf %459, %449 : vector<8x32xf32>
      %c0_259 = arith.constant 0 : index
      %c0_260 = arith.constant 0 : index
      %c0_261 = arith.constant 0 : index
      %461 = vector.load %arg8[%c0_259, %c0_260, %c0_261] : memref<1x8x32xf32, #tpu.memory_space<vmem>>, vector<1x8x32xf32>
      %462 = vector.shape_cast %461 : vector<1x8x32xf32> to vector<8x32xf32>
      %463 = vector.shape_cast %460 : vector<8x32xf32> to vector<1x8x32xf32>
      tpu.vector_store %arg8[%c0_259, %c0_260, %c0_261], %463 {strides = array<i32>} : memref<1x8x32xf32, #tpu.memory_space<vmem>>, vector<1x8x32xf32>,
      %c0_262 = arith.constant 0 : index
      %c0_263 = arith.constant 0 : index
      %c0_264 = arith.constant 0 : index
      %464 = vector.load %arg9[%c0_262, %c0_263, %c0_264] : memref<1x8x32xf32, #tpu.memory_space<vmem>>, vector<1x8x32xf32>
      %465 = vector.shape_cast %464 : vector<1x8x32xf32> to vector<8x32xf32>
      %466 = arith.mulf %449, %449 : vector<8x32xf32>
      %467 = arith.addf %465, %466 : vector<8x32xf32>
      %c0_265 = arith.constant 0 : index
      %c0_266 = arith.constant 0 : index
      %c0_267 = arith.constant 0 : index
      %468 = vector.load %arg9[%c0_265, %c0_266, %c0_267] : memref<1x8x32xf32, #tpu.memory_space<vmem>>, vector<1x8x32xf32>
      %469 = vector.shape_cast %468 : vector<1x8x32xf32> to vector<8x32xf32>
      %470 = vector.shape_cast %467 : vector<8x32xf32> to vector<1x8x32xf32>
      tpu.vector_store %arg9[%c0_265, %c0_266, %c0_267], %470 {strides = array<i32>} : memref<1x8x32xf32, #tpu.memory_space<vmem>>, vector<1x8x32xf32>,
      %c7_i32 = arith.constant 7 : i32
      %471 = arith.addi %22, %c7_i32 : i32
      %c0_268 = arith.constant 0 : index
      %c0_269 = arith.constant 0 : index
      %472 = vector.load %arg10[%c0_268, %c0_269] : memref<8x32xf32, #tpu.memory_space<vmem>>, vector<8x32xf32>
      %c0_270 = arith.constant 0 : index
      %c0_271 = arith.constant 0 : index
      %473 = vector.load %arg11[%c0_270, %c0_271] : memref<8x32xf32, #tpu.memory_space<vmem>>, vector<8x32xf32>
      %c56 = arith.constant 56 : index
      %c0_272 = arith.constant 0 : index
      %474 = vector.load %arg12[%c56, %c0_272] : memref<64x128xf32, #tpu.memory_space<vmem>>, vector<8x128xf32>
      %cst_273 = arith.constant dense<0.000000e+00> : vector<8x128xf32>
      %475 = tpu.matmul %472, %5, %cst_273 {dimension_numbers = #tpu.dot_dimension_numbers<[1], [0], [0], [1], [0, 0, 1, 1], [], []>} : vector<8x32xf32>, vector<32x128xf32>, vector<8x128xf32> -> vector<8x128xf32>
      %476 = arith.addf %474, %475 : vector<8x128xf32>
      %477 = vector.extract_strided_slice %476 {offsets = [0, 0], sizes = [8, 32], strides = [1, 1]} : vector<8x128xf32> to vector<8x32xf32>
      %cst_274 = arith.constant 5.000000e-01 : f32
      %478 = vector.broadcast %cst_274 : f32 to vector<8x32xf32>
      %479 = arith.mulf %478, %477 : vector<8x32xf32>
      %480 = math.tanh %479 : vector<8x32xf32>
      %cst_275 = arith.constant 5.000000e-01 : f32
      %481 = vector.broadcast %cst_275 : f32 to vector<8x32xf32>
      %482 = arith.mulf %481, %480 : vector<8x32xf32>
      %cst_276 = arith.constant 5.000000e-01 : f32
      %483 = vector.broadcast %cst_276 : f32 to vector<8x32xf32>
      %484 = arith.addf %482, %483 : vector<8x32xf32>
      %485 = vector.extract_strided_slice %476 {offsets = [0, 32], sizes = [8, 32], strides = [1, 1]} : vector<8x128xf32> to vector<8x32xf32>
      %cst_277 = arith.constant 5.000000e-01 : f32
      %486 = vector.broadcast %cst_277 : f32 to vector<8x32xf32>
      %487 = arith.mulf %486, %485 : vector<8x32xf32>
      %488 = math.tanh %487 : vector<8x32xf32>
      %cst_278 = arith.constant 5.000000e-01 : f32
      %489 = vector.broadcast %cst_278 : f32 to vector<8x32xf32>
      %490 = arith.mulf %489, %488 : vector<8x32xf32>
      %cst_279 = arith.constant 5.000000e-01 : f32
      %491 = vector.broadcast %cst_279 : f32 to vector<8x32xf32>
      %492 = arith.addf %490, %491 : vector<8x32xf32>
      %493 = vector.extract_strided_slice %476 {offsets = [0, 64], sizes = [8, 32], strides = [1, 1]} : vector<8x128xf32> to vector<8x32xf32>
      %494 = math.tanh %493 : vector<8x32xf32>
      %495 = vector.extract_strided_slice %476 {offsets = [0, 96], sizes = [8, 32], strides = [1, 1]} : vector<8x128xf32> to vector<8x32xf32>
      %cst_280 = arith.constant 5.000000e-01 : f32
      %496 = vector.broadcast %cst_280 : f32 to vector<8x32xf32>
      %497 = arith.mulf %496, %495 : vector<8x32xf32>
      %498 = math.tanh %497 : vector<8x32xf32>
      %cst_281 = arith.constant 5.000000e-01 : f32
      %499 = vector.broadcast %cst_281 : f32 to vector<8x32xf32>
      %500 = arith.mulf %499, %498 : vector<8x32xf32>
      %cst_282 = arith.constant 5.000000e-01 : f32
      %501 = vector.broadcast %cst_282 : f32 to vector<8x32xf32>
      %502 = arith.addf %500, %501 : vector<8x32xf32>
      %503 = arith.mulf %492, %473 : vector<8x32xf32>
      %504 = arith.mulf %484, %494 : vector<8x32xf32>
      %505 = arith.addf %503, %504 : vector<8x32xf32>
      %506 = math.tanh %505 : vector<8x32xf32>
      %507 = arith.mulf %502, %506 : vector<8x32xf32>
      %508 = vector.broadcast %471 : i32 to vector<8x1xi32>
      %509 = arith.cmpi slt, %508, %3 : vector<8x1xi32>
      %510 = vector.shape_cast %509 : vector<8x1xi1> to vector<8x1xi1>
      %511 = vector.broadcast %510 : vector<8x1xi1> to vector<8x32xi1>
      %cst_283 = arith.constant 0.000000e+00 : f32
      %512 = vector.broadcast %cst_283 : f32 to vector<8x32xf32>
      %513 = arith.select %511, %507, %512 : vector<8x32xi1>, vector<8x32xf32>
      %514 = arith.select %511, %507, %472 : vector<8x32xi1>, vector<8x32xf32>
      %c0_284 = arith.constant 0 : index
      %c0_285 = arith.constant 0 : index
      %515 = vector.load %arg10[%c0_284, %c0_285] : memref<8x32xf32, #tpu.memory_space<vmem>>, vector<8x32xf32>
      tpu.vector_store %arg10[%c0_284, %c0_285], %514 {strides = array<i32>} : memref<8x32xf32, #tpu.memory_space<vmem>>, vector<8x32xf32>,
      %516 = arith.select %511, %505, %473 : vector<8x32xi1>, vector<8x32xf32>
      %c0_286 = arith.constant 0 : index
      %c0_287 = arith.constant 0 : index
      %517 = vector.load %arg11[%c0_286, %c0_287] : memref<8x32xf32, #tpu.memory_space<vmem>>, vector<8x32xf32>
      tpu.vector_store %arg11[%c0_286, %c0_287], %516 {strides = array<i32>} : memref<8x32xf32, #tpu.memory_space<vmem>>, vector<8x32xf32>,
      %518 = vector.shape_cast %513 : vector<8x32xf32> to vector<8x1x32xf32>
      %c0_288 = arith.constant 0 : index
      %c0_289 = arith.constant 0 : index
      %c7 = arith.constant 7 : index
      %c0_290 = arith.constant 0 : index
      %519 = vector.load %arg7[%c0_288, %c0_289, %c7, %c0_290] : memref<1x8x8x32xf32, #tpu.memory_space<vmem>>, vector<1x8x1x32xf32>
      %520 = vector.shape_cast %519 : vector<1x8x1x32xf32> to vector<8x1x32xf32>
      %521 = vector.shape_cast %518 : vector<8x1x32xf32> to vector<1x8x1x32xf32>
      tpu.vector_store %arg7[%c0_288, %c0_289, %c7, %c0_290], %521 {strides = array<i32>} : memref<1x8x8x32xf32, #tpu.memory_space<vmem>>, vector<1x8x1x32xf32>,
      %c0_291 = arith.constant 0 : index
      %c0_292 = arith.constant 0 : index
      %c0_293 = arith.constant 0 : index
      %522 = vector.load %arg8[%c0_291, %c0_292, %c0_293] : memref<1x8x32xf32, #tpu.memory_space<vmem>>, vector<1x8x32xf32>
      %523 = vector.shape_cast %522 : vector<1x8x32xf32> to vector<8x32xf32>
      %524 = arith.addf %523, %513 : vector<8x32xf32>
      %c0_294 = arith.constant 0 : index
      %c0_295 = arith.constant 0 : index
      %c0_296 = arith.constant 0 : index
      %525 = vector.load %arg8[%c0_294, %c0_295, %c0_296] : memref<1x8x32xf32, #tpu.memory_space<vmem>>, vector<1x8x32xf32>
      %526 = vector.shape_cast %525 : vector<1x8x32xf32> to vector<8x32xf32>
      %527 = vector.shape_cast %524 : vector<8x32xf32> to vector<1x8x32xf32>
      tpu.vector_store %arg8[%c0_294, %c0_295, %c0_296], %527 {strides = array<i32>} : memref<1x8x32xf32, #tpu.memory_space<vmem>>, vector<1x8x32xf32>,
      %c0_297 = arith.constant 0 : index
      %c0_298 = arith.constant 0 : index
      %c0_299 = arith.constant 0 : index
      %528 = vector.load %arg9[%c0_297, %c0_298, %c0_299] : memref<1x8x32xf32, #tpu.memory_space<vmem>>, vector<1x8x32xf32>
      %529 = vector.shape_cast %528 : vector<1x8x32xf32> to vector<8x32xf32>
      %530 = arith.mulf %513, %513 : vector<8x32xf32>
      %531 = arith.addf %529, %530 : vector<8x32xf32>
      %c0_300 = arith.constant 0 : index
      %c0_301 = arith.constant 0 : index
      %c0_302 = arith.constant 0 : index
      %532 = vector.load %arg9[%c0_300, %c0_301, %c0_302] : memref<1x8x32xf32, #tpu.memory_space<vmem>>, vector<1x8x32xf32>
      %533 = vector.shape_cast %532 : vector<1x8x32xf32> to vector<8x32xf32>
      %534 = vector.shape_cast %531 : vector<8x32xf32> to vector<1x8x32xf32>
      tpu.vector_store %arg9[%c0_300, %c0_301, %c0_302], %534 {strides = array<i32>} : memref<1x8x32xf32, #tpu.memory_space<vmem>>, vector<1x8x32xf32>,
    } else {
    }
    %c1_i32 = arith.constant 1 : i32
    %19 = arith.cmpi eq, %arg0, %c1_i32 : i32
    %20 = arith.extui %19 : i1 to i32
    %c0_i32_18 = arith.constant 0 : i32
    %21 = arith.cmpi ne, %20, %c0_i32_18 : i32
    scf.if %21 {
      %c1_i32_19 = arith.constant 1 : i32
      %22 = arith.subi %c1_i32_19, %arg1 : i32
      %c8_i32 = arith.constant 8 : i32
      %23 = arith.muli %22, %c8_i32 : i32
      %c8_i32_20 = arith.constant 8 : i32
      %24 = arith.addi %23, %c8_i32_20 : i32
      %c1_i32_21 = arith.constant 1 : i32
      %25 = arith.subi %24, %c1_i32_21 : i32
      %c0_i32_22 = arith.constant 0 : i32
      %26 = arith.subi %25, %c0_i32_22 : i32
      %c0_23 = arith.constant 0 : index
      %c0_24 = arith.constant 0 : index
      %27 = vector.load %arg10[%c0_23, %c0_24] : memref<8x32xf32, #tpu.memory_space<vmem>>, vector<8x32xf32>
      %c0_25 = arith.constant 0 : index
      %c0_26 = arith.constant 0 : index
      %28 = vector.load %arg11[%c0_25, %c0_26] : memref<8x32xf32, #tpu.memory_space<vmem>>, vector<8x32xf32>
      %c56 = arith.constant 56 : index
      %c0_27 = arith.constant 0 : index
      %29 = vector.load %arg12[%c56, %c0_27] : memref<64x128xf32, #tpu.memory_space<vmem>>, vector<8x128xf32>
      %cst_28 = arith.constant dense<0.000000e+00> : vector<8x128xf32>
      %30 = tpu.matmul %27, %5, %cst_28 {dimension_numbers = #tpu.dot_dimension_numbers<[1], [0], [0], [1], [0, 0, 1, 1], [], []>} : vector<8x32xf32>, vector<32x128xf32>, vector<8x128xf32> -> vector<8x128xf32>
      %31 = arith.addf %29, %30 : vector<8x128xf32>
      %32 = vector.extract_strided_slice %31 {offsets = [0, 0], sizes = [8, 32], strides = [1, 1]} : vector<8x128xf32> to vector<8x32xf32>
      %cst_29 = arith.constant 5.000000e-01 : f32
      %33 = vector.broadcast %cst_29 : f32 to vector<8x32xf32>
      %34 = arith.mulf %33, %32 : vector<8x32xf32>
      %35 = math.tanh %34 : vector<8x32xf32>
      %cst_30 = arith.constant 5.000000e-01 : f32
      %36 = vector.broadcast %cst_30 : f32 to vector<8x32xf32>
      %37 = arith.mulf %36, %35 : vector<8x32xf32>
      %cst_31 = arith.constant 5.000000e-01 : f32
      %38 = vector.broadcast %cst_31 : f32 to vector<8x32xf32>
      %39 = arith.addf %37, %38 : vector<8x32xf32>
      %40 = vector.extract_strided_slice %31 {offsets = [0, 32], sizes = [8, 32], strides = [1, 1]} : vector<8x128xf32> to vector<8x32xf32>
      %cst_32 = arith.constant 5.000000e-01 : f32
      %41 = vector.broadcast %cst_32 : f32 to vector<8x32xf32>
      %42 = arith.mulf %41, %40 : vector<8x32xf32>
      %43 = math.tanh %42 : vector<8x32xf32>
      %cst_33 = arith.constant 5.000000e-01 : f32
      %44 = vector.broadcast %cst_33 : f32 to vector<8x32xf32>
      %45 = arith.mulf %44, %43 : vector<8x32xf32>
      %cst_34 = arith.constant 5.000000e-01 : f32
      %46 = vector.broadcast %cst_34 : f32 to vector<8x32xf32>
      %47 = arith.addf %45, %46 : vector<8x32xf32>
      %48 = vector.extract_strided_slice %31 {offsets = [0, 64], sizes = [8, 32], strides = [1, 1]} : vector<8x128xf32> to vector<8x32xf32>
      %49 = math.tanh %48 : vector<8x32xf32>
      %50 = vector.extract_strided_slice %31 {offsets = [0, 96], sizes = [8, 32], strides = [1, 1]} : vector<8x128xf32> to vector<8x32xf32>
      %cst_35 = arith.constant 5.000000e-01 : f32
      %51 = vector.broadcast %cst_35 : f32 to vector<8x32xf32>
      %52 = arith.mulf %51, %50 : vector<8x32xf32>
      %53 = math.tanh %52 : vector<8x32xf32>
      %cst_36 = arith.constant 5.000000e-01 : f32
      %54 = vector.broadcast %cst_36 : f32 to vector<8x32xf32>
      %55 = arith.mulf %54, %53 : vector<8x32xf32>
      %cst_37 = arith.constant 5.000000e-01 : f32
      %56 = vector.broadcast %cst_37 : f32 to vector<8x32xf32>
      %57 = arith.addf %55, %56 : vector<8x32xf32>
      %58 = arith.mulf %47, %28 : vector<8x32xf32>
      %59 = arith.mulf %39, %49 : vector<8x32xf32>
      %60 = arith.addf %58, %59 : vector<8x32xf32>
      %61 = math.tanh %60 : vector<8x32xf32>
      %62 = arith.mulf %57, %61 : vector<8x32xf32>
      %63 = vector.broadcast %26 : i32 to vector<8x1xi32>
      %64 = arith.cmpi slt, %63, %3 : vector<8x1xi32>
      %65 = vector.shape_cast %64 : vector<8x1xi1> to vector<8x1xi1>
      %66 = vector.broadcast %65 : vector<8x1xi1> to vector<8x32xi1>
      %cst_38 = arith.constant 0.000000e+00 : f32
      %67 = vector.broadcast %cst_38 : f32 to vector<8x32xf32>
      %68 = arith.select %66, %62, %67 : vector<8x32xi1>, vector<8x32xf32>
      %69 = arith.select %66, %62, %27 : vector<8x32xi1>, vector<8x32xf32>
      %c0_39 = arith.constant 0 : index
      %c0_40 = arith.constant 0 : index
      %70 = vector.load %arg10[%c0_39, %c0_40] : memref<8x32xf32, #tpu.memory_space<vmem>>, vector<8x32xf32>
      tpu.vector_store %arg10[%c0_39, %c0_40], %69 {strides = array<i32>} : memref<8x32xf32, #tpu.memory_space<vmem>>, vector<8x32xf32>,
      %71 = arith.select %66, %60, %28 : vector<8x32xi1>, vector<8x32xf32>
      %c0_41 = arith.constant 0 : index
      %c0_42 = arith.constant 0 : index
      %72 = vector.load %arg11[%c0_41, %c0_42] : memref<8x32xf32, #tpu.memory_space<vmem>>, vector<8x32xf32>
      tpu.vector_store %arg11[%c0_41, %c0_42], %71 {strides = array<i32>} : memref<8x32xf32, #tpu.memory_space<vmem>>, vector<8x32xf32>,
      %73 = vector.shape_cast %68 : vector<8x32xf32> to vector<8x1x32xf32>
      %c0_43 = arith.constant 0 : index
      %c0_44 = arith.constant 0 : index
      %c7 = arith.constant 7 : index
      %c0_45 = arith.constant 0 : index
      %74 = vector.load %arg7[%c0_43, %c0_44, %c7, %c0_45] : memref<1x8x8x32xf32, #tpu.memory_space<vmem>>, vector<1x8x1x32xf32>
      %75 = vector.shape_cast %74 : vector<1x8x1x32xf32> to vector<8x1x32xf32>
      %76 = vector.shape_cast %73 : vector<8x1x32xf32> to vector<1x8x1x32xf32>
      tpu.vector_store %arg7[%c0_43, %c0_44, %c7, %c0_45], %76 {strides = array<i32>} : memref<1x8x8x32xf32, #tpu.memory_space<vmem>>, vector<1x8x1x32xf32>,
      %c0_46 = arith.constant 0 : index
      %c0_47 = arith.constant 0 : index
      %c0_48 = arith.constant 0 : index
      %77 = vector.load %arg8[%c0_46, %c0_47, %c0_48] : memref<1x8x32xf32, #tpu.memory_space<vmem>>, vector<1x8x32xf32>
      %78 = vector.shape_cast %77 : vector<1x8x32xf32> to vector<8x32xf32>
      %79 = arith.addf %78, %68 : vector<8x32xf32>
      %c0_49 = arith.constant 0 : index
      %c0_50 = arith.constant 0 : index
      %c0_51 = arith.constant 0 : index
      %80 = vector.load %arg8[%c0_49, %c0_50, %c0_51] : memref<1x8x32xf32, #tpu.memory_space<vmem>>, vector<1x8x32xf32>
      %81 = vector.shape_cast %80 : vector<1x8x32xf32> to vector<8x32xf32>
      %82 = vector.shape_cast %79 : vector<8x32xf32> to vector<1x8x32xf32>
      tpu.vector_store %arg8[%c0_49, %c0_50, %c0_51], %82 {strides = array<i32>} : memref<1x8x32xf32, #tpu.memory_space<vmem>>, vector<1x8x32xf32>,
      %c0_52 = arith.constant 0 : index
      %c0_53 = arith.constant 0 : index
      %c0_54 = arith.constant 0 : index
      %83 = vector.load %arg9[%c0_52, %c0_53, %c0_54] : memref<1x8x32xf32, #tpu.memory_space<vmem>>, vector<1x8x32xf32>
      %84 = vector.shape_cast %83 : vector<1x8x32xf32> to vector<8x32xf32>
      %85 = arith.mulf %68, %68 : vector<8x32xf32>
      %86 = arith.addf %84, %85 : vector<8x32xf32>
      %c0_55 = arith.constant 0 : index
      %c0_56 = arith.constant 0 : index
      %c0_57 = arith.constant 0 : index
      %87 = vector.load %arg9[%c0_55, %c0_56, %c0_57] : memref<1x8x32xf32, #tpu.memory_space<vmem>>, vector<1x8x32xf32>
      %88 = vector.shape_cast %87 : vector<1x8x32xf32> to vector<8x32xf32>
      %89 = vector.shape_cast %86 : vector<8x32xf32> to vector<1x8x32xf32>
      tpu.vector_store %arg9[%c0_55, %c0_56, %c0_57], %89 {strides = array<i32>} : memref<1x8x32xf32, #tpu.memory_space<vmem>>, vector<1x8x32xf32>,
      %c8_i32_58 = arith.constant 8 : i32
      %90 = arith.addi %23, %c8_i32_58 : i32
      %c1_i32_59 = arith.constant 1 : i32
      %91 = arith.subi %90, %c1_i32_59 : i32
      %c1_i32_60 = arith.constant 1 : i32
      %92 = arith.subi %91, %c1_i32_60 : i32
      %c0_61 = arith.constant 0 : index
      %c0_62 = arith.constant 0 : index
      %93 = vector.load %arg10[%c0_61, %c0_62] : memref<8x32xf32, #tpu.memory_space<vmem>>, vector<8x32xf32>
      %c0_63 = arith.constant 0 : index
      %c0_64 = arith.constant 0 : index
      %94 = vector.load %arg11[%c0_63, %c0_64] : memref<8x32xf32, #tpu.memory_space<vmem>>, vector<8x32xf32>
      %c48 = arith.constant 48 : index
      %c0_65 = arith.constant 0 : index
      %95 = vector.load %arg12[%c48, %c0_65] : memref<64x128xf32, #tpu.memory_space<vmem>>, vector<8x128xf32>
      %cst_66 = arith.constant dense<0.000000e+00> : vector<8x128xf32>
      %96 = tpu.matmul %93, %5, %cst_66 {dimension_numbers = #tpu.dot_dimension_numbers<[1], [0], [0], [1], [0, 0, 1, 1], [], []>} : vector<8x32xf32>, vector<32x128xf32>, vector<8x128xf32> -> vector<8x128xf32>
      %97 = arith.addf %95, %96 : vector<8x128xf32>
      %98 = vector.extract_strided_slice %97 {offsets = [0, 0], sizes = [8, 32], strides = [1, 1]} : vector<8x128xf32> to vector<8x32xf32>
      %cst_67 = arith.constant 5.000000e-01 : f32
      %99 = vector.broadcast %cst_67 : f32 to vector<8x32xf32>
      %100 = arith.mulf %99, %98 : vector<8x32xf32>
      %101 = math.tanh %100 : vector<8x32xf32>
      %cst_68 = arith.constant 5.000000e-01 : f32
      %102 = vector.broadcast %cst_68 : f32 to vector<8x32xf32>
      %103 = arith.mulf %102, %101 : vector<8x32xf32>
      %cst_69 = arith.constant 5.000000e-01 : f32
      %104 = vector.broadcast %cst_69 : f32 to vector<8x32xf32>
      %105 = arith.addf %103, %104 : vector<8x32xf32>
      %106 = vector.extract_strided_slice %97 {offsets = [0, 32], sizes = [8, 32], strides = [1, 1]} : vector<8x128xf32> to vector<8x32xf32>
      %cst_70 = arith.constant 5.000000e-01 : f32
      %107 = vector.broadcast %cst_70 : f32 to vector<8x32xf32>
      %108 = arith.mulf %107, %106 : vector<8x32xf32>
      %109 = math.tanh %108 : vector<8x32xf32>
      %cst_71 = arith.constant 5.000000e-01 : f32
      %110 = vector.broadcast %cst_71 : f32 to vector<8x32xf32>
      %111 = arith.mulf %110, %109 : vector<8x32xf32>
      %cst_72 = arith.constant 5.000000e-01 : f32
      %112 = vector.broadcast %cst_72 : f32 to vector<8x32xf32>
      %113 = arith.addf %111, %112 : vector<8x32xf32>
      %114 = vector.extract_strided_slice %97 {offsets = [0, 64], sizes = [8, 32], strides = [1, 1]} : vector<8x128xf32> to vector<8x32xf32>
      %115 = math.tanh %114 : vector<8x32xf32>
      %116 = vector.extract_strided_slice %97 {offsets = [0, 96], sizes = [8, 32], strides = [1, 1]} : vector<8x128xf32> to vector<8x32xf32>
      %cst_73 = arith.constant 5.000000e-01 : f32
      %117 = vector.broadcast %cst_73 : f32 to vector<8x32xf32>
      %118 = arith.mulf %117, %116 : vector<8x32xf32>
      %119 = math.tanh %118 : vector<8x32xf32>
      %cst_74 = arith.constant 5.000000e-01 : f32
      %120 = vector.broadcast %cst_74 : f32 to vector<8x32xf32>
      %121 = arith.mulf %120, %119 : vector<8x32xf32>
      %cst_75 = arith.constant 5.000000e-01 : f32
      %122 = vector.broadcast %cst_75 : f32 to vector<8x32xf32>
      %123 = arith.addf %121, %122 : vector<8x32xf32>
      %124 = arith.mulf %113, %94 : vector<8x32xf32>
      %125 = arith.mulf %105, %115 : vector<8x32xf32>
      %126 = arith.addf %124, %125 : vector<8x32xf32>
      %127 = math.tanh %126 : vector<8x32xf32>
      %128 = arith.mulf %123, %127 : vector<8x32xf32>
      %129 = vector.broadcast %92 : i32 to vector<8x1xi32>
      %130 = arith.cmpi slt, %129, %3 : vector<8x1xi32>
      %131 = vector.shape_cast %130 : vector<8x1xi1> to vector<8x1xi1>
      %132 = vector.broadcast %131 : vector<8x1xi1> to vector<8x32xi1>
      %cst_76 = arith.constant 0.000000e+00 : f32
      %133 = vector.broadcast %cst_76 : f32 to vector<8x32xf32>
      %134 = arith.select %132, %128, %133 : vector<8x32xi1>, vector<8x32xf32>
      %135 = arith.select %132, %128, %93 : vector<8x32xi1>, vector<8x32xf32>
      %c0_77 = arith.constant 0 : index
      %c0_78 = arith.constant 0 : index
      %136 = vector.load %arg10[%c0_77, %c0_78] : memref<8x32xf32, #tpu.memory_space<vmem>>, vector<8x32xf32>
      tpu.vector_store %arg10[%c0_77, %c0_78], %135 {strides = array<i32>} : memref<8x32xf32, #tpu.memory_space<vmem>>, vector<8x32xf32>,
      %137 = arith.select %132, %126, %94 : vector<8x32xi1>, vector<8x32xf32>
      %c0_79 = arith.constant 0 : index
      %c0_80 = arith.constant 0 : index
      %138 = vector.load %arg11[%c0_79, %c0_80] : memref<8x32xf32, #tpu.memory_space<vmem>>, vector<8x32xf32>
      tpu.vector_store %arg11[%c0_79, %c0_80], %137 {strides = array<i32>} : memref<8x32xf32, #tpu.memory_space<vmem>>, vector<8x32xf32>,
      %139 = vector.shape_cast %134 : vector<8x32xf32> to vector<8x1x32xf32>
      %c0_81 = arith.constant 0 : index
      %c0_82 = arith.constant 0 : index
      %c6 = arith.constant 6 : index
      %c0_83 = arith.constant 0 : index
      %140 = vector.load %arg7[%c0_81, %c0_82, %c6, %c0_83] : memref<1x8x8x32xf32, #tpu.memory_space<vmem>>, vector<1x8x1x32xf32>
      %141 = vector.shape_cast %140 : vector<1x8x1x32xf32> to vector<8x1x32xf32>
      %142 = vector.shape_cast %139 : vector<8x1x32xf32> to vector<1x8x1x32xf32>
      tpu.vector_store %arg7[%c0_81, %c0_82, %c6, %c0_83], %142 {strides = array<i32>} : memref<1x8x8x32xf32, #tpu.memory_space<vmem>>, vector<1x8x1x32xf32>,
      %c0_84 = arith.constant 0 : index
      %c0_85 = arith.constant 0 : index
      %c0_86 = arith.constant 0 : index
      %143 = vector.load %arg8[%c0_84, %c0_85, %c0_86] : memref<1x8x32xf32, #tpu.memory_space<vmem>>, vector<1x8x32xf32>
      %144 = vector.shape_cast %143 : vector<1x8x32xf32> to vector<8x32xf32>
      %145 = arith.addf %144, %134 : vector<8x32xf32>
      %c0_87 = arith.constant 0 : index
      %c0_88 = arith.constant 0 : index
      %c0_89 = arith.constant 0 : index
      %146 = vector.load %arg8[%c0_87, %c0_88, %c0_89] : memref<1x8x32xf32, #tpu.memory_space<vmem>>, vector<1x8x32xf32>
      %147 = vector.shape_cast %146 : vector<1x8x32xf32> to vector<8x32xf32>
      %148 = vector.shape_cast %145 : vector<8x32xf32> to vector<1x8x32xf32>
      tpu.vector_store %arg8[%c0_87, %c0_88, %c0_89], %148 {strides = array<i32>} : memref<1x8x32xf32, #tpu.memory_space<vmem>>, vector<1x8x32xf32>,
      %c0_90 = arith.constant 0 : index
      %c0_91 = arith.constant 0 : index
      %c0_92 = arith.constant 0 : index
      %149 = vector.load %arg9[%c0_90, %c0_91, %c0_92] : memref<1x8x32xf32, #tpu.memory_space<vmem>>, vector<1x8x32xf32>
      %150 = vector.shape_cast %149 : vector<1x8x32xf32> to vector<8x32xf32>
      %151 = arith.mulf %134, %134 : vector<8x32xf32>
      %152 = arith.addf %150, %151 : vector<8x32xf32>
      %c0_93 = arith.constant 0 : index
      %c0_94 = arith.constant 0 : index
      %c0_95 = arith.constant 0 : index
      %153 = vector.load %arg9[%c0_93, %c0_94, %c0_95] : memref<1x8x32xf32, #tpu.memory_space<vmem>>, vector<1x8x32xf32>
      %154 = vector.shape_cast %153 : vector<1x8x32xf32> to vector<8x32xf32>
      %155 = vector.shape_cast %152 : vector<8x32xf32> to vector<1x8x32xf32>
      tpu.vector_store %arg9[%c0_93, %c0_94, %c0_95], %155 {strides = array<i32>} : memref<1x8x32xf32, #tpu.memory_space<vmem>>, vector<1x8x32xf32>,
      %c8_i32_96 = arith.constant 8 : i32
      %156 = arith.addi %23, %c8_i32_96 : i32
      %c1_i32_97 = arith.constant 1 : i32
      %157 = arith.subi %156, %c1_i32_97 : i32
      %c2_i32 = arith.constant 2 : i32
      %158 = arith.subi %157, %c2_i32 : i32
      %c0_98 = arith.constant 0 : index
      %c0_99 = arith.constant 0 : index
      %159 = vector.load %arg10[%c0_98, %c0_99] : memref<8x32xf32, #tpu.memory_space<vmem>>, vector<8x32xf32>
      %c0_100 = arith.constant 0 : index
      %c0_101 = arith.constant 0 : index
      %160 = vector.load %arg11[%c0_100, %c0_101] : memref<8x32xf32, #tpu.memory_space<vmem>>, vector<8x32xf32>
      %c40 = arith.constant 40 : index
      %c0_102 = arith.constant 0 : index
      %161 = vector.load %arg12[%c40, %c0_102] : memref<64x128xf32, #tpu.memory_space<vmem>>, vector<8x128xf32>
      %cst_103 = arith.constant dense<0.000000e+00> : vector<8x128xf32>
      %162 = tpu.matmul %159, %5, %cst_103 {dimension_numbers = #tpu.dot_dimension_numbers<[1], [0], [0], [1], [0, 0, 1, 1], [], []>} : vector<8x32xf32>, vector<32x128xf32>, vector<8x128xf32> -> vector<8x128xf32>
      %163 = arith.addf %161, %162 : vector<8x128xf32>
      %164 = vector.extract_strided_slice %163 {offsets = [0, 0], sizes = [8, 32], strides = [1, 1]} : vector<8x128xf32> to vector<8x32xf32>
      %cst_104 = arith.constant 5.000000e-01 : f32
      %165 = vector.broadcast %cst_104 : f32 to vector<8x32xf32>
      %166 = arith.mulf %165, %164 : vector<8x32xf32>
      %167 = math.tanh %166 : vector<8x32xf32>
      %cst_105 = arith.constant 5.000000e-01 : f32
      %168 = vector.broadcast %cst_105 : f32 to vector<8x32xf32>
      %169 = arith.mulf %168, %167 : vector<8x32xf32>
      %cst_106 = arith.constant 5.000000e-01 : f32
      %170 = vector.broadcast %cst_106 : f32 to vector<8x32xf32>
      %171 = arith.addf %169, %170 : vector<8x32xf32>
      %172 = vector.extract_strided_slice %163 {offsets = [0, 32], sizes = [8, 32], strides = [1, 1]} : vector<8x128xf32> to vector<8x32xf32>
      %cst_107 = arith.constant 5.000000e-01 : f32
      %173 = vector.broadcast %cst_107 : f32 to vector<8x32xf32>
      %174 = arith.mulf %173, %172 : vector<8x32xf32>
      %175 = math.tanh %174 : vector<8x32xf32>
      %cst_108 = arith.constant 5.000000e-01 : f32
      %176 = vector.broadcast %cst_108 : f32 to vector<8x32xf32>
      %177 = arith.mulf %176, %175 : vector<8x32xf32>
      %cst_109 = arith.constant 5.000000e-01 : f32
      %178 = vector.broadcast %cst_109 : f32 to vector<8x32xf32>
      %179 = arith.addf %177, %178 : vector<8x32xf32>
      %180 = vector.extract_strided_slice %163 {offsets = [0, 64], sizes = [8, 32], strides = [1, 1]} : vector<8x128xf32> to vector<8x32xf32>
      %181 = math.tanh %180 : vector<8x32xf32>
      %182 = vector.extract_strided_slice %163 {offsets = [0, 96], sizes = [8, 32], strides = [1, 1]} : vector<8x128xf32> to vector<8x32xf32>
      %cst_110 = arith.constant 5.000000e-01 : f32
      %183 = vector.broadcast %cst_110 : f32 to vector<8x32xf32>
      %184 = arith.mulf %183, %182 : vector<8x32xf32>
      %185 = math.tanh %184 : vector<8x32xf32>
      %cst_111 = arith.constant 5.000000e-01 : f32
      %186 = vector.broadcast %cst_111 : f32 to vector<8x32xf32>
      %187 = arith.mulf %186, %185 : vector<8x32xf32>
      %cst_112 = arith.constant 5.000000e-01 : f32
      %188 = vector.broadcast %cst_112 : f32 to vector<8x32xf32>
      %189 = arith.addf %187, %188 : vector<8x32xf32>
      %190 = arith.mulf %179, %160 : vector<8x32xf32>
      %191 = arith.mulf %171, %181 : vector<8x32xf32>
      %192 = arith.addf %190, %191 : vector<8x32xf32>
      %193 = math.tanh %192 : vector<8x32xf32>
      %194 = arith.mulf %189, %193 : vector<8x32xf32>
      %195 = vector.broadcast %158 : i32 to vector<8x1xi32>
      %196 = arith.cmpi slt, %195, %3 : vector<8x1xi32>
      %197 = vector.shape_cast %196 : vector<8x1xi1> to vector<8x1xi1>
      %198 = vector.broadcast %197 : vector<8x1xi1> to vector<8x32xi1>
      %cst_113 = arith.constant 0.000000e+00 : f32
      %199 = vector.broadcast %cst_113 : f32 to vector<8x32xf32>
      %200 = arith.select %198, %194, %199 : vector<8x32xi1>, vector<8x32xf32>
      %201 = arith.select %198, %194, %159 : vector<8x32xi1>, vector<8x32xf32>
      %c0_114 = arith.constant 0 : index
      %c0_115 = arith.constant 0 : index
      %202 = vector.load %arg10[%c0_114, %c0_115] : memref<8x32xf32, #tpu.memory_space<vmem>>, vector<8x32xf32>
      tpu.vector_store %arg10[%c0_114, %c0_115], %201 {strides = array<i32>} : memref<8x32xf32, #tpu.memory_space<vmem>>, vector<8x32xf32>,
      %203 = arith.select %198, %192, %160 : vector<8x32xi1>, vector<8x32xf32>
      %c0_116 = arith.constant 0 : index
      %c0_117 = arith.constant 0 : index
      %204 = vector.load %arg11[%c0_116, %c0_117] : memref<8x32xf32, #tpu.memory_space<vmem>>, vector<8x32xf32>
      tpu.vector_store %arg11[%c0_116, %c0_117], %203 {strides = array<i32>} : memref<8x32xf32, #tpu.memory_space<vmem>>, vector<8x32xf32>,
      %205 = vector.shape_cast %200 : vector<8x32xf32> to vector<8x1x32xf32>
      %c0_118 = arith.constant 0 : index
      %c0_119 = arith.constant 0 : index
      %c5 = arith.constant 5 : index
      %c0_120 = arith.constant 0 : index
      %206 = vector.load %arg7[%c0_118, %c0_119, %c5, %c0_120] : memref<1x8x8x32xf32, #tpu.memory_space<vmem>>, vector<1x8x1x32xf32>
      %207 = vector.shape_cast %206 : vector<1x8x1x32xf32> to vector<8x1x32xf32>
      %208 = vector.shape_cast %205 : vector<8x1x32xf32> to vector<1x8x1x32xf32>
      tpu.vector_store %arg7[%c0_118, %c0_119, %c5, %c0_120], %208 {strides = array<i32>} : memref<1x8x8x32xf32, #tpu.memory_space<vmem>>, vector<1x8x1x32xf32>,
      %c0_121 = arith.constant 0 : index
      %c0_122 = arith.constant 0 : index
      %c0_123 = arith.constant 0 : index
      %209 = vector.load %arg8[%c0_121, %c0_122, %c0_123] : memref<1x8x32xf32, #tpu.memory_space<vmem>>, vector<1x8x32xf32>
      %210 = vector.shape_cast %209 : vector<1x8x32xf32> to vector<8x32xf32>
      %211 = arith.addf %210, %200 : vector<8x32xf32>
      %c0_124 = arith.constant 0 : index
      %c0_125 = arith.constant 0 : index
      %c0_126 = arith.constant 0 : index
      %212 = vector.load %arg8[%c0_124, %c0_125, %c0_126] : memref<1x8x32xf32, #tpu.memory_space<vmem>>, vector<1x8x32xf32>
      %213 = vector.shape_cast %212 : vector<1x8x32xf32> to vector<8x32xf32>
      %214 = vector.shape_cast %211 : vector<8x32xf32> to vector<1x8x32xf32>
      tpu.vector_store %arg8[%c0_124, %c0_125, %c0_126], %214 {strides = array<i32>} : memref<1x8x32xf32, #tpu.memory_space<vmem>>, vector<1x8x32xf32>,
      %c0_127 = arith.constant 0 : index
      %c0_128 = arith.constant 0 : index
      %c0_129 = arith.constant 0 : index
      %215 = vector.load %arg9[%c0_127, %c0_128, %c0_129] : memref<1x8x32xf32, #tpu.memory_space<vmem>>, vector<1x8x32xf32>
      %216 = vector.shape_cast %215 : vector<1x8x32xf32> to vector<8x32xf32>
      %217 = arith.mulf %200, %200 : vector<8x32xf32>
      %218 = arith.addf %216, %217 : vector<8x32xf32>
      %c0_130 = arith.constant 0 : index
      %c0_131 = arith.constant 0 : index
      %c0_132 = arith.constant 0 : index
      %219 = vector.load %arg9[%c0_130, %c0_131, %c0_132] : memref<1x8x32xf32, #tpu.memory_space<vmem>>, vector<1x8x32xf32>
      %220 = vector.shape_cast %219 : vector<1x8x32xf32> to vector<8x32xf32>
      %221 = vector.shape_cast %218 : vector<8x32xf32> to vector<1x8x32xf32>
      tpu.vector_store %arg9[%c0_130, %c0_131, %c0_132], %221 {strides = array<i32>} : memref<1x8x32xf32, #tpu.memory_space<vmem>>, vector<1x8x32xf32>,
      %c8_i32_133 = arith.constant 8 : i32
      %222 = arith.addi %23, %c8_i32_133 : i32
      %c1_i32_134 = arith.constant 1 : i32
      %223 = arith.subi %222, %c1_i32_134 : i32
      %c3_i32 = arith.constant 3 : i32
      %224 = arith.subi %223, %c3_i32 : i32
      %c0_135 = arith.constant 0 : index
      %c0_136 = arith.constant 0 : index
      %225 = vector.load %arg10[%c0_135, %c0_136] : memref<8x32xf32, #tpu.memory_space<vmem>>, vector<8x32xf32>
      %c0_137 = arith.constant 0 : index
      %c0_138 = arith.constant 0 : index
      %226 = vector.load %arg11[%c0_137, %c0_138] : memref<8x32xf32, #tpu.memory_space<vmem>>, vector<8x32xf32>
      %c32 = arith.constant 32 : index
      %c0_139 = arith.constant 0 : index
      %227 = vector.load %arg12[%c32, %c0_139] : memref<64x128xf32, #tpu.memory_space<vmem>>, vector<8x128xf32>
      %cst_140 = arith.constant dense<0.000000e+00> : vector<8x128xf32>
      %228 = tpu.matmul %225, %5, %cst_140 {dimension_numbers = #tpu.dot_dimension_numbers<[1], [0], [0], [1], [0, 0, 1, 1], [], []>} : vector<8x32xf32>, vector<32x128xf32>, vector<8x128xf32> -> vector<8x128xf32>
      %229 = arith.addf %227, %228 : vector<8x128xf32>
      %230 = vector.extract_strided_slice %229 {offsets = [0, 0], sizes = [8, 32], strides = [1, 1]} : vector<8x128xf32> to vector<8x32xf32>
      %cst_141 = arith.constant 5.000000e-01 : f32
      %231 = vector.broadcast %cst_141 : f32 to vector<8x32xf32>
      %232 = arith.mulf %231, %230 : vector<8x32xf32>
      %233 = math.tanh %232 : vector<8x32xf32>
      %cst_142 = arith.constant 5.000000e-01 : f32
      %234 = vector.broadcast %cst_142 : f32 to vector<8x32xf32>
      %235 = arith.mulf %234, %233 : vector<8x32xf32>
      %cst_143 = arith.constant 5.000000e-01 : f32
      %236 = vector.broadcast %cst_143 : f32 to vector<8x32xf32>
      %237 = arith.addf %235, %236 : vector<8x32xf32>
      %238 = vector.extract_strided_slice %229 {offsets = [0, 32], sizes = [8, 32], strides = [1, 1]} : vector<8x128xf32> to vector<8x32xf32>
      %cst_144 = arith.constant 5.000000e-01 : f32
      %239 = vector.broadcast %cst_144 : f32 to vector<8x32xf32>
      %240 = arith.mulf %239, %238 : vector<8x32xf32>
      %241 = math.tanh %240 : vector<8x32xf32>
      %cst_145 = arith.constant 5.000000e-01 : f32
      %242 = vector.broadcast %cst_145 : f32 to vector<8x32xf32>
      %243 = arith.mulf %242, %241 : vector<8x32xf32>
      %cst_146 = arith.constant 5.000000e-01 : f32
      %244 = vector.broadcast %cst_146 : f32 to vector<8x32xf32>
      %245 = arith.addf %243, %244 : vector<8x32xf32>
      %246 = vector.extract_strided_slice %229 {offsets = [0, 64], sizes = [8, 32], strides = [1, 1]} : vector<8x128xf32> to vector<8x32xf32>
      %247 = math.tanh %246 : vector<8x32xf32>
      %248 = vector.extract_strided_slice %229 {offsets = [0, 96], sizes = [8, 32], strides = [1, 1]} : vector<8x128xf32> to vector<8x32xf32>
      %cst_147 = arith.constant 5.000000e-01 : f32
      %249 = vector.broadcast %cst_147 : f32 to vector<8x32xf32>
      %250 = arith.mulf %249, %248 : vector<8x32xf32>
      %251 = math.tanh %250 : vector<8x32xf32>
      %cst_148 = arith.constant 5.000000e-01 : f32
      %252 = vector.broadcast %cst_148 : f32 to vector<8x32xf32>
      %253 = arith.mulf %252, %251 : vector<8x32xf32>
      %cst_149 = arith.constant 5.000000e-01 : f32
      %254 = vector.broadcast %cst_149 : f32 to vector<8x32xf32>
      %255 = arith.addf %253, %254 : vector<8x32xf32>
      %256 = arith.mulf %245, %226 : vector<8x32xf32>
      %257 = arith.mulf %237, %247 : vector<8x32xf32>
      %258 = arith.addf %256, %257 : vector<8x32xf32>
      %259 = math.tanh %258 : vector<8x32xf32>
      %260 = arith.mulf %255, %259 : vector<8x32xf32>
      %261 = vector.broadcast %224 : i32 to vector<8x1xi32>
      %262 = arith.cmpi slt, %261, %3 : vector<8x1xi32>
      %263 = vector.shape_cast %262 : vector<8x1xi1> to vector<8x1xi1>
      %264 = vector.broadcast %263 : vector<8x1xi1> to vector<8x32xi1>
      %cst_150 = arith.constant 0.000000e+00 : f32
      %265 = vector.broadcast %cst_150 : f32 to vector<8x32xf32>
      %266 = arith.select %264, %260, %265 : vector<8x32xi1>, vector<8x32xf32>
      %267 = arith.select %264, %260, %225 : vector<8x32xi1>, vector<8x32xf32>
      %c0_151 = arith.constant 0 : index
      %c0_152 = arith.constant 0 : index
      %268 = vector.load %arg10[%c0_151, %c0_152] : memref<8x32xf32, #tpu.memory_space<vmem>>, vector<8x32xf32>
      tpu.vector_store %arg10[%c0_151, %c0_152], %267 {strides = array<i32>} : memref<8x32xf32, #tpu.memory_space<vmem>>, vector<8x32xf32>,
      %269 = arith.select %264, %258, %226 : vector<8x32xi1>, vector<8x32xf32>
      %c0_153 = arith.constant 0 : index
      %c0_154 = arith.constant 0 : index
      %270 = vector.load %arg11[%c0_153, %c0_154] : memref<8x32xf32, #tpu.memory_space<vmem>>, vector<8x32xf32>
      tpu.vector_store %arg11[%c0_153, %c0_154], %269 {strides = array<i32>} : memref<8x32xf32, #tpu.memory_space<vmem>>, vector<8x32xf32>,
      %271 = vector.shape_cast %266 : vector<8x32xf32> to vector<8x1x32xf32>
      %c0_155 = arith.constant 0 : index
      %c0_156 = arith.constant 0 : index
      %c4 = arith.constant 4 : index
      %c0_157 = arith.constant 0 : index
      %272 = vector.load %arg7[%c0_155, %c0_156, %c4, %c0_157] : memref<1x8x8x32xf32, #tpu.memory_space<vmem>>, vector<1x8x1x32xf32>
      %273 = vector.shape_cast %272 : vector<1x8x1x32xf32> to vector<8x1x32xf32>
      %274 = vector.shape_cast %271 : vector<8x1x32xf32> to vector<1x8x1x32xf32>
      tpu.vector_store %arg7[%c0_155, %c0_156, %c4, %c0_157], %274 {strides = array<i32>} : memref<1x8x8x32xf32, #tpu.memory_space<vmem>>, vector<1x8x1x32xf32>,
      %c0_158 = arith.constant 0 : index
      %c0_159 = arith.constant 0 : index
      %c0_160 = arith.constant 0 : index
      %275 = vector.load %arg8[%c0_158, %c0_159, %c0_160] : memref<1x8x32xf32, #tpu.memory_space<vmem>>, vector<1x8x32xf32>
      %276 = vector.shape_cast %275 : vector<1x8x32xf32> to vector<8x32xf32>
      %277 = arith.addf %276, %266 : vector<8x32xf32>
      %c0_161 = arith.constant 0 : index
      %c0_162 = arith.constant 0 : index
      %c0_163 = arith.constant 0 : index
      %278 = vector.load %arg8[%c0_161, %c0_162, %c0_163] : memref<1x8x32xf32, #tpu.memory_space<vmem>>, vector<1x8x32xf32>
      %279 = vector.shape_cast %278 : vector<1x8x32xf32> to vector<8x32xf32>
      %280 = vector.shape_cast %277 : vector<8x32xf32> to vector<1x8x32xf32>
      tpu.vector_store %arg8[%c0_161, %c0_162, %c0_163], %280 {strides = array<i32>} : memref<1x8x32xf32, #tpu.memory_space<vmem>>, vector<1x8x32xf32>,
      %c0_164 = arith.constant 0 : index
      %c0_165 = arith.constant 0 : index
      %c0_166 = arith.constant 0 : index
      %281 = vector.load %arg9[%c0_164, %c0_165, %c0_166] : memref<1x8x32xf32, #tpu.memory_space<vmem>>, vector<1x8x32xf32>
      %282 = vector.shape_cast %281 : vector<1x8x32xf32> to vector<8x32xf32>
      %283 = arith.mulf %266, %266 : vector<8x32xf32>
      %284 = arith.addf %282, %283 : vector<8x32xf32>
      %c0_167 = arith.constant 0 : index
      %c0_168 = arith.constant 0 : index
      %c0_169 = arith.constant 0 : index
      %285 = vector.load %arg9[%c0_167, %c0_168, %c0_169] : memref<1x8x32xf32, #tpu.memory_space<vmem>>, vector<1x8x32xf32>
      %286 = vector.shape_cast %285 : vector<1x8x32xf32> to vector<8x32xf32>
      %287 = vector.shape_cast %284 : vector<8x32xf32> to vector<1x8x32xf32>
      tpu.vector_store %arg9[%c0_167, %c0_168, %c0_169], %287 {strides = array<i32>} : memref<1x8x32xf32, #tpu.memory_space<vmem>>, vector<1x8x32xf32>,
      %c8_i32_170 = arith.constant 8 : i32
      %288 = arith.addi %23, %c8_i32_170 : i32
      %c1_i32_171 = arith.constant 1 : i32
      %289 = arith.subi %288, %c1_i32_171 : i32
      %c4_i32 = arith.constant 4 : i32
      %290 = arith.subi %289, %c4_i32 : i32
      %c0_172 = arith.constant 0 : index
      %c0_173 = arith.constant 0 : index
      %291 = vector.load %arg10[%c0_172, %c0_173] : memref<8x32xf32, #tpu.memory_space<vmem>>, vector<8x32xf32>
      %c0_174 = arith.constant 0 : index
      %c0_175 = arith.constant 0 : index
      %292 = vector.load %arg11[%c0_174, %c0_175] : memref<8x32xf32, #tpu.memory_space<vmem>>, vector<8x32xf32>
      %c24 = arith.constant 24 : index
      %c0_176 = arith.constant 0 : index
      %293 = vector.load %arg12[%c24, %c0_176] : memref<64x128xf32, #tpu.memory_space<vmem>>, vector<8x128xf32>
      %cst_177 = arith.constant dense<0.000000e+00> : vector<8x128xf32>
      %294 = tpu.matmul %291, %5, %cst_177 {dimension_numbers = #tpu.dot_dimension_numbers<[1], [0], [0], [1], [0, 0, 1, 1], [], []>} : vector<8x32xf32>, vector<32x128xf32>, vector<8x128xf32> -> vector<8x128xf32>
      %295 = arith.addf %293, %294 : vector<8x128xf32>
      %296 = vector.extract_strided_slice %295 {offsets = [0, 0], sizes = [8, 32], strides = [1, 1]} : vector<8x128xf32> to vector<8x32xf32>
      %cst_178 = arith.constant 5.000000e-01 : f32
      %297 = vector.broadcast %cst_178 : f32 to vector<8x32xf32>
      %298 = arith.mulf %297, %296 : vector<8x32xf32>
      %299 = math.tanh %298 : vector<8x32xf32>
      %cst_179 = arith.constant 5.000000e-01 : f32
      %300 = vector.broadcast %cst_179 : f32 to vector<8x32xf32>
      %301 = arith.mulf %300, %299 : vector<8x32xf32>
      %cst_180 = arith.constant 5.000000e-01 : f32
      %302 = vector.broadcast %cst_180 : f32 to vector<8x32xf32>
      %303 = arith.addf %301, %302 : vector<8x32xf32>
      %304 = vector.extract_strided_slice %295 {offsets = [0, 32], sizes = [8, 32], strides = [1, 1]} : vector<8x128xf32> to vector<8x32xf32>
      %cst_181 = arith.constant 5.000000e-01 : f32
      %305 = vector.broadcast %cst_181 : f32 to vector<8x32xf32>
      %306 = arith.mulf %305, %304 : vector<8x32xf32>
      %307 = math.tanh %306 : vector<8x32xf32>
      %cst_182 = arith.constant 5.000000e-01 : f32
      %308 = vector.broadcast %cst_182 : f32 to vector<8x32xf32>
      %309 = arith.mulf %308, %307 : vector<8x32xf32>
      %cst_183 = arith.constant 5.000000e-01 : f32
      %310 = vector.broadcast %cst_183 : f32 to vector<8x32xf32>
      %311 = arith.addf %309, %310 : vector<8x32xf32>
      %312 = vector.extract_strided_slice %295 {offsets = [0, 64], sizes = [8, 32], strides = [1, 1]} : vector<8x128xf32> to vector<8x32xf32>
      %313 = math.tanh %312 : vector<8x32xf32>
      %314 = vector.extract_strided_slice %295 {offsets = [0, 96], sizes = [8, 32], strides = [1, 1]} : vector<8x128xf32> to vector<8x32xf32>
      %cst_184 = arith.constant 5.000000e-01 : f32
      %315 = vector.broadcast %cst_184 : f32 to vector<8x32xf32>
      %316 = arith.mulf %315, %314 : vector<8x32xf32>
      %317 = math.tanh %316 : vector<8x32xf32>
      %cst_185 = arith.constant 5.000000e-01 : f32
      %318 = vector.broadcast %cst_185 : f32 to vector<8x32xf32>
      %319 = arith.mulf %318, %317 : vector<8x32xf32>
      %cst_186 = arith.constant 5.000000e-01 : f32
      %320 = vector.broadcast %cst_186 : f32 to vector<8x32xf32>
      %321 = arith.addf %319, %320 : vector<8x32xf32>
      %322 = arith.mulf %311, %292 : vector<8x32xf32>
      %323 = arith.mulf %303, %313 : vector<8x32xf32>
      %324 = arith.addf %322, %323 : vector<8x32xf32>
      %325 = math.tanh %324 : vector<8x32xf32>
      %326 = arith.mulf %321, %325 : vector<8x32xf32>
      %327 = vector.broadcast %290 : i32 to vector<8x1xi32>
      %328 = arith.cmpi slt, %327, %3 : vector<8x1xi32>
      %329 = vector.shape_cast %328 : vector<8x1xi1> to vector<8x1xi1>
      %330 = vector.broadcast %329 : vector<8x1xi1> to vector<8x32xi1>
      %cst_187 = arith.constant 0.000000e+00 : f32
      %331 = vector.broadcast %cst_187 : f32 to vector<8x32xf32>
      %332 = arith.select %330, %326, %331 : vector<8x32xi1>, vector<8x32xf32>
      %333 = arith.select %330, %326, %291 : vector<8x32xi1>, vector<8x32xf32>
      %c0_188 = arith.constant 0 : index
      %c0_189 = arith.constant 0 : index
      %334 = vector.load %arg10[%c0_188, %c0_189] : memref<8x32xf32, #tpu.memory_space<vmem>>, vector<8x32xf32>
      tpu.vector_store %arg10[%c0_188, %c0_189], %333 {strides = array<i32>} : memref<8x32xf32, #tpu.memory_space<vmem>>, vector<8x32xf32>,
      %335 = arith.select %330, %324, %292 : vector<8x32xi1>, vector<8x32xf32>
      %c0_190 = arith.constant 0 : index
      %c0_191 = arith.constant 0 : index
      %336 = vector.load %arg11[%c0_190, %c0_191] : memref<8x32xf32, #tpu.memory_space<vmem>>, vector<8x32xf32>
      tpu.vector_store %arg11[%c0_190, %c0_191], %335 {strides = array<i32>} : memref<8x32xf32, #tpu.memory_space<vmem>>, vector<8x32xf32>,
      %337 = vector.shape_cast %332 : vector<8x32xf32> to vector<8x1x32xf32>
      %c0_192 = arith.constant 0 : index
      %c0_193 = arith.constant 0 : index
      %c3 = arith.constant 3 : index
      %c0_194 = arith.constant 0 : index
      %338 = vector.load %arg7[%c0_192, %c0_193, %c3, %c0_194] : memref<1x8x8x32xf32, #tpu.memory_space<vmem>>, vector<1x8x1x32xf32>
      %339 = vector.shape_cast %338 : vector<1x8x1x32xf32> to vector<8x1x32xf32>
      %340 = vector.shape_cast %337 : vector<8x1x32xf32> to vector<1x8x1x32xf32>
      tpu.vector_store %arg7[%c0_192, %c0_193, %c3, %c0_194], %340 {strides = array<i32>} : memref<1x8x8x32xf32, #tpu.memory_space<vmem>>, vector<1x8x1x32xf32>,
      %c0_195 = arith.constant 0 : index
      %c0_196 = arith.constant 0 : index
      %c0_197 = arith.constant 0 : index
      %341 = vector.load %arg8[%c0_195, %c0_196, %c0_197] : memref<1x8x32xf32, #tpu.memory_space<vmem>>, vector<1x8x32xf32>
      %342 = vector.shape_cast %341 : vector<1x8x32xf32> to vector<8x32xf32>
      %343 = arith.addf %342, %332 : vector<8x32xf32>
      %c0_198 = arith.constant 0 : index
      %c0_199 = arith.constant 0 : index
      %c0_200 = arith.constant 0 : index
      %344 = vector.load %arg8[%c0_198, %c0_199, %c0_200] : memref<1x8x32xf32, #tpu.memory_space<vmem>>, vector<1x8x32xf32>
      %345 = vector.shape_cast %344 : vector<1x8x32xf32> to vector<8x32xf32>
      %346 = vector.shape_cast %343 : vector<8x32xf32> to vector<1x8x32xf32>
      tpu.vector_store %arg8[%c0_198, %c0_199, %c0_200], %346 {strides = array<i32>} : memref<1x8x32xf32, #tpu.memory_space<vmem>>, vector<1x8x32xf32>,
      %c0_201 = arith.constant 0 : index
      %c0_202 = arith.constant 0 : index
      %c0_203 = arith.constant 0 : index
      %347 = vector.load %arg9[%c0_201, %c0_202, %c0_203] : memref<1x8x32xf32, #tpu.memory_space<vmem>>, vector<1x8x32xf32>
      %348 = vector.shape_cast %347 : vector<1x8x32xf32> to vector<8x32xf32>
      %349 = arith.mulf %332, %332 : vector<8x32xf32>
      %350 = arith.addf %348, %349 : vector<8x32xf32>
      %c0_204 = arith.constant 0 : index
      %c0_205 = arith.constant 0 : index
      %c0_206 = arith.constant 0 : index
      %351 = vector.load %arg9[%c0_204, %c0_205, %c0_206] : memref<1x8x32xf32, #tpu.memory_space<vmem>>, vector<1x8x32xf32>
      %352 = vector.shape_cast %351 : vector<1x8x32xf32> to vector<8x32xf32>
      %353 = vector.shape_cast %350 : vector<8x32xf32> to vector<1x8x32xf32>
      tpu.vector_store %arg9[%c0_204, %c0_205, %c0_206], %353 {strides = array<i32>} : memref<1x8x32xf32, #tpu.memory_space<vmem>>, vector<1x8x32xf32>,
      %c8_i32_207 = arith.constant 8 : i32
      %354 = arith.addi %23, %c8_i32_207 : i32
      %c1_i32_208 = arith.constant 1 : i32
      %355 = arith.subi %354, %c1_i32_208 : i32
      %c5_i32 = arith.constant 5 : i32
      %356 = arith.subi %355, %c5_i32 : i32
      %c0_209 = arith.constant 0 : index
      %c0_210 = arith.constant 0 : index
      %357 = vector.load %arg10[%c0_209, %c0_210] : memref<8x32xf32, #tpu.memory_space<vmem>>, vector<8x32xf32>
      %c0_211 = arith.constant 0 : index
      %c0_212 = arith.constant 0 : index
      %358 = vector.load %arg11[%c0_211, %c0_212] : memref<8x32xf32, #tpu.memory_space<vmem>>, vector<8x32xf32>
      %c16 = arith.constant 16 : index
      %c0_213 = arith.constant 0 : index
      %359 = vector.load %arg12[%c16, %c0_213] : memref<64x128xf32, #tpu.memory_space<vmem>>, vector<8x128xf32>
      %cst_214 = arith.constant dense<0.000000e+00> : vector<8x128xf32>
      %360 = tpu.matmul %357, %5, %cst_214 {dimension_numbers = #tpu.dot_dimension_numbers<[1], [0], [0], [1], [0, 0, 1, 1], [], []>} : vector<8x32xf32>, vector<32x128xf32>, vector<8x128xf32> -> vector<8x128xf32>
      %361 = arith.addf %359, %360 : vector<8x128xf32>
      %362 = vector.extract_strided_slice %361 {offsets = [0, 0], sizes = [8, 32], strides = [1, 1]} : vector<8x128xf32> to vector<8x32xf32>
      %cst_215 = arith.constant 5.000000e-01 : f32
      %363 = vector.broadcast %cst_215 : f32 to vector<8x32xf32>
      %364 = arith.mulf %363, %362 : vector<8x32xf32>
      %365 = math.tanh %364 : vector<8x32xf32>
      %cst_216 = arith.constant 5.000000e-01 : f32
      %366 = vector.broadcast %cst_216 : f32 to vector<8x32xf32>
      %367 = arith.mulf %366, %365 : vector<8x32xf32>
      %cst_217 = arith.constant 5.000000e-01 : f32
      %368 = vector.broadcast %cst_217 : f32 to vector<8x32xf32>
      %369 = arith.addf %367, %368 : vector<8x32xf32>
      %370 = vector.extract_strided_slice %361 {offsets = [0, 32], sizes = [8, 32], strides = [1, 1]} : vector<8x128xf32> to vector<8x32xf32>
      %cst_218 = arith.constant 5.000000e-01 : f32
      %371 = vector.broadcast %cst_218 : f32 to vector<8x32xf32>
      %372 = arith.mulf %371, %370 : vector<8x32xf32>
      %373 = math.tanh %372 : vector<8x32xf32>
      %cst_219 = arith.constant 5.000000e-01 : f32
      %374 = vector.broadcast %cst_219 : f32 to vector<8x32xf32>
      %375 = arith.mulf %374, %373 : vector<8x32xf32>
      %cst_220 = arith.constant 5.000000e-01 : f32
      %376 = vector.broadcast %cst_220 : f32 to vector<8x32xf32>
      %377 = arith.addf %375, %376 : vector<8x32xf32>
      %378 = vector.extract_strided_slice %361 {offsets = [0, 64], sizes = [8, 32], strides = [1, 1]} : vector<8x128xf32> to vector<8x32xf32>
      %379 = math.tanh %378 : vector<8x32xf32>
      %380 = vector.extract_strided_slice %361 {offsets = [0, 96], sizes = [8, 32], strides = [1, 1]} : vector<8x128xf32> to vector<8x32xf32>
      %cst_221 = arith.constant 5.000000e-01 : f32
      %381 = vector.broadcast %cst_221 : f32 to vector<8x32xf32>
      %382 = arith.mulf %381, %380 : vector<8x32xf32>
      %383 = math.tanh %382 : vector<8x32xf32>
      %cst_222 = arith.constant 5.000000e-01 : f32
      %384 = vector.broadcast %cst_222 : f32 to vector<8x32xf32>
      %385 = arith.mulf %384, %383 : vector<8x32xf32>
      %cst_223 = arith.constant 5.000000e-01 : f32
      %386 = vector.broadcast %cst_223 : f32 to vector<8x32xf32>
      %387 = arith.addf %385, %386 : vector<8x32xf32>
      %388 = arith.mulf %377, %358 : vector<8x32xf32>
      %389 = arith.mulf %369, %379 : vector<8x32xf32>
      %390 = arith.addf %388, %389 : vector<8x32xf32>
      %391 = math.tanh %390 : vector<8x32xf32>
      %392 = arith.mulf %387, %391 : vector<8x32xf32>
      %393 = vector.broadcast %356 : i32 to vector<8x1xi32>
      %394 = arith.cmpi slt, %393, %3 : vector<8x1xi32>
      %395 = vector.shape_cast %394 : vector<8x1xi1> to vector<8x1xi1>
      %396 = vector.broadcast %395 : vector<8x1xi1> to vector<8x32xi1>
      %cst_224 = arith.constant 0.000000e+00 : f32
      %397 = vector.broadcast %cst_224 : f32 to vector<8x32xf32>
      %398 = arith.select %396, %392, %397 : vector<8x32xi1>, vector<8x32xf32>
      %399 = arith.select %396, %392, %357 : vector<8x32xi1>, vector<8x32xf32>
      %c0_225 = arith.constant 0 : index
      %c0_226 = arith.constant 0 : index
      %400 = vector.load %arg10[%c0_225, %c0_226] : memref<8x32xf32, #tpu.memory_space<vmem>>, vector<8x32xf32>
      tpu.vector_store %arg10[%c0_225, %c0_226], %399 {strides = array<i32>} : memref<8x32xf32, #tpu.memory_space<vmem>>, vector<8x32xf32>,
      %401 = arith.select %396, %390, %358 : vector<8x32xi1>, vector<8x32xf32>
      %c0_227 = arith.constant 0 : index
      %c0_228 = arith.constant 0 : index
      %402 = vector.load %arg11[%c0_227, %c0_228] : memref<8x32xf32, #tpu.memory_space<vmem>>, vector<8x32xf32>
      tpu.vector_store %arg11[%c0_227, %c0_228], %401 {strides = array<i32>} : memref<8x32xf32, #tpu.memory_space<vmem>>, vector<8x32xf32>,
      %403 = vector.shape_cast %398 : vector<8x32xf32> to vector<8x1x32xf32>
      %c0_229 = arith.constant 0 : index
      %c0_230 = arith.constant 0 : index
      %c2 = arith.constant 2 : index
      %c0_231 = arith.constant 0 : index
      %404 = vector.load %arg7[%c0_229, %c0_230, %c2, %c0_231] : memref<1x8x8x32xf32, #tpu.memory_space<vmem>>, vector<1x8x1x32xf32>
      %405 = vector.shape_cast %404 : vector<1x8x1x32xf32> to vector<8x1x32xf32>
      %406 = vector.shape_cast %403 : vector<8x1x32xf32> to vector<1x8x1x32xf32>
      tpu.vector_store %arg7[%c0_229, %c0_230, %c2, %c0_231], %406 {strides = array<i32>} : memref<1x8x8x32xf32, #tpu.memory_space<vmem>>, vector<1x8x1x32xf32>,
      %c0_232 = arith.constant 0 : index
      %c0_233 = arith.constant 0 : index
      %c0_234 = arith.constant 0 : index
      %407 = vector.load %arg8[%c0_232, %c0_233, %c0_234] : memref<1x8x32xf32, #tpu.memory_space<vmem>>, vector<1x8x32xf32>
      %408 = vector.shape_cast %407 : vector<1x8x32xf32> to vector<8x32xf32>
      %409 = arith.addf %408, %398 : vector<8x32xf32>
      %c0_235 = arith.constant 0 : index
      %c0_236 = arith.constant 0 : index
      %c0_237 = arith.constant 0 : index
      %410 = vector.load %arg8[%c0_235, %c0_236, %c0_237] : memref<1x8x32xf32, #tpu.memory_space<vmem>>, vector<1x8x32xf32>
      %411 = vector.shape_cast %410 : vector<1x8x32xf32> to vector<8x32xf32>
      %412 = vector.shape_cast %409 : vector<8x32xf32> to vector<1x8x32xf32>
      tpu.vector_store %arg8[%c0_235, %c0_236, %c0_237], %412 {strides = array<i32>} : memref<1x8x32xf32, #tpu.memory_space<vmem>>, vector<1x8x32xf32>,
      %c0_238 = arith.constant 0 : index
      %c0_239 = arith.constant 0 : index
      %c0_240 = arith.constant 0 : index
      %413 = vector.load %arg9[%c0_238, %c0_239, %c0_240] : memref<1x8x32xf32, #tpu.memory_space<vmem>>, vector<1x8x32xf32>
      %414 = vector.shape_cast %413 : vector<1x8x32xf32> to vector<8x32xf32>
      %415 = arith.mulf %398, %398 : vector<8x32xf32>
      %416 = arith.addf %414, %415 : vector<8x32xf32>
      %c0_241 = arith.constant 0 : index
      %c0_242 = arith.constant 0 : index
      %c0_243 = arith.constant 0 : index
      %417 = vector.load %arg9[%c0_241, %c0_242, %c0_243] : memref<1x8x32xf32, #tpu.memory_space<vmem>>, vector<1x8x32xf32>
      %418 = vector.shape_cast %417 : vector<1x8x32xf32> to vector<8x32xf32>
      %419 = vector.shape_cast %416 : vector<8x32xf32> to vector<1x8x32xf32>
      tpu.vector_store %arg9[%c0_241, %c0_242, %c0_243], %419 {strides = array<i32>} : memref<1x8x32xf32, #tpu.memory_space<vmem>>, vector<1x8x32xf32>,
      %c8_i32_244 = arith.constant 8 : i32
      %420 = arith.addi %23, %c8_i32_244 : i32
      %c1_i32_245 = arith.constant 1 : i32
      %421 = arith.subi %420, %c1_i32_245 : i32
      %c6_i32 = arith.constant 6 : i32
      %422 = arith.subi %421, %c6_i32 : i32
      %c0_246 = arith.constant 0 : index
      %c0_247 = arith.constant 0 : index
      %423 = vector.load %arg10[%c0_246, %c0_247] : memref<8x32xf32, #tpu.memory_space<vmem>>, vector<8x32xf32>
      %c0_248 = arith.constant 0 : index
      %c0_249 = arith.constant 0 : index
      %424 = vector.load %arg11[%c0_248, %c0_249] : memref<8x32xf32, #tpu.memory_space<vmem>>, vector<8x32xf32>
      %c8 = arith.constant 8 : index
      %c0_250 = arith.constant 0 : index
      %425 = vector.load %arg12[%c8, %c0_250] : memref<64x128xf32, #tpu.memory_space<vmem>>, vector<8x128xf32>
      %cst_251 = arith.constant dense<0.000000e+00> : vector<8x128xf32>
      %426 = tpu.matmul %423, %5, %cst_251 {dimension_numbers = #tpu.dot_dimension_numbers<[1], [0], [0], [1], [0, 0, 1, 1], [], []>} : vector<8x32xf32>, vector<32x128xf32>, vector<8x128xf32> -> vector<8x128xf32>
      %427 = arith.addf %425, %426 : vector<8x128xf32>
      %428 = vector.extract_strided_slice %427 {offsets = [0, 0], sizes = [8, 32], strides = [1, 1]} : vector<8x128xf32> to vector<8x32xf32>
      %cst_252 = arith.constant 5.000000e-01 : f32
      %429 = vector.broadcast %cst_252 : f32 to vector<8x32xf32>
      %430 = arith.mulf %429, %428 : vector<8x32xf32>
      %431 = math.tanh %430 : vector<8x32xf32>
      %cst_253 = arith.constant 5.000000e-01 : f32
      %432 = vector.broadcast %cst_253 : f32 to vector<8x32xf32>
      %433 = arith.mulf %432, %431 : vector<8x32xf32>
      %cst_254 = arith.constant 5.000000e-01 : f32
      %434 = vector.broadcast %cst_254 : f32 to vector<8x32xf32>
      %435 = arith.addf %433, %434 : vector<8x32xf32>
      %436 = vector.extract_strided_slice %427 {offsets = [0, 32], sizes = [8, 32], strides = [1, 1]} : vector<8x128xf32> to vector<8x32xf32>
      %cst_255 = arith.constant 5.000000e-01 : f32
      %437 = vector.broadcast %cst_255 : f32 to vector<8x32xf32>
      %438 = arith.mulf %437, %436 : vector<8x32xf32>
      %439 = math.tanh %438 : vector<8x32xf32>
      %cst_256 = arith.constant 5.000000e-01 : f32
      %440 = vector.broadcast %cst_256 : f32 to vector<8x32xf32>
      %441 = arith.mulf %440, %439 : vector<8x32xf32>
      %cst_257 = arith.constant 5.000000e-01 : f32
      %442 = vector.broadcast %cst_257 : f32 to vector<8x32xf32>
      %443 = arith.addf %441, %442 : vector<8x32xf32>
      %444 = vector.extract_strided_slice %427 {offsets = [0, 64], sizes = [8, 32], strides = [1, 1]} : vector<8x128xf32> to vector<8x32xf32>
      %445 = math.tanh %444 : vector<8x32xf32>
      %446 = vector.extract_strided_slice %427 {offsets = [0, 96], sizes = [8, 32], strides = [1, 1]} : vector<8x128xf32> to vector<8x32xf32>
      %cst_258 = arith.constant 5.000000e-01 : f32
      %447 = vector.broadcast %cst_258 : f32 to vector<8x32xf32>
      %448 = arith.mulf %447, %446 : vector<8x32xf32>
      %449 = math.tanh %448 : vector<8x32xf32>
      %cst_259 = arith.constant 5.000000e-01 : f32
      %450 = vector.broadcast %cst_259 : f32 to vector<8x32xf32>
      %451 = arith.mulf %450, %449 : vector<8x32xf32>
      %cst_260 = arith.constant 5.000000e-01 : f32
      %452 = vector.broadcast %cst_260 : f32 to vector<8x32xf32>
      %453 = arith.addf %451, %452 : vector<8x32xf32>
      %454 = arith.mulf %443, %424 : vector<8x32xf32>
      %455 = arith.mulf %435, %445 : vector<8x32xf32>
      %456 = arith.addf %454, %455 : vector<8x32xf32>
      %457 = math.tanh %456 : vector<8x32xf32>
      %458 = arith.mulf %453, %457 : vector<8x32xf32>
      %459 = vector.broadcast %422 : i32 to vector<8x1xi32>
      %460 = arith.cmpi slt, %459, %3 : vector<8x1xi32>
      %461 = vector.shape_cast %460 : vector<8x1xi1> to vector<8x1xi1>
      %462 = vector.broadcast %461 : vector<8x1xi1> to vector<8x32xi1>
      %cst_261 = arith.constant 0.000000e+00 : f32
      %463 = vector.broadcast %cst_261 : f32 to vector<8x32xf32>
      %464 = arith.select %462, %458, %463 : vector<8x32xi1>, vector<8x32xf32>
      %465 = arith.select %462, %458, %423 : vector<8x32xi1>, vector<8x32xf32>
      %c0_262 = arith.constant 0 : index
      %c0_263 = arith.constant 0 : index
      %466 = vector.load %arg10[%c0_262, %c0_263] : memref<8x32xf32, #tpu.memory_space<vmem>>, vector<8x32xf32>
      tpu.vector_store %arg10[%c0_262, %c0_263], %465 {strides = array<i32>} : memref<8x32xf32, #tpu.memory_space<vmem>>, vector<8x32xf32>,
      %467 = arith.select %462, %456, %424 : vector<8x32xi1>, vector<8x32xf32>
      %c0_264 = arith.constant 0 : index
      %c0_265 = arith.constant 0 : index
      %468 = vector.load %arg11[%c0_264, %c0_265] : memref<8x32xf32, #tpu.memory_space<vmem>>, vector<8x32xf32>
      tpu.vector_store %arg11[%c0_264, %c0_265], %467 {strides = array<i32>} : memref<8x32xf32, #tpu.memory_space<vmem>>, vector<8x32xf32>,
      %469 = vector.shape_cast %464 : vector<8x32xf32> to vector<8x1x32xf32>
      %c0_266 = arith.constant 0 : index
      %c0_267 = arith.constant 0 : index
      %c1 = arith.constant 1 : index
      %c0_268 = arith.constant 0 : index
      %470 = vector.load %arg7[%c0_266, %c0_267, %c1, %c0_268] : memref<1x8x8x32xf32, #tpu.memory_space<vmem>>, vector<1x8x1x32xf32>
      %471 = vector.shape_cast %470 : vector<1x8x1x32xf32> to vector<8x1x32xf32>
      %472 = vector.shape_cast %469 : vector<8x1x32xf32> to vector<1x8x1x32xf32>
      tpu.vector_store %arg7[%c0_266, %c0_267, %c1, %c0_268], %472 {strides = array<i32>} : memref<1x8x8x32xf32, #tpu.memory_space<vmem>>, vector<1x8x1x32xf32>,
      %c0_269 = arith.constant 0 : index
      %c0_270 = arith.constant 0 : index
      %c0_271 = arith.constant 0 : index
      %473 = vector.load %arg8[%c0_269, %c0_270, %c0_271] : memref<1x8x32xf32, #tpu.memory_space<vmem>>, vector<1x8x32xf32>
      %474 = vector.shape_cast %473 : vector<1x8x32xf32> to vector<8x32xf32>
      %475 = arith.addf %474, %464 : vector<8x32xf32>
      %c0_272 = arith.constant 0 : index
      %c0_273 = arith.constant 0 : index
      %c0_274 = arith.constant 0 : index
      %476 = vector.load %arg8[%c0_272, %c0_273, %c0_274] : memref<1x8x32xf32, #tpu.memory_space<vmem>>, vector<1x8x32xf32>
      %477 = vector.shape_cast %476 : vector<1x8x32xf32> to vector<8x32xf32>
      %478 = vector.shape_cast %475 : vector<8x32xf32> to vector<1x8x32xf32>
      tpu.vector_store %arg8[%c0_272, %c0_273, %c0_274], %478 {strides = array<i32>} : memref<1x8x32xf32, #tpu.memory_space<vmem>>, vector<1x8x32xf32>,
      %c0_275 = arith.constant 0 : index
      %c0_276 = arith.constant 0 : index
      %c0_277 = arith.constant 0 : index
      %479 = vector.load %arg9[%c0_275, %c0_276, %c0_277] : memref<1x8x32xf32, #tpu.memory_space<vmem>>, vector<1x8x32xf32>
      %480 = vector.shape_cast %479 : vector<1x8x32xf32> to vector<8x32xf32>
      %481 = arith.mulf %464, %464 : vector<8x32xf32>
      %482 = arith.addf %480, %481 : vector<8x32xf32>
      %c0_278 = arith.constant 0 : index
      %c0_279 = arith.constant 0 : index
      %c0_280 = arith.constant 0 : index
      %483 = vector.load %arg9[%c0_278, %c0_279, %c0_280] : memref<1x8x32xf32, #tpu.memory_space<vmem>>, vector<1x8x32xf32>
      %484 = vector.shape_cast %483 : vector<1x8x32xf32> to vector<8x32xf32>
      %485 = vector.shape_cast %482 : vector<8x32xf32> to vector<1x8x32xf32>
      tpu.vector_store %arg9[%c0_278, %c0_279, %c0_280], %485 {strides = array<i32>} : memref<1x8x32xf32, #tpu.memory_space<vmem>>, vector<1x8x32xf32>,
      %c8_i32_281 = arith.constant 8 : i32
      %486 = arith.addi %23, %c8_i32_281 : i32
      %c1_i32_282 = arith.constant 1 : i32
      %487 = arith.subi %486, %c1_i32_282 : i32
      %c7_i32 = arith.constant 7 : i32
      %488 = arith.subi %487, %c7_i32 : i32
      %c0_283 = arith.constant 0 : index
      %c0_284 = arith.constant 0 : index
      %489 = vector.load %arg10[%c0_283, %c0_284] : memref<8x32xf32, #tpu.memory_space<vmem>>, vector<8x32xf32>
      %c0_285 = arith.constant 0 : index
      %c0_286 = arith.constant 0 : index
      %490 = vector.load %arg11[%c0_285, %c0_286] : memref<8x32xf32, #tpu.memory_space<vmem>>, vector<8x32xf32>
      %c0_287 = arith.constant 0 : index
      %c0_288 = arith.constant 0 : index
      %491 = vector.load %arg12[%c0_287, %c0_288] : memref<64x128xf32, #tpu.memory_space<vmem>>, vector<8x128xf32>
      %cst_289 = arith.constant dense<0.000000e+00> : vector<8x128xf32>
      %492 = tpu.matmul %489, %5, %cst_289 {dimension_numbers = #tpu.dot_dimension_numbers<[1], [0], [0], [1], [0, 0, 1, 1], [], []>} : vector<8x32xf32>, vector<32x128xf32>, vector<8x128xf32> -> vector<8x128xf32>
      %493 = arith.addf %491, %492 : vector<8x128xf32>
      %494 = vector.extract_strided_slice %493 {offsets = [0, 0], sizes = [8, 32], strides = [1, 1]} : vector<8x128xf32> to vector<8x32xf32>
      %cst_290 = arith.constant 5.000000e-01 : f32
      %495 = vector.broadcast %cst_290 : f32 to vector<8x32xf32>
      %496 = arith.mulf %495, %494 : vector<8x32xf32>
      %497 = math.tanh %496 : vector<8x32xf32>
      %cst_291 = arith.constant 5.000000e-01 : f32
      %498 = vector.broadcast %cst_291 : f32 to vector<8x32xf32>
      %499 = arith.mulf %498, %497 : vector<8x32xf32>
      %cst_292 = arith.constant 5.000000e-01 : f32
      %500 = vector.broadcast %cst_292 : f32 to vector<8x32xf32>
      %501 = arith.addf %499, %500 : vector<8x32xf32>
      %502 = vector.extract_strided_slice %493 {offsets = [0, 32], sizes = [8, 32], strides = [1, 1]} : vector<8x128xf32> to vector<8x32xf32>
      %cst_293 = arith.constant 5.000000e-01 : f32
      %503 = vector.broadcast %cst_293 : f32 to vector<8x32xf32>
      %504 = arith.mulf %503, %502 : vector<8x32xf32>
      %505 = math.tanh %504 : vector<8x32xf32>
      %cst_294 = arith.constant 5.000000e-01 : f32
      %506 = vector.broadcast %cst_294 : f32 to vector<8x32xf32>
      %507 = arith.mulf %506, %505 : vector<8x32xf32>
      %cst_295 = arith.constant 5.000000e-01 : f32
      %508 = vector.broadcast %cst_295 : f32 to vector<8x32xf32>
      %509 = arith.addf %507, %508 : vector<8x32xf32>
      %510 = vector.extract_strided_slice %493 {offsets = [0, 64], sizes = [8, 32], strides = [1, 1]} : vector<8x128xf32> to vector<8x32xf32>
      %511 = math.tanh %510 : vector<8x32xf32>
      %512 = vector.extract_strided_slice %493 {offsets = [0, 96], sizes = [8, 32], strides = [1, 1]} : vector<8x128xf32> to vector<8x32xf32>
      %cst_296 = arith.constant 5.000000e-01 : f32
      %513 = vector.broadcast %cst_296 : f32 to vector<8x32xf32>
      %514 = arith.mulf %513, %512 : vector<8x32xf32>
      %515 = math.tanh %514 : vector<8x32xf32>
      %cst_297 = arith.constant 5.000000e-01 : f32
      %516 = vector.broadcast %cst_297 : f32 to vector<8x32xf32>
      %517 = arith.mulf %516, %515 : vector<8x32xf32>
      %cst_298 = arith.constant 5.000000e-01 : f32
      %518 = vector.broadcast %cst_298 : f32 to vector<8x32xf32>
      %519 = arith.addf %517, %518 : vector<8x32xf32>
      %520 = arith.mulf %509, %490 : vector<8x32xf32>
      %521 = arith.mulf %501, %511 : vector<8x32xf32>
      %522 = arith.addf %520, %521 : vector<8x32xf32>
      %523 = math.tanh %522 : vector<8x32xf32>
      %524 = arith.mulf %519, %523 : vector<8x32xf32>
      %525 = vector.broadcast %488 : i32 to vector<8x1xi32>
      %526 = arith.cmpi slt, %525, %3 : vector<8x1xi32>
      %527 = vector.shape_cast %526 : vector<8x1xi1> to vector<8x1xi1>
      %528 = vector.broadcast %527 : vector<8x1xi1> to vector<8x32xi1>
      %cst_299 = arith.constant 0.000000e+00 : f32
      %529 = vector.broadcast %cst_299 : f32 to vector<8x32xf32>
      %530 = arith.select %528, %524, %529 : vector<8x32xi1>, vector<8x32xf32>
      %531 = arith.select %528, %524, %489 : vector<8x32xi1>, vector<8x32xf32>
      %c0_300 = arith.constant 0 : index
      %c0_301 = arith.constant 0 : index
      %532 = vector.load %arg10[%c0_300, %c0_301] : memref<8x32xf32, #tpu.memory_space<vmem>>, vector<8x32xf32>
      tpu.vector_store %arg10[%c0_300, %c0_301], %531 {strides = array<i32>} : memref<8x32xf32, #tpu.memory_space<vmem>>, vector<8x32xf32>,
      %533 = arith.select %528, %522, %490 : vector<8x32xi1>, vector<8x32xf32>
      %c0_302 = arith.constant 0 : index
      %c0_303 = arith.constant 0 : index
      %534 = vector.load %arg11[%c0_302, %c0_303] : memref<8x32xf32, #tpu.memory_space<vmem>>, vector<8x32xf32>
      tpu.vector_store %arg11[%c0_302, %c0_303], %533 {strides = array<i32>} : memref<8x32xf32, #tpu.memory_space<vmem>>, vector<8x32xf32>,
      %535 = vector.shape_cast %530 : vector<8x32xf32> to vector<8x1x32xf32>
      %c0_304 = arith.constant 0 : index
      %c0_305 = arith.constant 0 : index
      %c0_306 = arith.constant 0 : index
      %c0_307 = arith.constant 0 : index
      %536 = vector.load %arg7[%c0_304, %c0_305, %c0_306, %c0_307] : memref<1x8x8x32xf32, #tpu.memory_space<vmem>>, vector<1x8x1x32xf32>
      %537 = vector.shape_cast %536 : vector<1x8x1x32xf32> to vector<8x1x32xf32>
      %538 = vector.shape_cast %535 : vector<8x1x32xf32> to vector<1x8x1x32xf32>
      tpu.vector_store %arg7[%c0_304, %c0_305, %c0_306, %c0_307], %538 {strides = array<i32>} : memref<1x8x8x32xf32, #tpu.memory_space<vmem>>, vector<1x8x1x32xf32>,
      %c0_308 = arith.constant 0 : index
      %c0_309 = arith.constant 0 : index
      %c0_310 = arith.constant 0 : index
      %539 = vector.load %arg8[%c0_308, %c0_309, %c0_310] : memref<1x8x32xf32, #tpu.memory_space<vmem>>, vector<1x8x32xf32>
      %540 = vector.shape_cast %539 : vector<1x8x32xf32> to vector<8x32xf32>
      %541 = arith.addf %540, %530 : vector<8x32xf32>
      %c0_311 = arith.constant 0 : index
      %c0_312 = arith.constant 0 : index
      %c0_313 = arith.constant 0 : index
      %542 = vector.load %arg8[%c0_311, %c0_312, %c0_313] : memref<1x8x32xf32, #tpu.memory_space<vmem>>, vector<1x8x32xf32>
      %543 = vector.shape_cast %542 : vector<1x8x32xf32> to vector<8x32xf32>
      %544 = vector.shape_cast %541 : vector<8x32xf32> to vector<1x8x32xf32>
      tpu.vector_store %arg8[%c0_311, %c0_312, %c0_313], %544 {strides = array<i32>} : memref<1x8x32xf32, #tpu.memory_space<vmem>>, vector<1x8x32xf32>,
      %c0_314 = arith.constant 0 : index
      %c0_315 = arith.constant 0 : index
      %c0_316 = arith.constant 0 : index
      %545 = vector.load %arg9[%c0_314, %c0_315, %c0_316] : memref<1x8x32xf32, #tpu.memory_space<vmem>>, vector<1x8x32xf32>
      %546 = vector.shape_cast %545 : vector<1x8x32xf32> to vector<8x32xf32>
      %547 = arith.mulf %530, %530 : vector<8x32xf32>
      %548 = arith.addf %546, %547 : vector<8x32xf32>
      %c0_317 = arith.constant 0 : index
      %c0_318 = arith.constant 0 : index
      %c0_319 = arith.constant 0 : index
      %549 = vector.load %arg9[%c0_317, %c0_318, %c0_319] : memref<1x8x32xf32, #tpu.memory_space<vmem>>, vector<1x8x32xf32>
      %550 = vector.shape_cast %549 : vector<1x8x32xf32> to vector<8x32xf32>
      %551 = vector.shape_cast %548 : vector<8x32xf32> to vector<1x8x32xf32>
      tpu.vector_store %arg9[%c0_317, %c0_318, %c0_319], %551 {strides = array<i32>} : memref<1x8x32xf32, #tpu.memory_space<vmem>>, vector<1x8x32xf32>,
    } else {
    }
    return
  }
  func.func @transform_0(%arg0: i32, %arg1: i32) -> (i32, i32) {
    %c0_i32 = arith.constant 0 : i32
    %c0_i32_0 = arith.constant 0 : i32
    %c0_i32_1 = arith.constant 0 : i32
    return %c0_i32, %c0_i32_0 : i32, i32
  }
  func.func @transform_1(%arg0: i32, %arg1: i32) -> (i32, i32, i32) {
    %c1_i32 = arith.constant 1 : i32
    %0 = arith.subi %c1_i32, %arg0 : i32
    %1 = arith.muli %0, %arg1 : i32
    %c1_i32_0 = arith.constant 1 : i32
    %2 = arith.subi %c1_i32_0, %arg1 : i32
    %3 = arith.muli %arg0, %2 : i32
    %4 = arith.addi %1, %3 : i32
    %c0_i32 = arith.constant 0 : i32
    %c0_i32_1 = arith.constant 0 : i32
    %c0_i32_2 = arith.constant 0 : i32
    return %4, %c0_i32, %c0_i32_1 : i32, i32, i32
  }
  func.func @transform_2(%arg0: i32, %arg1: i32) -> (i32, i32, i32) {
    %c0_i32 = arith.constant 0 : i32
    %c0_i32_0 = arith.constant 0 : i32
    %c0_i32_1 = arith.constant 0 : i32
    return %arg0, %c0_i32, %c0_i32_0 : i32, i32, i32
  }
  func.func @transform_3(%arg0: i32, %arg1: i32) -> (i32, i32, i32) {
    %c0_i32 = arith.constant 0 : i32
    %c0_i32_0 = arith.constant 0 : i32
    %c0_i32_1 = arith.constant 0 : i32
    return %arg0, %c0_i32, %c0_i32_0 : i32, i32, i32
  }
  func.func @transform_4(%arg0: i32, %arg1: i32) -> (i32, i32, i32) {
    %c0_i32 = arith.constant 0 : i32
    %c0_i32_0 = arith.constant 0 : i32
    %c0_i32_1 = arith.constant 0 : i32
    return %arg0, %c0_i32, %c0_i32_0 : i32, i32, i32
  }
  func.func @transform_5(%arg0: i32, %arg1: i32) -> (i32, i32, i32, i32) {
    %c1_i32 = arith.constant 1 : i32
    %0 = arith.subi %c1_i32, %arg0 : i32
    %1 = arith.muli %0, %arg1 : i32
    %c1_i32_0 = arith.constant 1 : i32
    %2 = arith.subi %c1_i32_0, %arg1 : i32
    %3 = arith.muli %arg0, %2 : i32
    %4 = arith.addi %1, %3 : i32
    %c0_i32 = arith.constant 0 : i32
    %c0_i32_1 = arith.constant 0 : i32
    %c0_i32_2 = arith.constant 0 : i32
    return %arg0, %c0_i32, %4, %c0_i32_1 : i32, i32, i32, i32
  }
  func.func @transform_6(%arg0: i32, %arg1: i32) -> (i32, i32, i32) {
    %c0_i32 = arith.constant 0 : i32
    %c0_i32_0 = arith.constant 0 : i32
    %c0_i32_1 = arith.constant 0 : i32
    return %arg0, %c0_i32, %c0_i32_0 : i32, i32, i32
  }
  func.func @transform_7(%arg0: i32, %arg1: i32) -> (i32, i32, i32) {
    %c0_i32 = arith.constant 0 : i32
    %c0_i32_0 = arith.constant 0 : i32
    %c0_i32_1 = arith.constant 0 : i32
    return %arg0, %c0_i32, %c0_i32_0 : i32, i32, i32
  }
}

</mosaic_0001>

<llo_original>
// kernel: rnn_bn_act_forward.3
$region0: #{rnn_bn_act_forward.3}
  #allocation0 [shape = 'u32[]', space=smem, size = 0x4, offset = 0x4, fixed_abs, tag = 'smem constant byte address 0x4 - core index']
  #allocation1 [shape = 'u32[72,128]{1,0:T(1,128)}', space=vmem, size = 0x9000, scoped, tag = 'internal scratch']
  %s0 = inlined_call_operand.vmem [shape: f32[2,32], index: 0, kind: input, shape index: {}]
  %s1 = inlined_call_operand.vmem [shape: f32[2,32], index: 1, kind: input, shape index: {}]
  %s2 = inlined_call_operand.vmem [shape: f32[2,8,16,32], index: 2, kind: input, shape index: {}]
  %s3 = inlined_call_operand.vmem [shape: f32[8,16,64], index: 3, kind: output, shape index: {}]
  %s4 = sld [smem:[#allocation0]]
  $region22: #{rnn_bn_act_forward.3} parent=0
    _
  %s6 = ssub.s32 1, %s4
  %s7 = scalar_select 0, %s6, %s4
  // Predicated region
  $region2: #{rnn_bn_act_forward.3} parent=0 // pred_check
    _
  $region3: #{rnn_bn_act_forward.3} parent=0 // pred_check_branch
    %9 = sbr.rel (0) target = $region5
  $region4: #{rnn_bn_act_forward.3} parent=0 // pred_region
    _
  $region5: #{rnn_bn_act_forward.3} parent=0 // pred_fallthru
    _
  // Predicated region
  $region6: #{rnn_bn_act_forward.3} parent=0 // pred_check
    _
  $region7: #{rnn_bn_act_forward.3} parent=0 // pred_check_branch
    %11 = sbr.rel (0) target = $region9
  $region8: #{rnn_bn_act_forward.3} parent=0 // pred_region
    _
  $region9: #{rnn_bn_act_forward.3} parent=0 // pred_fallthru
    _
  // Predicated region
  $region10: #{rnn_bn_act_forward.3} parent=0 // pred_check
    _
  $region11: #{rnn_bn_act_forward.3} parent=0 // pred_check_branch
    %13 = sbr.rel (0) target = $region13
  $region12: #{rnn_bn_act_forward.3} parent=0 // pred_region
    _
  $region13: #{rnn_bn_act_forward.3} parent=0 // pred_fallthru
    _
  %v14 = vld [vmem:[%s0] sm:$0x1]
  %v15 = vld [vmem:[%s1] sm:$0x1]
  %v16 = vld [vmem:[%s0 + $0x1] sm:$0x1]
  %v17 = vld [vmem:[%s1 + $0x1] sm:$0x1]
  %v18 = vld [vmem:[%s2] sm:$0xff]
  %v19 = vld [vmem:[%s2 + $0x8] sm:$0xff]
  %v20 = vld [vmem:[%s2 + $0x10] sm:$0xff]
  %v21 = vld [vmem:[%s2 + $0x18] sm:$0xff]
  %v22 = vld [vmem:[%s2 + $0x20] sm:$0xff]
  %v23 = vld [vmem:[%s2 + $0x28] sm:$0xff]
  %v24 = vld [vmem:[%s2 + $0x30] sm:$0xff]
  %v25 = vld [vmem:[%s2 + $0x38] sm:$0xff]
  %v26 = vld [vmem:[%s2 + $0x40] sm:$0xff]
  %v27 = vld [vmem:[%s2 + $0x48] sm:$0xff]
  %v28 = vld [vmem:[%s2 + $0x50] sm:$0xff]
  %v29 = vld [vmem:[%s2 + $0x58] sm:$0xff]
  %v30 = vld [vmem:[%s2 + $0x60] sm:$0xff]
  %v31 = vld [vmem:[%s2 + $0x68] sm:$0xff]
  %v32 = vld [vmem:[%s2 + $0x70] sm:$0xff]
  %v33 = vld [vmem:[%s2 + $0x78] sm:$0xff]
  %v34 = vperm.slane %v14, 0
  %v35 = vmul.f32 %v18, %v34
  %v36 = vmul.f32 %v19, %v34
  %v37 = vmul.f32 %v20, %v34
  %v38 = vmul.f32 %v21, %v34
  %v39 = vmul.f32 %v22, %v34
  %v40 = vmul.f32 %v23, %v34
  %v41 = vmul.f32 %v24, %v34
  %v42 = vmul.f32 %v25, %v34
  %v43 = vmul.f32 %v26, %v34
  %v44 = vmul.f32 %v27, %v34
  %v45 = vmul.f32 %v28, %v34
  %v46 = vmul.f32 %v29, %v34
  %v47 = vmul.f32 %v30, %v34
  %v48 = vmul.f32 %v31, %v34
  %v49 = vmul.f32 %v32, %v34
  %v50 = vmul.f32 %v33, %v34
  %v51 = vperm.slane %v15, 0
  %v52 = vadd.f32 %v35, %v51
  %v53 = vadd.f32 %v36, %v51
  %v54 = vadd.f32 %v37, %v51
  %v55 = vadd.f32 %v38, %v51
  %v56 = vadd.f32 %v39, %v51
  %v57 = vadd.f32 %v40, %v51
  %v58 = vadd.f32 %v41, %v51
  %v59 = vadd.f32 %v42, %v51
  %v60 = vadd.f32 %v43, %v51
  %v61 = vadd.f32 %v44, %v51
  %v62 = vadd.f32 %v45, %v51
  %v63 = vadd.f32 %v46, %v51
  %v64 = vadd.f32 %v47, %v51
  %v65 = vadd.f32 %v48, %v51
  %v66 = vadd.f32 %v49, %v51
  %v67 = vadd.f32 %v50, %v51
  %vm68 = vcmask 261120
  %69 = vst.msk [vmem:[%s3] sm:$0xff] %vm68, %v52
  %70 = vst.msk [vmem:[%s3 + $0x8] sm:$0xff] %vm68, %v53
  %71 = vst.msk [vmem:[%s3 + $0x10] sm:$0xff] %vm68, %v54
  %72 = vst.msk [vmem:[%s3 + $0x18] sm:$0xff] %vm68, %v55
  %73 = vst.msk [vmem:[%s3 + $0x20] sm:$0xff] %vm68, %v56
  %74 = vst.msk [vmem:[%s3 + $0x28] sm:$0xff] %vm68, %v57
  %75 = vst.msk [vmem:[%s3 + $0x30] sm:$0xff] %vm68, %v58
  %76 = vst.msk [vmem:[%s3 + $0x38] sm:$0xff] %vm68, %v59
  %77 = vst.msk [vmem:[%s3 + $0x40] sm:$0xff] %vm68, %v60
  %78 = vst.msk [vmem:[%s3 + $0x48] sm:$0xff] %vm68, %v61
  %79 = vst.msk [vmem:[%s3 + $0x50] sm:$0xff] %vm68, %v62
  %80 = vst.msk [vmem:[%s3 + $0x58] sm:$0xff] %vm68, %v63
  %81 = vst.msk [vmem:[%s3 + $0x60] sm:$0xff] %vm68, %v64
  %82 = vst.msk [vmem:[%s3 + $0x68] sm:$0xff] %vm68, %v65
  %83 = vst.msk [vmem:[%s3 + $0x70] sm:$0xff] %vm68, %v66
  %84 = vst.msk [vmem:[%s3 + $0x78] sm:$0xff] %vm68, %v67
  %s85 = scalar_lea.vmem %s2, 128
  %v86 = vld [vmem:[%s85] sm:$0xff]
  %v87 = vld [vmem:[%s85 + $0x8] sm:$0xff]
  %v88 = vld [vmem:[%s85 + $0x10] sm:$0xff]
  %v89 = vld [vmem:[%s85 + $0x18] sm:$0xff]
  %v90 = vld [vmem:[%s85 + $0x20] sm:$0xff]
  %v91 = vld [vmem:[%s85 + $0x28] sm:$0xff]
  %v92 = vld [vmem:[%s85 + $0x30] sm:$0xff]
  %v93 = vld [vmem:[%s85 + $0x38] sm:$0xff]
  %v94 = vld [vmem:[%s85 + $0x40] sm:$0xff]
  %v95 = vld [vmem:[%s85 + $0x48] sm:$0xff]
  %v96 = vld [vmem:[%s85 + $0x50] sm:$0xff]
  %v97 = vld [vmem:[%s85 + $0x58] sm:$0xff]
  %v98 = vld [vmem:[%s85 + $0x60] sm:$0xff]
  %v99 = vld [vmem:[%s85 + $0x68] sm:$0xff]
  %v100 = vld [vmem:[%s85 + $0x70] sm:$0xff]
  %v101 = vld [vmem:[%s85 + $0x78] sm:$0xff]
  %v102 = vperm.slane %v16, 0
  %v103 = vmul.f32 %v86, %v102
  %v104 = vmul.f32 %v87, %v102
  %v105 = vmul.f32 %v88, %v102
  %v106 = vmul.f32 %v89, %v102
  %v107 = vmul.f32 %v90, %v102
  %v108 = vmul.f32 %v91, %v102
  %v109 = vmul.f32 %v92, %v102
  %v110 = vmul.f32 %v93, %v102
  %v111 = vmul.f32 %v94, %v102
  %v112 = vmul.f32 %v95, %v102
  %v113 = vmul.f32 %v96, %v102
  %v114 = vmul.f32 %v97, %v102
  %v115 = vmul.f32 %v98, %v102
  %v116 = vmul.f32 %v99, %v102
  %v117 = vmul.f32 %v100, %v102
  %v118 = vmul.f32 %v101, %v102
  %v119 = vperm.slane %v17, 0
  %v120 = vadd.f32 %v103, %v119
  %v121 = vadd.f32 %v104, %v119
  %v122 = vadd.f32 %v105, %v119
  %v123 = vadd.f32 %v106, %v119
  %v124 = vadd.f32 %v107, %v119
  %v125 = vadd.f32 %v108, %v119
  %v126 = vadd.f32 %v109, %v119
  %v127 = vadd.f32 %v110, %v119
  %v128 = vadd.f32 %v111, %v119
  %v129 = vadd.f32 %v112, %v119
  %v130 = vadd.f32 %v113, %v119
  %v131 = vadd.f32 %v114, %v119
  %v132 = vadd.f32 %v115, %v119
  %v133 = vadd.f32 %v116, %v119
  %v134 = vadd.f32 %v117, %v119
  %v135 = vadd.f32 %v118, %v119
  %152 = vrot.lane.b32.xlu0 %v120, 32
  %v153 = vpop.permute.xlu0 %152
  %154 = vrot.lane.b32.xlu0 %v121, 32
  %v155 = vpop.permute.xlu0 %154
  %156 = vrot.lane.b32.xlu0 %v122, 32
  %v157 = vpop.permute.xlu0 %156
  %158 = vrot.lane.b32.xlu0 %v123, 32
  %v159 = vpop.permute.xlu0 %158
  %160 = vrot.lane.b32.xlu0 %v124, 32
  %v161 = vpop.permute.xlu0 %160
  %162 = vrot.lane.b32.xlu0 %v125, 32
  %v163 = vpop.permute.xlu0 %162
  %164 = vrot.lane.b32.xlu0 %v126, 32
  %v165 = vpop.permute.xlu0 %164
  %166 = vrot.lane.b32.xlu0 %v127, 32
  %v167 = vpop.permute.xlu0 %166
  %168 = vrot.lane.b32.xlu0 %v128, 32
  %v169 = vpop.permute.xlu0 %168
  %170 = vrot.lane.b32.xlu0 %v129, 32
  %v171 = vpop.permute.xlu0 %170
  %172 = vrot.lane.b32.xlu0 %v130, 32
  %v173 = vpop.permute.xlu0 %172
  %174 = vrot.lane.b32.xlu0 %v131, 32
  %v175 = vpop.permute.xlu0 %174
  %176 = vrot.lane.b32.xlu0 %v132, 32
  %v177 = vpop.permute.xlu0 %176
  %178 = vrot.lane.b32.xlu0 %v133, 32
  %v179 = vpop.permute.xlu0 %178
  %180 = vrot.lane.b32.xlu0 %v134, 32
  %v181 = vpop.permute.xlu0 %180
  %182 = vrot.lane.b32.xlu0 %v135, 32
  %v183 = vpop.permute.xlu0 %182
  %vm200 = vcmask 523520
  %201 = vst.msk [vmem:[%s3] sm:$0xff] %vm200, %v153
  %202 = vst.msk [vmem:[%s3 + $0x8] sm:$0xff] %vm200, %v155
  %203 = vst.msk [vmem:[%s3 + $0x10] sm:$0xff] %vm200, %v157
  %204 = vst.msk [vmem:[%s3 + $0x18] sm:$0xff] %vm200, %v159
  %205 = vst.msk [vmem:[%s3 + $0x20] sm:$0xff] %vm200, %v161
  %206 = vst.msk [vmem:[%s3 + $0x28] sm:$0xff] %vm200, %v163
  %207 = vst.msk [vmem:[%s3 + $0x30] sm:$0xff] %vm200, %v165
  %208 = vst.msk [vmem:[%s3 + $0x38] sm:$0xff] %vm200, %v167
  %209 = vst.msk [vmem:[%s3 + $0x40] sm:$0xff] %vm200, %v169
  %210 = vst.msk [vmem:[%s3 + $0x48] sm:$0xff] %vm200, %v171
  %211 = vst.msk [vmem:[%s3 + $0x50] sm:$0xff] %vm200, %v173
  %212 = vst.msk [vmem:[%s3 + $0x58] sm:$0xff] %vm200, %v175
  %213 = vst.msk [vmem:[%s3 + $0x60] sm:$0xff] %vm200, %v177
  %214 = vst.msk [vmem:[%s3 + $0x68] sm:$0xff] %vm200, %v179
  %215 = vst.msk [vmem:[%s3 + $0x70] sm:$0xff] %vm200, %v181
  %216 = vst.msk [vmem:[%s3 + $0x78] sm:$0xff] %vm200, %v183
  // Predicated region
  $region14: #{rnn_bn_act_forward.3} parent=0 // pred_check
    _
  $region15: #{rnn_bn_act_forward.3} parent=0 // pred_check_branch
    %218 = sbr.rel (0) target = $region17
  $region16: #{rnn_bn_act_forward.3} parent=0 // pred_region
    _
  $region17: #{rnn_bn_act_forward.3} parent=0 // pred_fallthru
    _
  // Predicated region
  $region18: #{rnn_bn_act_forward.3} parent=0 // pred_check
    _
  $region19: #{rnn_bn_act_forward.3} parent=0 // pred_check_branch
    %220 = sbr.rel (0) target = $region21
  $region20: #{rnn_bn_act_forward.3} parent=0 // pred_region
    _
  $region21: #{rnn_bn_act_forward.3} parent=0 // pred_fallthru
    _

// kernel: rnn_bn_act_forward.2
$region0: #{rnn_bn_act_forward.2}
  #allocation0 [shape = 'u32[]', space=smem, size = 0x4, offset = 0x4, fixed_abs, tag = 'smem constant byte address 0x4 - core index']
  #allocation1 [shape = 'u32[72,128]{1,0:T(1,128)}', space=vmem, size = 0x9000, scoped, tag = 'internal scratch']
  #allocation2 [shape = 'f32[8,32]{1,0:T(8,128)}', space=vmem, size = 0x1000, scoped, tag = 'scratch operand']
  #allocation3 [shape = 'f32[8,32]{1,0:T(8,128)}', space=vmem, size = 0x1000, scoped, tag = 'scratch operand']
  #allocation4 [shape = 'f32[64,128]{1,0:T(8,128)}', space=vmem, size = 0x8000, scoped, tag = 'scratch operand']
  %s0 = inlined_call_operand.vmem [shape: s32[8,1], index: 0, kind: input, shape index: {}]
  %s1 = inlined_call_operand.vmem [shape: f32[16,8,16], index: 1, kind: input, shape index: {}]
  %s2 = inlined_call_operand.vmem [shape: f32[2,16,128], index: 2, kind: input, shape index: {}]
  %s3 = inlined_call_operand.vmem [shape: f32[2,32,128], index: 3, kind: input, shape index: {}]
  %s4 = inlined_call_operand.vmem [shape: f32[2,1,128], index: 4, kind: input, shape index: {}]
  %s5 = inlined_call_operand.vmem [shape: f32[2,8,16,32], index: 5, kind: output, shape index: {0}]
  %s6 = inlined_call_operand.vmem [shape: f32[2,8,32], index: 6, kind: output, shape index: {1}]
  %s7 = inlined_call_operand.vmem [shape: f32[2,8,32], index: 7, kind: output, shape index: {2}]
  %8 = xla_tuple %s5, %s6, %s7
  %s9 = sld [smem:[#allocation0]]
  $region115: #{rnn_bn_act_forward.2} parent=0
    _
  %s11 = ssub.s32 1, %s9
  %s12 = scalar_select 0, %s11, %s9
  $region1: #{rnn_bn_act_forward.2} parent=0
    #allocation5 [shape = 'u8[65536]{0}', space=vmem, size = 0x10000, scoped, tag = 'output window, operand 0']
    loop: start=0, step=1, limit=6
    $region2: #{rnn_bn_act_forward.2} parent=1 // loop_pre_header
      _
    $region3: #{rnn_bn_act_forward.2} parent=1 // loop_header
      %s14 = sphi 0, %s18
      %p15 = scmp.ge.s32.totalorder %s14, 6
      %s21 = sphi 0, %s33
      %s22 = sphi 0, %s29
      %s23 = sphi 0, %s21
      %s24 = sphi 0, %s22
      %s25 = sphi 0, %s23
      %s26 = sphi 0, %s24
      %s34 = sphi 0, %s34
      %s36 = sphi 0, %s34
      %s37 = sphi 0, %s36
      %s51 = sphi 0, %s37
      %s67 = sphi 0, %s69
      %s70 = sphi 0, %s67
      %s71 = sphi 0, %s70
      %s87 = sphi 0, %s71
      %s93 = sphi 0, %s95
      %s96 = sphi 0, %s93
      %s97 = sphi 0, %s96
      %s113 = sphi 0, %s97
      %s119 = sphi 0, %s121
      %s122 = sphi 0, %s119
      %s123 = sphi 0, %s122
      %s139 = sphi 0, %s123
      %s145 = sphi 0, %s147
      %s148 = sphi 0, %s145
      %s149 = sphi 0, %s148
      %s165 = sphi 0, %s149
      %s183 = sphi 0, %s185
      %s186 = sphi 0, %s183
      %s187 = sphi 0, %s186
      %s203 = sphi 0, %s187
      %s209 = sphi 0, %s211
      %s212 = sphi 0, %s209
      %s213 = sphi 0, %s212
      %s229 = sphi 0, %s213
      %s235 = sphi 0, %s237
      %s238 = sphi 0, %s235
      %s239 = sphi 0, %s238
      %s255 = sphi 0, %s239
    $region4: #{rnn_bn_act_forward.2} parent=1 // loop_header_branch
      %17 = sbr.rel (%p15) target = $region8
    $region5: #{rnn_bn_act_forward.2} parent=1 // loop_body
      %s19 = ssub.s32 %s14, 1
      %s20 = ssub.s32 %s14, 2
      %s27 = sadd.s32 1, %s22
      %p28 = scmp.ge.s32.totalorder %s27, 2
      %s29 = scalar_select %p28, 0, %s27
      %s30 = sadd.s32 1, %s21
      %s31 = scalar_select %p28, %s30, %s21
      %p32 = scmp.ge.s32.totalorder %s31, 2
      %s33 = scalar_select %p32, 0, %s31
      %s35 = sadd.s32 %s34, 1
      %p38 = scmp.eq.s32.totalorder %s14, 3
      %p39 = scmp.ne.s32.totalorder %s34, %s36
      %p40 = scmp.eq.s32.totalorder %s14, 0
      %p41 = por %p39, %p40
      %p42 = scmp.ne.s32.totalorder %s34, %s36
      %p43 = scmp.eq.s32.totalorder %s19, 3
      %p44 = por %p42, %p43
      %p45 = scmp.ne.s32.totalorder %s36, %s37
      %p46 = scmp.eq.s32.totalorder %s19, 0
      %p47 = por %p45, %p46
      %p48 = scmp.ne.s32.totalorder %s36, %s37
      %p49 = scmp.eq.s32.totalorder %s20, 3
      %p50 = por %p48, %p49
      %p52 = scmp.ne.s32.totalorder %s37, %s51
      %p53 = scmp.eq.s32.totalorder %s20, 0
      %p54 = por %p52, %p53
      %s55 = ssub.s32 1, %s21
      %s56 = smul.u32 %s55, %s22
      %s57 = ssub.s32 1, %s22
      %s58 = smul.u32 %s21, %s57
      %s59 = sadd.s32 %s56, %s58
      %s60 = ssub.s32 1, %s33
      %s61 = smul.u32 %s60, %s29
      %s62 = ssub.s32 1, %s29
      %s63 = smul.u32 %s33, %s62
      %s64 = sadd.s32 %s61, %s63
      %s65 = ssub.s32 %s59, %s64
      %p66 = scmp.eq.s32.totalorder %s65, 0
      %s68 = sadd.s32 %s67, 1
      %s69 = scalar_select %p66, %s67, %s68
      %p72 = pneg %p66
      %p73 = scmp.eq.s32.totalorder %s14, 3
      %p74 = por %p72, %p73
      %p75 = scmp.ne.s32.totalorder %s67, %s70
      %p76 = scmp.eq.s32.totalorder %s14, 0
      %p77 = por %p75, %p76
      %p78 = scmp.ne.s32.totalorder %s67, %s70
      %p79 = scmp.eq.s32.totalorder %s19, 3
      %p80 = por %p78, %p79
      %p81 = scmp.ne.s32.totalorder %s70, %s71
      %p82 = scmp.eq.s32.totalorder %s19, 0
      %p83 = por %p81, %p82
      %p84 = scmp.ne.s32.totalorder %s70, %s71
      %p85 = scmp.eq.s32.totalorder %s20, 3
      %p86 = por %p84, %p85
      %p88 = scmp.ne.s32.totalorder %s71, %s87
      %p89 = scmp.eq.s32.totalorder %s20, 0
      %p90 = por %p88, %p89
      %s91 = ssub.s32 %s21, %s33
      %p92 = scmp.eq.s32.totalorder %s91, 0
      %s94 = sadd.s32 %s93, 1
      %s95 = scalar_select %p92, %s93, %s94
      %p98 = pneg %p92
      %p99 = scmp.eq.s32.totalorder %s14, 3
      %p100 = por %p98, %p99
      %p101 = scmp.ne.s32.totalorder %s93, %s96
      %p102 = scmp.eq.s32.totalorder %s14, 0
      %p103 = por %p101, %p102
      %p104 = scmp.ne.s32.totalorder %s93, %s96
      %p105 = scmp.eq.s32.totalorder %s19, 3
      %p106 = por %p104, %p105
      %p107 = scmp.ne.s32.totalorder %s96, %s97
      %p108 = scmp.eq.s32.totalorder %s19, 0
      %p109 = por %p107, %p108
      %p110 = scmp.ne.s32.totalorder %s96, %s97
      %p111 = scmp.eq.s32.totalorder %s20, 3
      %p112 = por %p110, %p111
      %p114 = scmp.ne.s32.totalorder %s97, %s113
      %p115 = scmp.eq.s32.totalorder %s20, 0
      %p116 = por %p114, %p115
      %s117 = ssub.s32 %s21, %s33
      %p118 = scmp.eq.s32.totalorder %s117, 0
      %s120 = sadd.s32 %s119, 1
      %s121 = scalar_select %p118, %s119, %s120
      %p124 = pneg %p118
      %p125 = scmp.eq.s32.totalorder %s14, 3
      %p126 = por %p124, %p125
      %p127 = scmp.ne.s32.totalorder %s119, %s122
      %p128 = scmp.eq.s32.totalorder %s14, 0
      %p129 = por %p127, %p128
      %p130 = scmp.ne.s32.totalorder %s119, %s122
      %p131 = scmp.eq.s32.totalorder %s19, 3
      %p132 = por %p130, %p131
      %p133 = scmp.ne.s32.totalorder %s122, %s123
      %p134 = scmp.eq.s32.totalorder %s19, 0
      %p135 = por %p133, %p134
      %p136 = scmp.ne.s32.totalorder %s122, %s123
      %p137 = scmp.eq.s32.totalorder %s20, 3
      %p138 = por %p136, %p137
      %p140 = scmp.ne.s32.totalorder %s123, %s139
      %p141 = scmp.eq.s32.totalorder %s20, 0
      %p142 = por %p140, %p141
      %s143 = ssub.s32 %s21, %s33
      %p144 = scmp.eq.s32.totalorder %s143, 0
      %s146 = sadd.s32 %s145, 1
      %s147 = scalar_select %p144, %s145, %s146
      %p150 = pneg %p144
      %p151 = scmp.eq.s32.totalorder %s14, 3
      %p152 = por %p150, %p151
      %p153 = scmp.ne.s32.totalorder %s145, %s148
      %p154 = scmp.eq.s32.totalorder %s14, 0
      %p155 = por %p153, %p154
      %p156 = scmp.ne.s32.totalorder %s145, %s148
      %p157 = scmp.eq.s32.totalorder %s19, 3
      %p158 = por %p156, %p157
      %p159 = scmp.ne.s32.totalorder %s148, %s149
      %p160 = scmp.eq.s32.totalorder %s19, 0
      %p161 = por %p159, %p160
      %p162 = scmp.ne.s32.totalorder %s148, %s149
      %p163 = scmp.eq.s32.totalorder %s20, 3
      %p164 = por %p162, %p163
      %p166 = scmp.ne.s32.totalorder %s149, %s165
      %p167 = scmp.eq.s32.totalorder %s20, 0
      %p168 = por %p166, %p167
      %s169 = ssub.s32 1, %s21
      %s170 = smul.u32 %s169, %s22
      %s171 = ssub.s32 1, %s22
      %s172 = smul.u32 %s21, %s171
      %s173 = sadd.s32 %s170, %s172
      %s174 = ssub.s32 1, %s33
      %s175 = smul.u32 %s174, %s29
      %s176 = ssub.s32 1, %s29
      %s177 = smul.u32 %s33, %s176
      %s178 = sadd.s32 %s175, %s177
      %s179 = ssub.s32 %s21, %s33
      %s180 = ssub.s32 %s173, %s178
      %s181 = sor.u32 %s179, %s180
      %p182 = scmp.eq.s32.totalorder %s181, 0
      %s184 = sadd.s32 %s183, 1
      %s185 = scalar_select %p182, %s183, %s184
      %p188 = pneg %p182
      %p189 = scmp.eq.s32.totalorder %s14, 3
      %p190 = por %p188, %p189
      %p191 = scmp.ne.s32.totalorder %s183, %s186
      %p192 = scmp.eq.s32.totalorder %s14, 0
      %p193 = por %p191, %p192
      %p194 = scmp.ne.s32.totalorder %s183, %s186
      %p195 = scmp.eq.s32.totalorder %s19, 3
      %p196 = por %p194, %p195
      %p197 = scmp.ne.s32.totalorder %s186, %s187
      %p198 = scmp.eq.s32.totalorder %s19, 0
      %p199 = por %p197, %p198
      %p200 = scmp.ne.s32.totalorder %s186, %s187
      %p201 = scmp.eq.s32.totalorder %s20, 3
      %p202 = por %p200, %p201
      %p204 = scmp.ne.s32.totalorder %s187, %s203
      %p205 = scmp.eq.s32.totalorder %s20, 0
      %p206 = por %p204, %p205
      %s207 = ssub.s32 %s21, %s33
      %p208 = scmp.eq.s32.totalorder %s207, 0
      %s210 = sadd.s32 %s209, 1
      %s211 = scalar_select %p208, %s209, %s210
      %p214 = pneg %p208
      %p215 = scmp.eq.s32.totalorder %s14, 3
      %p216 = por %p214, %p215
      %p217 = scmp.ne.s32.totalorder %s209, %s212
      %p218 = scmp.eq.s32.totalorder %s14, 0
      %p219 = por %p217, %p218
      %p220 = scmp.ne.s32.totalorder %s209, %s212
      %p221 = scmp.eq.s32.totalorder %s19, 3
      %p222 = por %p220, %p221
      %p223 = scmp.ne.s32.totalorder %s212, %s213
      %p224 = scmp.eq.s32.totalorder %s19, 0
      %p225 = por %p223, %p224
      %p226 = scmp.ne.s32.totalorder %s212, %s213
      %p227 = scmp.eq.s32.totalorder %s20, 3
      %p228 = por %p226, %p227
      %p230 = scmp.ne.s32.totalorder %s213, %s229
      %p231 = scmp.eq.s32.totalorder %s20, 0
      %p232 = por %p230, %p231
      %s233 = ssub.s32 %s21, %s33
      %p234 = scmp.eq.s32.totalorder %s233, 0
      %s236 = sadd.s32 %s235, 1
      %s237 = scalar_select %p234, %s235, %s236
      %p240 = pneg %p234
      %p241 = scmp.eq.s32.totalorder %s14, 3
      %p242 = por %p240, %p241
      %p243 = scmp.ne.s32.totalorder %s235, %s238
      %p244 = scmp.eq.s32.totalorder %s14, 0
      %p245 = por %p243, %p244
      %p246 = scmp.ne.s32.totalorder %s235, %s238
      %p247 = scmp.eq.s32.totalorder %s19, 3
      %p248 = por %p246, %p247
      %p249 = scmp.ne.s32.totalorder %s238, %s239
      %p250 = scmp.eq.s32.totalorder %s19, 0
      %p251 = por %p249, %p250
      %p252 = scmp.ne.s32.totalorder %s238, %s239
      %p253 = scmp.eq.s32.totalorder %s20, 3
      %p254 = por %p252, %p253
      %p256 = scmp.ne.s32.totalorder %s239, %s255
      %p257 = scmp.eq.s32.totalorder %s20, 0
      %p258 = por %p256, %p257
      %p259 = scmp.le.s32.totalorder 1, %s14
      %p260 = scmp.lt.s32.totalorder %s14, 5
      %p261 = pnand %p259, %p260
      %p262 = pneg %p261
      // Predicated region
      $region9: #{rnn_bn_act_forward.2} parent=5 // pred_check
        _
      $region10: #{rnn_bn_act_forward.2} parent=5 // pred_check_branch
        %264 = sbr.rel (%p261) target = $region12
      $region11: #{rnn_bn_act_forward.2} parent=5 // pred_region
        %s265 = ssub.s32 %s14, 1
        // Predicated region
        $region13: #{rnn_bn_act_forward.2} parent=11 // pred_check
          %p266 = pneg %p47
        $region14: #{rnn_bn_act_forward.2} parent=11 // pred_check_branch
          %268 = sbr.rel (%p266) target = $region16
        $region15: #{rnn_bn_act_forward.2} parent=11 // pred_region
          _
        $region16: #{rnn_bn_act_forward.2} parent=11 // pred_fallthru
          _
      $region12: #{rnn_bn_act_forward.2} parent=5 // pred_fallthru
        _
      %p269 = scmp.lt.s32.totalorder %s14, 4
      // Predicated region
      $region17: #{rnn_bn_act_forward.2} parent=5 // pred_check
        %p270 = pneg %p269
      $region18: #{rnn_bn_act_forward.2} parent=5 // pred_check_branch
        %272 = sbr.rel (%p270) target = $region20
      $region19: #{rnn_bn_act_forward.2} parent=5 // pred_region
        // Predicated region
        $region21: #{rnn_bn_act_forward.2} parent=19 // pred_check
          %p273 = pneg %p77
        $region22: #{rnn_bn_act_forward.2} parent=19 // pred_check_branch
          %275 = sbr.rel (%p273) target = $region24
        $region23: #{rnn_bn_act_forward.2} parent=19 // pred_region
          %s276 = ssub.s32 1, %s21
          %s277 = smul.u32 %s276, %s22
          %s278 = ssub.s32 1, %s22
          %s279 = smul.u32 %s21, %s278
          %s280 = sadd.s32 %s277, %s279
          %s281 = smul.u32 8, %s280
          %p282 = scmp.lt.s32.totalorder %s281, 15
          %s283 = scalar_select %p282, %s281, 15
          %s284 = smul.addr %s283, 8
          %s285 = scalar_lea.vmem %s1, %s284
          %s286 = ssub.s32 1, %s21
          %s287 = smul.u32 %s286, %s22
          %s288 = ssub.s32 1, %s22
          %s289 = smul.u32 %s21, %s288
          %s290 = sadd.s32 %s287, %s289
          %s291 = smul.u32 8, %s290
        $region24: #{rnn_bn_act_forward.2} parent=19 // pred_fallthru
          _
        // Predicated region
        $region25: #{rnn_bn_act_forward.2} parent=19 // pred_check
          %p292 = pneg %p103
        $region26: #{rnn_bn_act_forward.2} parent=19 // pred_check_branch
          %294 = sbr.rel (%p292) target = $region28
        $region27: #{rnn_bn_act_forward.2} parent=19 // pred_region
          %p295 = scmp.lt.s32.totalorder %s21, 1
          %s296 = scalar_select %p295, %s21, 1
          %s297 = smul.addr %s296, 2
          %s298 = smul.addr %s297, 8
          %s299 = scalar_lea.vmem %s2, %s298
        $region28: #{rnn_bn_act_forward.2} parent=19 // pred_fallthru
          _
        // Predicated region
        $region29: #{rnn_bn_act_forward.2} parent=19 // pred_check
          %p300 = pneg %p129
        $region30: #{rnn_bn_act_forward.2} parent=19 // pred_check_branch
          %302 = sbr.rel (%p300) target = $region32
        $region31: #{rnn_bn_act_forward.2} parent=19 // pred_region
          %p303 = scmp.lt.s32.totalorder %s21, 1
          %s304 = scalar_select %p303, %s21, 1
          %s305 = smul.addr %s304, 4
          %s306 = smul.addr %s305, 8
          %s307 = scalar_lea.vmem %s3, %s306
        $region32: #{rnn_bn_act_forward.2} parent=19 // pred_fallthru
          _
        // Predicated region
        $region33: #{rnn_bn_act_forward.2} parent=19 // pred_check
          %p308 = pneg %p155
        $region34: #{rnn_bn_act_forward.2} parent=19 // pred_check_branch
          %310 = sbr.rel (%p308) target = $region36
        $region35: #{rnn_bn_act_forward.2} parent=19 // pred_region
          %p311 = scmp.lt.s32.totalorder %s21, 1
          %s312 = scalar_select %p311, %s21, 1
          %s313 = scalar_lea.vmem %s4, %s312
        $region36: #{rnn_bn_act_forward.2} parent=19 // pred_fallthru
          _
      $region20: #{rnn_bn_act_forward.2} parent=5 // pred_fallthru
        _
      %p314 = scmp.le.s32.totalorder 1, %s14
      %p315 = scmp.lt.s32.totalorder %s14, 5
      %p316 = pnand %p314, %p315
      %p317 = pneg %p316
      // Predicated region
      $region37: #{rnn_bn_act_forward.2} parent=5 // pred_check
        _
      $region38: #{rnn_bn_act_forward.2} parent=5 // pred_check_branch
        %319 = sbr.rel (%p316) target = $region40
      $region39: #{rnn_bn_act_forward.2} parent=5 // pred_region
        %s320 = ssub.s32 %s14, 1
        %p321 = pneg %p47
        %p322 = pneg %p44
        %s323 = ssub.s32 1, %s23
        %s324 = smul.u32 %s323, %s24
        %s325 = ssub.s32 1, %s24
        %s326 = smul.u32 %s23, %s325
        %s327 = sadd.s32 %s324, %s326
        %s328 = smul.u32 8, %s327
        %p329 = scmp.lt.s32.totalorder %s328, 15
        %s330 = scalar_select %p329, %s328, 15
        %s331 = smul.addr %s330, 8
        %s332 = scalar_lea.vmem %s1, %s331
        %p333 = pneg %p83
        %p334 = pneg %p80
        %p335 = scmp.lt.s32.totalorder %s23, 1
        %s336 = scalar_select %p335, %s23, 1
        %s337 = smul.addr %s336, 2
        %s338 = smul.addr %s337, 8
        %s339 = scalar_lea.vmem %s2, %s338
        %p340 = pneg %p109
        %p341 = pneg %p106
        %p342 = scmp.lt.s32.totalorder %s23, 1
        %s343 = scalar_select %p342, %s23, 1
        %s344 = smul.addr %s343, 4
        %s345 = smul.addr %s344, 8
        %s346 = scalar_lea.vmem %s3, %s345
        %p347 = pneg %p135
        %p348 = pneg %p132
        %p349 = scmp.lt.s32.totalorder %s23, 1
        %s350 = scalar_select %p349, %s23, 1
        %s351 = scalar_lea.vmem %s4, %s350
        %p352 = pneg %p161
        %p353 = pneg %p158
        %p354 = pneg %p199
        %p355 = pneg %p196
        %s356 = sand.u32 %s186, 1
        %s357 = sand.u32 %s186, 1
        %s358 = smul.addr %s357, 64
        %s359 = scalar_lea.vmem [#allocation5], %s358
        %p360 = pneg %p225
        %p361 = pneg %p222
        %p362 = scmp.lt.s32.totalorder %s23, 1
        %s363 = scalar_select %p362, %s23, 1
        %s364 = smul.addr %s363, 8
        %s365 = scalar_lea.vmem %s6, %s364
        %p366 = pneg %p251
        %p367 = pneg %p248
        %p368 = scmp.lt.s32.totalorder %s23, 1
        %s369 = scalar_select %p368, %s23, 1
        %s370 = smul.addr %s369, 8
        %s371 = scalar_lea.vmem %s7, %s370
        %s372 = ssub.s32 1, %s23
        %s373 = smul.u32 %s372, %s24
        %s374 = ssub.s32 1, %s24
        %s375 = smul.u32 %s23, %s374
        %s376 = sadd.s32 %s373, %s375
        %s377 = smul.u32 8, %s376
        %p378 = scmp.lt.s32.totalorder %s377, 15
        %s379 = scalar_select %p378, %s377, 15
        %s380 = smul.addr %s379, 8
        %s381 = scalar_lea.vmem %s1, %s380
        %s382 = ssub.s32 1, %s23
        %s383 = smul.u32 %s382, %s24
        %s384 = ssub.s32 1, %s24
        %s385 = smul.u32 %s23, %s384
        %s386 = sadd.s32 %s383, %s385
        %s387 = smul.u32 8, %s386
        %p388 = scmp.lt.s32.totalorder %s23, 1
        %s389 = scalar_select %p388, %s23, 1
        %s390 = smul.addr %s389, 2
        %s391 = smul.addr %s390, 8
        %s392 = scalar_lea.vmem %s2, %s391
        %p393 = scmp.lt.s32.totalorder %s23, 1
        %s394 = scalar_select %p393, %s23, 1
        %s395 = smul.addr %s394, 4
        %s396 = smul.addr %s395, 8
        %s397 = scalar_lea.vmem %s3, %s396
        %p398 = scmp.lt.s32.totalorder %s23, 1
        %s399 = scalar_select %p398, %s23, 1
        %s400 = scalar_lea.vmem %s4, %s399
        %s401 = ssub.s32 1, %s23
        %s402 = smul.u32 %s401, %s24
        %s403 = ssub.s32 1, %s24
        %s404 = smul.u32 %s23, %s403
        %s405 = sadd.s32 %s402, %s404
        %p406 = scmp.lt.s32.totalorder %s23, 1
        %s407 = scalar_select %p406, %s23, 1
        %s408 = smul.addr %s407, 8
        %s409 = scalar_lea.vmem %s6, %s408
        %p410 = scmp.lt.s32.totalorder %s23, 1
        %s411 = scalar_select %p410, %s23, 1
        %s412 = smul.addr %s411, 8
        %s413 = scalar_lea.vmem %s7, %s412
        %p414 = scmp.eq.s32.totalorder %s24, 0
        // Predicated region
        $region41: #{rnn_bn_act_forward.2} parent=39 // pred_check
          %p415 = pneg %p414
        $region42: #{rnn_bn_act_forward.2} parent=39 // pred_check_branch
          %417 = sbr.rel (%p415) target = $region44
        $region43: #{rnn_bn_act_forward.2} parent=39 // pred_region
          %vm418 = vcmask 261120
          %419 = vst.msk [vmem:[#allocation2] sm:$0xff] %vm418, 0.0
          %420 = vst.msk [vmem:[#allocation3] sm:$0xff] %vm418, 0.0
          %421 = vst.msk [vmem:[%s409] sm:$0xff] %vm418, 0.0
          %422 = vst.msk [vmem:[%s413] sm:$0xff] %vm418, 0.0
        $region44: #{rnn_bn_act_forward.2} parent=39 // pred_fallthru
          _
        %v423 = vld [vmem:[%s0] sm:$0xff]
        %v424 = vld [vmem:[%s397] sm:$0xff]
        %v425 = vld [vmem:[%s397 + $0x8] sm:$0xff]
        %v426 = vld [vmem:[%s397 + $0x10] sm:$0xff]
        %v427 = vld [vmem:[%s397 + $0x18] sm:$0xff]
        %v428 = vld [vmem:[%s381] sm:$0xff]
        %v429 = vld [vmem:[%s381 + $0x8] sm:$0xff]
        %v430 = vld [vmem:[%s381 + $0x10] sm:$0xff]
        %v431 = vld [vmem:[%s381 + $0x18] sm:$0xff]
        %v432 = vld [vmem:[%s381 + $0x20] sm:$0xff]
        %v433 = vld [vmem:[%s381 + $0x28] sm:$0xff]
        %v434 = vld [vmem:[%s381 + $0x30] sm:$0xff]
        %v435 = vld [vmem:[%s381 + $0x38] sm:$0xff]
        %v436 = vld [vmem:[%s392] sm:$0xff]
        %v437 = vld [vmem:[%s392 + $0x8] sm:$0xff]
        %v438 = vld [vmem:[%s400] sm:$0x1]
        %v440 = vperm.slane %v438, 0
        %vm442 = vcmask 130048
        %v444 = vsel %vm442, %v428, 0
        %v447 = vsel %vm442, %v429, 0
        %v450 = vsel %vm442, %v430, 0
        %v453 = vsel %vm442, %v431, 0
        %v456 = vsel %vm442, %v432, 0
        %v459 = vsel %vm442, %v433, 0
        %v462 = vsel %vm442, %v434, 0
        %v465 = vsel %vm442, %v435, 0
        %467 = vmatpush.msra.mxu0 0.0
        %468 = vmatpush.msra.mxu0 0.0
        %469 = vmatpush.msra.mxu0 0.0
        %470 = vmatpush.msra.mxu0 0.0
        %471 = vmatpush.msra.mxu0 0.0
        %472 = vmatpush.msra.mxu0 0.0
        %473 = vmatpush.msra.mxu0 0.0
        %474 = vmatpush.msra.mxu0 0.0
        %475 = vmatpush.msra.mxu0 0.0
        %476 = vmatpush.msra.mxu0 0.0
        %477 = vmatpush.msra.mxu0 0.0
        %478 = vmatpush.msra.mxu0 0.0
        %479 = vmatpush.msra.mxu0 0.0
        %480 = vmatpush.msra.mxu0 0.0
        %481 = vmatpush.msra.mxu0 %v437
        %482 = vmatpush.msra.mxu0 %v436
        %483 = vmatmul.f32.gmra.mxu0 %v444
        %v484 = vpop.f32.mrf.mxu0
        %v485 = vadd.f32 %v440, %v484
        %486 = vmatmul.f32.gmra.mxu0 %v447
        %v487 = vpop.f32.mrf.mxu0
        %v488 = vadd.f32 %v440, %v487
        %489 = vmatmul.f32.gmra.mxu0 %v450
        %v490 = vpop.f32.mrf.mxu0
        %v491 = vadd.f32 %v440, %v490
        %492 = vmatmul.f32.gmra.mxu0 %v453
        %v493 = vpop.f32.mrf.mxu0
        %v494 = vadd.f32 %v440, %v493
        %495 = vmatmul.f32.gmra.mxu0 %v456
        %v496 = vpop.f32.mrf.mxu0
        %v497 = vadd.f32 %v440, %v496
        %498 = vmatmul.f32.gmra.mxu0 %v459
        %v499 = vpop.f32.mrf.mxu0
        %v500 = vadd.f32 %v440, %v499
        %501 = vmatmul.f32.gmra.mxu0 %v462
        %v502 = vpop.f32.mrf.mxu0
        %v503 = vadd.f32 %v440, %v502
        %504 = vmatmul.f32.gmra.mxu0 %v465
        %v505 = vpop.f32.mrf.mxu0
        %v506 = vadd.f32 %v440, %v505
        %507 = vdwg.mxu0
        %508 = vst [vmem:[#allocation4] sm:$0xff] %v485
        %509 = vst [vmem:[#allocation4 + $0x8] sm:$0xff] %v488
        %510 = vst [vmem:[#allocation4 + $0x10] sm:$0xff] %v491
        %511 = vst [vmem:[#allocation4 + $0x18] sm:$0xff] %v494
        %512 = vst [vmem:[#allocation4 + $0x20] sm:$0xff] %v497
        %513 = vst [vmem:[#allocation4 + $0x28] sm:$0xff] %v500
        %514 = vst [vmem:[#allocation4 + $0x30] sm:$0xff] %v503
        %515 = vst [vmem:[#allocation4 + $0x38] sm:$0xff] %v506
        %p516 = scmp.eq.s32.totalorder %s23, 0
        // Predicated region
        $region45: #{rnn_bn_act_forward.2} parent=39 // pred_check
          %p517 = pneg %p516
        $region46: #{rnn_bn_act_forward.2} parent=39 // pred_check_branch
          %519 = sbr.rel (%p517) target = $region48
        $region47: #{rnn_bn_act_forward.2} parent=39 // pred_region
          %s520 = smul.u32 %s24, 8
          %v521 = vld [vmem:[#allocation2] sm:$0xff]
          %v522 = vld [vmem:[#allocation3] sm:$0xff]
          %v523 = vld [vmem:[#allocation4] sm:$0xff]
          %vm524 = vcmask 261120
          %v526 = vsel %vm524, %v521, 0
          %528 = vmatpush.msra.mxu0 0.0
          %529 = vmatpush.msra.mxu0 0.0
          %530 = vmatpush.msra.mxu0 0.0
          %531 = vmatpush.msra.mxu0 0.0
          %532 = vmatpush.msra.mxu0 0.0
          %533 = vmatpush.msra.mxu0 0.0
          %534 = vmatpush.msra.mxu0 0.0
          %535 = vmatpush.msra.mxu0 0.0
          %536 = vmatpush.msra.mxu0 0.0
          %537 = vmatpush.msra.mxu0 0.0
          %538 = vmatpush.msra.mxu0 0.0
          %539 = vmatpush.msra.mxu0 0.0
          %540 = vmatpush.msra.mxu0 %v427
          %541 = vmatpush.msra.mxu0 %v426
          %542 = vmatpush.msra.mxu0 %v425
          %543 = vmatpush.msra.mxu0 %v424
          %544 = vmatmul.f32.gmra.mxu0 %v526
          %v545 = vpop.f32.mrf.mxu0
          %v546 = vadd.f32 0.0, %v545
          %547 = vdwg.mxu0
          %v548 = vadd.f32 %v523, %v546
          %v549 = vmul.f32 %v548, 0.5
          %v550 = vtanh.pop %v549
          %v551 = vmul.f32 %v550, 0.5
          %v552 = vadd.f32 %v551, 0.5
          %v553 = vtanh.pop %v548
          %555 = vrot.lane.b32.xlu0 %v522, 32
          %v556 = vpop.permute.xlu0 %555
          %v558 = vmul.f32 %v552, %v556
          %560 = vrot.lane.b32.xlu0 %v553, 64
          %v561 = vpop.permute.xlu0 %560
          %v563 = vmul.f32 %v552, %v561
          %565 = vrot.lane.b32.xlu0 %v563, 32
          %v566 = vpop.permute.xlu0 %565
          %v568 = vadd.f32 %v558, %v566
          %v569 = vtanh.pop %v568
          %571 = vrot.lane.b32.xlu0 %v569, 64
          %v572 = vpop.permute.xlu0 %571
          %v574 = vmul.f32 %v552, %v572
          %v575 = vstv %s520
          %vm576 = vcmp.lt.s32.totalorder %v575, %v423
          %v577 = vsel %vm576, 1, 0
          %578 = vset.pattern.permute.xlu0 0
          %579 = vperm.xlu0 %578, %v577
          %v580 = vpop.permute.xlu0 %579
          %vm581 = vcmp.eq.s32.totalorder %v580, 1
          %v582 = vsel %vm581, %v574, 0.0
          %583 = vrot.lane.b32.xlu0 %v521, 96
          %v584 = vpop.permute.xlu0 %583
          %v586 = vsel %vm581, %v574, %v584
          %588 = vrot.lane.b32.xlu0 %v586, 32
          %v589 = vpop.permute.xlu0 %588
          %591 = vst.msk [vmem:[#allocation2] sm:$0xff] %vm524, %v589
          %v592 = vsel %vm581, %v568, %v556
          %594 = vrot.lane.b32.xlu0 %v592, 96
          %v595 = vpop.permute.xlu0 %594
          %597 = vst.msk [vmem:[#allocation3] sm:$0xff] %vm524, %v595
          %v599 = vrot.slane %v582, 1
          %v600 = vrot.slane %v582, 2
          %v601 = vrot.slane %v582, 3
          %v602 = vrot.slane %v582, 4
          %v603 = vrot.slane %v582, 5
          %v604 = vrot.slane %v582, 6
          %v605 = vrot.slane %v582, 7
          %v606 = vperm.slane %v582, 0
          %v607 = vperm.slane %v599, 0
          %v608 = vperm.slane %v600, 0
          %v609 = vperm.slane %v601, 0
          %v610 = vperm.slane %v602, 0
          %v611 = vperm.slane %v603, 0
          %v612 = vperm.slane %v604, 0
          %v613 = vperm.slane %v605, 0
          %614 = vrot.lane.b32.xlu0 %v606, 32
          %v615 = vpop.permute.xlu0 %614
          %616 = vrot.lane.b32.xlu0 %v607, 32
          %v617 = vpop.permute.xlu0 %616
          %618 = vrot.lane.b32.xlu0 %v608, 32
          %v619 = vpop.permute.xlu0 %618
          %620 = vrot.lane.b32.xlu0 %v609, 32
          %v621 = vpop.permute.xlu0 %620
          %622 = vrot.lane.b32.xlu0 %v610, 32
          %v623 = vpop.permute.xlu0 %622
          %624 = vrot.lane.b32.xlu0 %v611, 32
          %v625 = vpop.permute.xlu0 %624
          %626 = vrot.lane.b32.xlu0 %v612, 32
          %v627 = vpop.permute.xlu0 %626
          %628 = vrot.lane.b32.xlu0 %v613, 32
          %v629 = vpop.permute.xlu0 %628
          %vm638 = vcmask 253952
          %639 = vst.msk [vmem:[%s359] sm:$0x1] %vm638, %v615
          %640 = vst.msk [vmem:[%s359 + $0x8] sm:$0x1] %vm638, %v617
          %641 = vst.msk [vmem:[%s359 + $0x10] sm:$0x1] %vm638, %v619
          %642 = vst.msk [vmem:[%s359 + $0x18] sm:$0x1] %vm638, %v621
          %643 = vst.msk [vmem:[%s359 + $0x20] sm:$0x1] %vm638, %v623
          %644 = vst.msk [vmem:[%s359 + $0x28] sm:$0x1] %vm638, %v625
          %645 = vst.msk [vmem:[%s359 + $0x30] sm:$0x1] %vm638, %v627
          %646 = vst.msk [vmem:[%s359 + $0x38] sm:$0x1] %vm638, %v629
          %v647 = vld [vmem:[%s409] sm:$0xff]
          %648 = vrot.lane.b32.xlu0 %v582, 32
          %v649 = vpop.permute.xlu0 %648
          %v651 = vadd.f32 %v647, %v649
          %652 = vst.msk [vmem:[%s409] sm:$0xff] %vm524, %v651
          %v653 = vld [vmem:[%s413] sm:$0xff]
          %v654 = vmul.f32 %v582, %v582
          %656 = vrot.lane.b32.xlu0 %v654, 32
          %v657 = vpop.permute.xlu0 %656
          %v659 = vadd.f32 %v653, %v657
          %660 = vst.msk [vmem:[%s413] sm:$0xff] %vm524, %v659
          %s661 = sadd.s32 %s520, 1
          %v662 = vld [vmem:[#allocation2] sm:$0xff]
          %v663 = vld [vmem:[#allocation3] sm:$0xff]
          %v664 = vld [vmem:[#allocation4 + $0x8] sm:$0xff]
          %v666 = vsel %vm524, %v662, 0
          %668 = vmatpush.msra.mxu0 0.0
          %669 = vmatpush.msra.mxu0 0.0
          %670 = vmatpush.msra.mxu0 0.0
          %671 = vmatpush.msra.mxu0 0.0
          %672 = vmatpush.msra.mxu0 0.0
          %673 = vmatpush.msra.mxu0 0.0
          %674 = vmatpush.msra.mxu0 0.0
          %675 = vmatpush.msra.mxu0 0.0
          %676 = vmatpush.msra.mxu0 0.0
          %677 = vmatpush.msra.mxu0 0.0
          %678 = vmatpush.msra.mxu0 0.0
          %679 = vmatpush.msra.mxu0 0.0
          %680 = vmatpush.msra.mxu0 %v427
          %681 = vmatpush.msra.mxu0 %v426
          %682 = vmatpush.msra.mxu0 %v425
          %683 = vmatpush.msra.mxu0 %v424
          %684 = vmatmul.f32.gmra.mxu0 %v666
          %v685 = vpop.f32.mrf.mxu0
          %v686 = vadd.f32 0.0, %v685
          %687 = vdwg.mxu0
          %v688 = vadd.f32 %v664, %v686
          %v689 = vmul.f32 %v688, 0.5
          %v690 = vtanh.pop %v689
          %v691 = vmul.f32 %v690, 0.5
          %v692 = vadd.f32 %v691, 0.5
          %v693 = vtanh.pop %v688
          %695 = vrot.lane.b32.xlu0 %v663, 32
          %v696 = vpop.permute.xlu0 %695
          %v698 = vmul.f32 %v692, %v696
          %700 = vrot.lane.b32.xlu0 %v693, 64
          %v701 = vpop.permute.xlu0 %700
          %v703 = vmul.f32 %v692, %v701
          %705 = vrot.lane.b32.xlu0 %v703, 32
          %v706 = vpop.permute.xlu0 %705
          %v708 = vadd.f32 %v698, %v706
          %v709 = vtanh.pop %v708
          %711 = vrot.lane.b32.xlu0 %v709, 64
          %v712 = vpop.permute.xlu0 %711
          %v714 = vmul.f32 %v692, %v712
          %v715 = vstv %s661
          %vm716 = vcmp.lt.s32.totalorder %v715, %v423
          %v717 = vsel %vm716, 1, 0
          %718 = vset.pattern.permute.xlu0 0
          %719 = vperm.xlu0 %718, %v717
          %v720 = vpop.permute.xlu0 %719
          %vm721 = vcmp.eq.s32.totalorder %v720, 1
          %v722 = vsel %vm721, %v714, 0.0
          %723 = vrot.lane.b32.xlu0 %v662, 96
          %v724 = vpop.permute.xlu0 %723
          %v726 = vsel %vm721, %v714, %v724
          %728 = vrot.lane.b32.xlu0 %v726, 32
          %v729 = vpop.permute.xlu0 %728
          %731 = vst.msk [vmem:[#allocation2] sm:$0xff] %vm524, %v729
          %v732 = vsel %vm721, %v708, %v696
          %734 = vrot.lane.b32.xlu0 %v732, 96
          %v735 = vpop.permute.xlu0 %734
          %737 = vst.msk [vmem:[#allocation3] sm:$0xff] %vm524, %v735
          %v739 = vrot.slane %v722, 1
          %v740 = vrot.slane %v722, 2
          %v741 = vrot.slane %v722, 3
          %v742 = vrot.slane %v722, 4
          %v743 = vrot.slane %v722, 5
          %v744 = vrot.slane %v722, 6
          %v745 = vrot.slane %v722, 7
          %v746 = vperm.slane %v722, 0
          %v747 = vperm.slane %v739, 0
          %v748 = vperm.slane %v740, 0
          %v749 = vperm.slane %v741, 0
          %v750 = vperm.slane %v742, 0
          %v751 = vperm.slane %v743, 0
          %v752 = vperm.slane %v744, 0
          %v753 = vperm.slane %v745, 0
          %754 = vrot.lane.b32.xlu0 %v746, 32
          %v755 = vpop.permute.xlu0 %754
          %756 = vrot.lane.b32.xlu0 %v747, 32
          %v757 = vpop.permute.xlu0 %756
          %758 = vrot.lane.b32.xlu0 %v748, 32
          %v759 = vpop.permute.xlu0 %758
          %760 = vrot.lane.b32.xlu0 %v749, 32
          %v761 = vpop.permute.xlu0 %760
          %762 = vrot.lane.b32.xlu0 %v750, 32
          %v763 = vpop.permute.xlu0 %762
          %764 = vrot.lane.b32.xlu0 %v751, 32
          %v765 = vpop.permute.xlu0 %764
          %766 = vrot.lane.b32.xlu0 %v752, 32
          %v767 = vpop.permute.xlu0 %766
          %768 = vrot.lane.b32.xlu0 %v753, 32
          %v769 = vpop.permute.xlu0 %768
          %778 = vst.msk [vmem:[%s359 + $0x1] sm:$0x1] %vm638, %v755
          %779 = vst.msk [vmem:[%s359 + $0x9] sm:$0x1] %vm638, %v757
          %780 = vst.msk [vmem:[%s359 + $0x11] sm:$0x1] %vm638, %v759
          %781 = vst.msk [vmem:[%s359 + $0x19] sm:$0x1] %vm638, %v761
          %782 = vst.msk [vmem:[%s359 + $0x21] sm:$0x1] %vm638, %v763
          %783 = vst.msk [vmem:[%s359 + $0x29] sm:$0x1] %vm638, %v765
          %784 = vst.msk [vmem:[%s359 + $0x31] sm:$0x1] %vm638, %v767
          %785 = vst.msk [vmem:[%s359 + $0x39] sm:$0x1] %vm638, %v769
          %v786 = vld [vmem:[%s409] sm:$0xff]
          %787 = vrot.lane.b32.xlu0 %v722, 32
          %v788 = vpop.permute.xlu0 %787
          %v790 = vadd.f32 %v786, %v788
          %791 = vst.msk [vmem:[%s409] sm:$0xff] %vm524, %v790
          %v792 = vld [vmem:[%s413] sm:$0xff]
          %v793 = vmul.f32 %v722, %v722
          %795 = vrot.lane.b32.xlu0 %v793, 32
          %v796 = vpop.permute.xlu0 %795
          %v798 = vadd.f32 %v792, %v796
          %799 = vst.msk [vmem:[%s413] sm:$0xff] %vm524, %v798
          %s800 = sadd.s32 %s520, 2
          %v801 = vld [vmem:[#allocation2] sm:$0xff]
          %v802 = vld [vmem:[#allocation3] sm:$0xff]
          %v803 = vld [vmem:[#allocation4 + $0x10] sm:$0xff]
          %v805 = vsel %vm524, %v801, 0
          %807 = vmatpush.msra.mxu0 0.0
          %808 = vmatpush.msra.mxu0 0.0
          %809 = vmatpush.msra.mxu0 0.0
          %810 = vmatpush.msra.mxu0 0.0
          %811 = vmatpush.msra.mxu0 0.0
          %812 = vmatpush.msra.mxu0 0.0
          %813 = vmatpush.msra.mxu0 0.0
          %814 = vmatpush.msra.mxu0 0.0
          %815 = vmatpush.msra.mxu0 0.0
          %816 = vmatpush.msra.mxu0 0.0
          %817 = vmatpush.msra.mxu0 0.0
          %818 = vmatpush.msra.mxu0 0.0
          %819 = vmatpush.msra.mxu0 %v427
          %820 = vmatpush.msra.mxu0 %v426
          %821 = vmatpush.msra.mxu0 %v425
          %822 = vmatpush.msra.mxu0 %v424
          %823 = vmatmul.f32.gmra.mxu0 %v805
          %v824 = vpop.f32.mrf.mxu0
          %v825 = vadd.f32 0.0, %v824
          %826 = vdwg.mxu0
          %v827 = vadd.f32 %v803, %v825
          %v828 = vmul.f32 %v827, 0.5
          %v829 = vtanh.pop %v828
          %v830 = vmul.f32 %v829, 0.5
          %v831 = vadd.f32 %v830, 0.5
          %v832 = vtanh.pop %v827
          %834 = vrot.lane.b32.xlu0 %v802, 32
          %v835 = vpop.permute.xlu0 %834
          %v837 = vmul.f32 %v831, %v835
          %839 = vrot.lane.b32.xlu0 %v832, 64
          %v840 = vpop.permute.xlu0 %839
          %v842 = vmul.f32 %v831, %v840
          %844 = vrot.lane.b32.xlu0 %v842, 32
          %v845 = vpop.permute.xlu0 %844
          %v847 = vadd.f32 %v837, %v845
          %v848 = vtanh.pop %v847
          %850 = vrot.lane.b32.xlu0 %v848, 64
          %v851 = vpop.permute.xlu0 %850
          %v853 = vmul.f32 %v831, %v851
          %v854 = vstv %s800
          %vm855 = vcmp.lt.s32.totalorder %v854, %v423
          %v856 = vsel %vm855, 1, 0
          %857 = vset.pattern.permute.xlu0 0
          %858 = vperm.xlu0 %857, %v856
          %v859 = vpop.permute.xlu0 %858
          %vm860 = vcmp.eq.s32.totalorder %v859, 1
          %v861 = vsel %vm860, %v853, 0.0
          %862 = vrot.lane.b32.xlu0 %v801, 96
          %v863 = vpop.permute.xlu0 %862
          %v865 = vsel %vm860, %v853, %v863
          %867 = vrot.lane.b32.xlu0 %v865, 32
          %v868 = vpop.permute.xlu0 %867
          %870 = vst.msk [vmem:[#allocation2] sm:$0xff] %vm524, %v868
          %v871 = vsel %vm860, %v847, %v835
          %873 = vrot.lane.b32.xlu0 %v871, 96
          %v874 = vpop.permute.xlu0 %873
          %876 = vst.msk [vmem:[#allocation3] sm:$0xff] %vm524, %v874
          %v878 = vrot.slane %v861, 1
          %v879 = vrot.slane %v861, 2
          %v880 = vrot.slane %v861, 3
          %v881 = vrot.slane %v861, 4
          %v882 = vrot.slane %v861, 5
          %v883 = vrot.slane %v861, 6
          %v884 = vrot.slane %v861, 7
          %v885 = vperm.slane %v861, 0
          %v886 = vperm.slane %v878, 0
          %v887 = vperm.slane %v879, 0
          %v888 = vperm.slane %v880, 0
          %v889 = vperm.slane %v881, 0
          %v890 = vperm.slane %v882, 0
          %v891 = vperm.slane %v883, 0
          %v892 = vperm.slane %v884, 0
          %893 = vrot.lane.b32.xlu0 %v885, 32
          %v894 = vpop.permute.xlu0 %893
          %895 = vrot.lane.b32.xlu0 %v886, 32
          %v896 = vpop.permute.xlu0 %895
          %897 = vrot.lane.b32.xlu0 %v887, 32
          %v898 = vpop.permute.xlu0 %897
          %899 = vrot.lane.b32.xlu0 %v888, 32
          %v900 = vpop.permute.xlu0 %899
          %901 = vrot.lane.b32.xlu0 %v889, 32
          %v902 = vpop.permute.xlu0 %901
          %903 = vrot.lane.b32.xlu0 %v890, 32
          %v904 = vpop.permute.xlu0 %903
          %905 = vrot.lane.b32.xlu0 %v891, 32
          %v906 = vpop.permute.xlu0 %905
          %907 = vrot.lane.b32.xlu0 %v892, 32
          %v908 = vpop.permute.xlu0 %907
          %917 = vst.msk [vmem:[%s359 + $0x2] sm:$0x1] %vm638, %v894
          %918 = vst.msk [vmem:[%s359 + $0xa] sm:$0x1] %vm638, %v896
          %919 = vst.msk [vmem:[%s359 + $0x12] sm:$0x1] %vm638, %v898
          %920 = vst.msk [vmem:[%s359 + $0x1a] sm:$0x1] %vm638, %v900
          %921 = vst.msk [vmem:[%s359 + $0x22] sm:$0x1] %vm638, %v902
          %922 = vst.msk [vmem:[%s359 + $0x2a] sm:$0x1] %vm638, %v904
          %923 = vst.msk [vmem:[%s359 + $0x32] sm:$0x1] %vm638, %v906
          %924 = vst.msk [vmem:[%s359 + $0x3a] sm:$0x1] %vm638, %v908
          %v925 = vld [vmem:[%s409] sm:$0xff]
          %926 = vrot.lane.b32.xlu0 %v861, 32
          %v927 = vpop.permute.xlu0 %926
          %v929 = vadd.f32 %v925, %v927
          %930 = vst.msk [vmem:[%s409] sm:$0xff] %vm524, %v929
          %v931 = vld [vmem:[%s413] sm:$0xff]
          %v932 = vmul.f32 %v861, %v861
          %934 = vrot.lane.b32.xlu0 %v932, 32
          %v935 = vpop.permute.xlu0 %934
          %v937 = vadd.f32 %v931, %v935
          %938 = vst.msk [vmem:[%s413] sm:$0xff] %vm524, %v937
          %s939 = sadd.s32 %s520, 3
          %v940 = vld [vmem:[#allocation2] sm:$0xff]
          %v941 = vld [vmem:[#allocation3] sm:$0xff]
          %v942 = vld [vmem:[#allocation4 + $0x18] sm:$0xff]
          %v944 = vsel %vm524, %v940, 0
          %946 = vmatpush.msra.mxu0 0.0
          %947 = vmatpush.msra.mxu0 0.0
          %948 = vmatpush.msra.mxu0 0.0
          %949 = vmatpush.msra.mxu0 0.0
          %950 = vmatpush.msra.mxu0 0.0
          %951 = vmatpush.msra.mxu0 0.0
          %952 = vmatpush.msra.mxu0 0.0
          %953 = vmatpush.msra.mxu0 0.0
          %954 = vmatpush.msra.mxu0 0.0
          %955 = vmatpush.msra.mxu0 0.0
          %956 = vmatpush.msra.mxu0 0.0
          %957 = vmatpush.msra.mxu0 0.0
          %958 = vmatpush.msra.mxu0 %v427
          %959 = vmatpush.msra.mxu0 %v426
          %960 = vmatpush.msra.mxu0 %v425
          %961 = vmatpush.msra.mxu0 %v424
          %962 = vmatmul.f32.gmra.mxu0 %v944
          %v963 = vpop.f32.mrf.mxu0
          %v964 = vadd.f32 0.0, %v963
          %965 = vdwg.mxu0
          %v966 = vadd.f32 %v942, %v964
          %v967 = vmul.f32 %v966, 0.5
          %v968 = vtanh.pop %v967
          %v969 = vmul.f32 %v968, 0.5
          %v970 = vadd.f32 %v969, 0.5
          %v971 = vtanh.pop %v966
          %973 = vrot.lane.b32.xlu0 %v941, 32
          %v974 = vpop.permute.xlu0 %973
          %v976 = vmul.f32 %v970, %v974
          %978 = vrot.lane.b32.xlu0 %v971, 64
          %v979 = vpop.permute.xlu0 %978
          %v981 = vmul.f32 %v970, %v979
          %983 = vrot.lane.b32.xlu0 %v981, 32
          %v984 = vpop.permute.xlu0 %983
          %v986 = vadd.f32 %v976, %v984
          %v987 = vtanh.pop %v986
          %989 = vrot.lane.b32.xlu0 %v987, 64
          %v990 = vpop.permute.xlu0 %989
          %v992 = vmul.f32 %v970, %v990
          %v993 = vstv %s939
          %vm994 = vcmp.lt.s32.totalorder %v993, %v423
          %v995 = vsel %vm994, 1, 0
          %996 = vset.pattern.permute.xlu0 0
          %997 = vperm.xlu0 %996, %v995
          %v998 = vpop.permute.xlu0 %997
          %vm999 = vcmp.eq.s32.totalorder %v998, 1
          %v1000 = vsel %vm999, %v992, 0.0
          %1001 = vrot.lane.b32.xlu0 %v940, 96
          %v1002 = vpop.permute.xlu0 %1001
          %v1004 = vsel %vm999, %v992, %v1002
          %1006 = vrot.lane.b32.xlu0 %v1004, 32
          %v1007 = vpop.permute.xlu0 %1006
          %1009 = vst.msk [vmem:[#allocation2] sm:$0xff] %vm524, %v1007
          %v1010 = vsel %vm999, %v986, %v974
          %1012 = vrot.lane.b32.xlu0 %v1010, 96
          %v1013 = vpop.permute.xlu0 %1012
          %1015 = vst.msk [vmem:[#allocation3] sm:$0xff] %vm524, %v1013
          %v1017 = vrot.slane %v1000, 1
          %v1018 = vrot.slane %v1000, 2
          %v1019 = vrot.slane %v1000, 3
          %v1020 = vrot.slane %v1000, 4
          %v1021 = vrot.slane %v1000, 5
          %v1022 = vrot.slane %v1000, 6
          %v1023 = vrot.slane %v1000, 7
          %v1024 = vperm.slane %v1000, 0
          %v1025 = vperm.slane %v1017, 0
          %v1026 = vperm.slane %v1018, 0
          %v1027 = vperm.slane %v1019, 0
          %v1028 = vperm.slane %v1020, 0
          %v1029 = vperm.slane %v1021, 0
          %v1030 = vperm.slane %v1022, 0
          %v1031 = vperm.slane %v1023, 0
          %1032 = vrot.lane.b32.xlu0 %v1024, 32
          %v1033 = vpop.permute.xlu0 %1032
          %1034 = vrot.lane.b32.xlu0 %v1025, 32
          %v1035 = vpop.permute.xlu0 %1034
          %1036 = vrot.lane.b32.xlu0 %v1026, 32
          %v1037 = vpop.permute.xlu0 %1036
          %1038 = vrot.lane.b32.xlu0 %v1027, 32
          %v1039 = vpop.permute.xlu0 %1038
          %1040 = vrot.lane.b32.xlu0 %v1028, 32
          %v1041 = vpop.permute.xlu0 %1040
          %1042 = vrot.lane.b32.xlu0 %v1029, 32
          %v1043 = vpop.permute.xlu0 %1042
          %1044 = vrot.lane.b32.xlu0 %v1030, 32
          %v1045 = vpop.permute.xlu0 %1044
          %1046 = vrot.lane.b32.xlu0 %v1031, 32
          %v1047 = vpop.permute.xlu0 %1046
          %1056 = vst.msk [vmem:[%s359 + $0x3] sm:$0x1] %vm638, %v1033
          %1057 = vst.msk [vmem:[%s359 + $0xb] sm:$0x1] %vm638, %v1035
          %1058 = vst.msk [vmem:[%s359 + $0x13] sm:$0x1] %vm638, %v1037
          %1059 = vst.msk [vmem:[%s359 + $0x1b] sm:$0x1] %vm638, %v1039
          %1060 = vst.msk [vmem:[%s359 + $0x23] sm:$0x1] %vm638, %v1041
          %1061 = vst.msk [vmem:[%s359 + $0x2b] sm:$0x1] %vm638, %v1043
          %1062 = vst.msk [vmem:[%s359 + $0x33] sm:$0x1] %vm638, %v1045
          %1063 = vst.msk [vmem:[%s359 + $0x3b] sm:$0x1] %vm638, %v1047
          %v1064 = vld [vmem:[%s409] sm:$0xff]
          %1065 = vrot.lane.b32.xlu0 %v1000, 32
          %v1066 = vpop.permute.xlu0 %1065
          %v1068 = vadd.f32 %v1064, %v1066
          %1069 = vst.msk [vmem:[%s409] sm:$0xff] %vm524, %v1068
          %v1070 = vld [vmem:[%s413] sm:$0xff]
          %v1071 = vmul.f32 %v1000, %v1000
          %1073 = vrot.lane.b32.xlu0 %v1071, 32
          %v1074 = vpop.permute.xlu0 %1073
          %v1076 = vadd.f32 %v1070, %v1074
          %1077 = vst.msk [vmem:[%s413] sm:$0xff] %vm524, %v1076
          %s1078 = sadd.s32 %s520, 4
          %v1079 = vld [vmem:[#allocation2] sm:$0xff]
          %v1080 = vld [vmem:[#allocation3] sm:$0xff]
          %v1081 = vld [vmem:[#allocation4 + $0x20] sm:$0xff]
          %v1083 = vsel %vm524, %v1079, 0
          %1085 = vmatpush.msra.mxu0 0.0
          %1086 = vmatpush.msra.mxu0 0.0
          %1087 = vmatpush.msra.mxu0 0.0
          %1088 = vmatpush.msra.mxu0 0.0
          %1089 = vmatpush.msra.mxu0 0.0
          %1090 = vmatpush.msra.mxu0 0.0
          %1091 = vmatpush.msra.mxu0 0.0
          %1092 = vmatpush.msra.mxu0 0.0
          %1093 = vmatpush.msra.mxu0 0.0
          %1094 = vmatpush.msra.mxu0 0.0
          %1095 = vmatpush.msra.mxu0 0.0
          %1096 = vmatpush.msra.mxu0 0.0
          %1097 = vmatpush.msra.mxu0 %v427
          %1098 = vmatpush.msra.mxu0 %v426
          %1099 = vmatpush.msra.mxu0 %v425
          %1100 = vmatpush.msra.mxu0 %v424
          %1101 = vmatmul.f32.gmra.mxu0 %v1083
          %v1102 = vpop.f32.mrf.mxu0
          %v1103 = vadd.f32 0.0, %v1102
          %1104 = vdwg.mxu0
          %v1105 = vadd.f32 %v1081, %v1103
          %v1106 = vmul.f32 %v1105, 0.5
          %v1107 = vtanh.pop %v1106
          %v1108 = vmul.f32 %v1107, 0.5
          %v1109 = vadd.f32 %v1108, 0.5
          %v1110 = vtanh.pop %v1105
          %1112 = vrot.lane.b32.xlu0 %v1080, 32
          %v1113 = vpop.permute.xlu0 %1112
          %v1115 = vmul.f32 %v1109, %v1113
          %1117 = vrot.lane.b32.xlu0 %v1110, 64
          %v1118 = vpop.permute.xlu0 %1117
          %v1120 = vmul.f32 %v1109, %v1118
          %1122 = vrot.lane.b32.xlu0 %v1120, 32
          %v1123 = vpop.permute.xlu0 %1122
          %v1125 = vadd.f32 %v1115, %v1123
          %v1126 = vtanh.pop %v1125
          %1128 = vrot.lane.b32.xlu0 %v1126, 64
          %v1129 = vpop.permute.xlu0 %1128
          %v1131 = vmul.f32 %v1109, %v1129
          %v1132 = vstv %s1078
          %vm1133 = vcmp.lt.s32.totalorder %v1132, %v423
          %v1134 = vsel %vm1133, 1, 0
          %1135 = vset.pattern.permute.xlu0 0
          %1136 = vperm.xlu0 %1135, %v1134
          %v1137 = vpop.permute.xlu0 %1136
          %vm1138 = vcmp.eq.s32.totalorder %v1137, 1
          %v1139 = vsel %vm1138, %v1131, 0.0
          %1140 = vrot.lane.b32.xlu0 %v1079, 96
          %v1141 = vpop.permute.xlu0 %1140
          %v1143 = vsel %vm1138, %v1131, %v1141
          %1145 = vrot.lane.b32.xlu0 %v1143, 32
          %v1146 = vpop.permute.xlu0 %1145
          %1148 = vst.msk [vmem:[#allocation2] sm:$0xff] %vm524, %v1146
          %v1149 = vsel %vm1138, %v1125, %v1113
          %1151 = vrot.lane.b32.xlu0 %v1149, 96
          %v1152 = vpop.permute.xlu0 %1151
          %1154 = vst.msk [vmem:[#allocation3] sm:$0xff] %vm524, %v1152
          %v1156 = vrot.slane %v1139, 1
          %v1157 = vrot.slane %v1139, 2
          %v1158 = vrot.slane %v1139, 3
          %v1159 = vrot.slane %v1139, 4
          %v1160 = vrot.slane %v1139, 5
          %v1161 = vrot.slane %v1139, 6
          %v1162 = vrot.slane %v1139, 7
          %v1163 = vperm.slane %v1139, 0
          %v1164 = vperm.slane %v1156, 0
          %v1165 = vperm.slane %v1157, 0
          %v1166 = vperm.slane %v1158, 0
          %v1167 = vperm.slane %v1159, 0
          %v1168 = vperm.slane %v1160, 0
          %v1169 = vperm.slane %v1161, 0
          %v1170 = vperm.slane %v1162, 0
          %1171 = vrot.lane.b32.xlu0 %v1163, 32
          %v1172 = vpop.permute.xlu0 %1171
          %1173 = vrot.lane.b32.xlu0 %v1164, 32
          %v1174 = vpop.permute.xlu0 %1173
          %1175 = vrot.lane.b32.xlu0 %v1165, 32
          %v1176 = vpop.permute.xlu0 %1175
          %1177 = vrot.lane.b32.xlu0 %v1166, 32
          %v1178 = vpop.permute.xlu0 %1177
          %1179 = vrot.lane.b32.xlu0 %v1167, 32
          %v1180 = vpop.permute.xlu0 %1179
          %1181 = vrot.lane.b32.xlu0 %v1168, 32
          %v1182 = vpop.permute.xlu0 %1181
          %1183 = vrot.lane.b32.xlu0 %v1169, 32
          %v1184 = vpop.permute.xlu0 %1183
          %1185 = vrot.lane.b32.xlu0 %v1170, 32
          %v1186 = vpop.permute.xlu0 %1185
          %1195 = vst.msk [vmem:[%s359 + $0x4] sm:$0x1] %vm638, %v1172
          %1196 = vst.msk [vmem:[%s359 + $0xc] sm:$0x1] %vm638, %v1174
          %1197 = vst.msk [vmem:[%s359 + $0x14] sm:$0x1] %vm638, %v1176
          %1198 = vst.msk [vmem:[%s359 + $0x1c] sm:$0x1] %vm638, %v1178
          %1199 = vst.msk [vmem:[%s359 + $0x24] sm:$0x1] %vm638, %v1180
          %1200 = vst.msk [vmem:[%s359 + $0x2c] sm:$0x1] %vm638, %v1182
          %1201 = vst.msk [vmem:[%s359 + $0x34] sm:$0x1] %vm638, %v1184
          %1202 = vst.msk [vmem:[%s359 + $0x3c] sm:$0x1] %vm638, %v1186
          %v1203 = vld [vmem:[%s409] sm:$0xff]
          %1204 = vrot.lane.b32.xlu0 %v1139, 32
          %v1205 = vpop.permute.xlu0 %1204
          %v1207 = vadd.f32 %v1203, %v1205
          %1208 = vst.msk [vmem:[%s409] sm:$0xff] %vm524, %v1207
          %v1209 = vld [vmem:[%s413] sm:$0xff]
          %v1210 = vmul.f32 %v1139, %v1139
          %1212 = vrot.lane.b32.xlu0 %v1210, 32
          %v1213 = vpop.permute.xlu0 %1212
          %v1215 = vadd.f32 %v1209, %v1213
          %1216 = vst.msk [vmem:[%s413] sm:$0xff] %vm524, %v1215
          %s1217 = sadd.s32 %s520, 5
          %v1218 = vld [vmem:[#allocation2] sm:$0xff]
          %v1219 = vld [vmem:[#allocation3] sm:$0xff]
          %v1220 = vld [vmem:[#allocation4 + $0x28] sm:$0xff]
          %v1222 = vsel %vm524, %v1218, 0
          %1224 = vmatpush.msra.mxu0 0.0
          %1225 = vmatpush.msra.mxu0 0.0
          %1226 = vmatpush.msra.mxu0 0.0
          %1227 = vmatpush.msra.mxu0 0.0
          %1228 = vmatpush.msra.mxu0 0.0
          %1229 = vmatpush.msra.mxu0 0.0
          %1230 = vmatpush.msra.mxu0 0.0
          %1231 = vmatpush.msra.mxu0 0.0
          %1232 = vmatpush.msra.mxu0 0.0
          %1233 = vmatpush.msra.mxu0 0.0
          %1234 = vmatpush.msra.mxu0 0.0
          %1235 = vmatpush.msra.mxu0 0.0
          %1236 = vmatpush.msra.mxu0 %v427
          %1237 = vmatpush.msra.mxu0 %v426
          %1238 = vmatpush.msra.mxu0 %v425
          %1239 = vmatpush.msra.mxu0 %v424
          %1240 = vmatmul.f32.gmra.mxu0 %v1222
          %v1241 = vpop.f32.mrf.mxu0
          %v1242 = vadd.f32 0.0, %v1241
          %1243 = vdwg.mxu0
          %v1244 = vadd.f32 %v1220, %v1242
          %v1245 = vmul.f32 %v1244, 0.5
          %v1246 = vtanh.pop %v1245
          %v1247 = vmul.f32 %v1246, 0.5
          %v1248 = vadd.f32 %v1247, 0.5
          %v1249 = vtanh.pop %v1244
          %1251 = vrot.lane.b32.xlu0 %v1219, 32
          %v1252 = vpop.permute.xlu0 %1251
          %v1254 = vmul.f32 %v1248, %v1252
          %1256 = vrot.lane.b32.xlu0 %v1249, 64
          %v1257 = vpop.permute.xlu0 %1256
          %v1259 = vmul.f32 %v1248, %v1257
          %1261 = vrot.lane.b32.xlu0 %v1259, 32
          %v1262 = vpop.permute.xlu0 %1261
          %v1264 = vadd.f32 %v1254, %v1262
          %v1265 = vtanh.pop %v1264
          %1267 = vrot.lane.b32.xlu0 %v1265, 64
          %v1268 = vpop.permute.xlu0 %1267
          %v1270 = vmul.f32 %v1248, %v1268
          %v1271 = vstv %s1217
          %vm1272 = vcmp.lt.s32.totalorder %v1271, %v423
          %v1273 = vsel %vm1272, 1, 0
          %1274 = vset.pattern.permute.xlu0 0
          %1275 = vperm.xlu0 %1274, %v1273
          %v1276 = vpop.permute.xlu0 %1275
          %vm1277 = vcmp.eq.s32.totalorder %v1276, 1
          %v1278 = vsel %vm1277, %v1270, 0.0
          %1279 = vrot.lane.b32.xlu0 %v1218, 96
          %v1280 = vpop.permute.xlu0 %1279
          %v1282 = vsel %vm1277, %v1270, %v1280
          %1284 = vrot.lane.b32.xlu0 %v1282, 32
          %v1285 = vpop.permute.xlu0 %1284
          %1287 = vst.msk [vmem:[#allocation2] sm:$0xff] %vm524, %v1285
          %v1288 = vsel %vm1277, %v1264, %v1252
          %1290 = vrot.lane.b32.xlu0 %v1288, 96
          %v1291 = vpop.permute.xlu0 %1290
          %1293 = vst.msk [vmem:[#allocation3] sm:$0xff] %vm524, %v1291
          %v1295 = vrot.slane %v1278, 1
          %v1296 = vrot.slane %v1278, 2
          %v1297 = vrot.slane %v1278, 3
          %v1298 = vrot.slane %v1278, 4
          %v1299 = vrot.slane %v1278, 5
          %v1300 = vrot.slane %v1278, 6
          %v1301 = vrot.slane %v1278, 7
          %v1302 = vperm.slane %v1278, 0
          %v1303 = vperm.slane %v1295, 0
          %v1304 = vperm.slane %v1296, 0
          %v1305 = vperm.slane %v1297, 0
          %v1306 = vperm.slane %v1298, 0
          %v1307 = vperm.slane %v1299, 0
          %v1308 = vperm.slane %v1300, 0
          %v1309 = vperm.slane %v1301, 0
          %1310 = vrot.lane.b32.xlu0 %v1302, 32
          %v1311 = vpop.permute.xlu0 %1310
          %1312 = vrot.lane.b32.xlu0 %v1303, 32
          %v1313 = vpop.permute.xlu0 %1312
          %1314 = vrot.lane.b32.xlu0 %v1304, 32
          %v1315 = vpop.permute.xlu0 %1314
          %1316 = vrot.lane.b32.xlu0 %v1305, 32
          %v1317 = vpop.permute.xlu0 %1316
          %1318 = vrot.lane.b32.xlu0 %v1306, 32
          %v1319 = vpop.permute.xlu0 %1318
          %1320 = vrot.lane.b32.xlu0 %v1307, 32
          %v1321 = vpop.permute.xlu0 %1320
          %1322 = vrot.lane.b32.xlu0 %v1308, 32
          %v1323 = vpop.permute.xlu0 %1322
          %1324 = vrot.lane.b32.xlu0 %v1309, 32
          %v1325 = vpop.permute.xlu0 %1324
          %1334 = vst.msk [vmem:[%s359 + $0x5] sm:$0x1] %vm638, %v1311
          %1335 = vst.msk [vmem:[%s359 + $0xd] sm:$0x1] %vm638, %v1313
          %1336 = vst.msk [vmem:[%s359 + $0x15] sm:$0x1] %vm638, %v1315
          %1337 = vst.msk [vmem:[%s359 + $0x1d] sm:$0x1] %vm638, %v1317
          %1338 = vst.msk [vmem:[%s359 + $0x25] sm:$0x1] %vm638, %v1319
          %1339 = vst.msk [vmem:[%s359 + $0x2d] sm:$0x1] %vm638, %v1321
          %1340 = vst.msk [vmem:[%s359 + $0x35] sm:$0x1] %vm638, %v1323
          %1341 = vst.msk [vmem:[%s359 + $0x3d] sm:$0x1] %vm638, %v1325
          %v1342 = vld [vmem:[%s409] sm:$0xff]
          %1343 = vrot.lane.b32.xlu0 %v1278, 32
          %v1344 = vpop.permute.xlu0 %1343
          %v1346 = vadd.f32 %v1342, %v1344
          %1347 = vst.msk [vmem:[%s409] sm:$0xff] %vm524, %v1346
          %v1348 = vld [vmem:[%s413] sm:$0xff]
          %v1349 = vmul.f32 %v1278, %v1278
          %1351 = vrot.lane.b32.xlu0 %v1349, 32
          %v1352 = vpop.permute.xlu0 %1351
          %v1354 = vadd.f32 %v1348, %v1352
          %1355 = vst.msk [vmem:[%s413] sm:$0xff] %vm524, %v1354
          %s1356 = sadd.s32 %s520, 6
          %v1357 = vld [vmem:[#allocation2] sm:$0xff]
          %v1358 = vld [vmem:[#allocation3] sm:$0xff]
          %v1359 = vld [vmem:[#allocation4 + $0x30] sm:$0xff]
          %v1361 = vsel %vm524, %v1357, 0
          %1363 = vmatpush.msra.mxu0 0.0
          %1364 = vmatpush.msra.mxu0 0.0
          %1365 = vmatpush.msra.mxu0 0.0
          %1366 = vmatpush.msra.mxu0 0.0
          %1367 = vmatpush.msra.mxu0 0.0
          %1368 = vmatpush.msra.mxu0 0.0
          %1369 = vmatpush.msra.mxu0 0.0
          %1370 = vmatpush.msra.mxu0 0.0
          %1371 = vmatpush.msra.mxu0 0.0
          %1372 = vmatpush.msra.mxu0 0.0
          %1373 = vmatpush.msra.mxu0 0.0
          %1374 = vmatpush.msra.mxu0 0.0
          %1375 = vmatpush.msra.mxu0 %v427
          %1376 = vmatpush.msra.mxu0 %v426
          %1377 = vmatpush.msra.mxu0 %v425
          %1378 = vmatpush.msra.mxu0 %v424
          %1379 = vmatmul.f32.gmra.mxu0 %v1361
          %v1380 = vpop.f32.mrf.mxu0
          %v1381 = vadd.f32 0.0, %v1380
          %1382 = vdwg.mxu0
          %v1383 = vadd.f32 %v1359, %v1381
          %v1384 = vmul.f32 %v1383, 0.5
          %v1385 = vtanh.pop %v1384
          %v1386 = vmul.f32 %v1385, 0.5
          %v1387 = vadd.f32 %v1386, 0.5
          %v1388 = vtanh.pop %v1383
          %1390 = vrot.lane.b32.xlu0 %v1358, 32
          %v1391 = vpop.permute.xlu0 %1390
          %v1393 = vmul.f32 %v1387, %v1391
          %1395 = vrot.lane.b32.xlu0 %v1388, 64
          %v1396 = vpop.permute.xlu0 %1395
          %v1398 = vmul.f32 %v1387, %v1396
          %1400 = vrot.lane.b32.xlu0 %v1398, 32
          %v1401 = vpop.permute.xlu0 %1400
          %v1403 = vadd.f32 %v1393, %v1401
          %v1404 = vtanh.pop %v1403
          %1406 = vrot.lane.b32.xlu0 %v1404, 64
          %v1407 = vpop.permute.xlu0 %1406
          %v1409 = vmul.f32 %v1387, %v1407
          %v1410 = vstv %s1356
          %vm1411 = vcmp.lt.s32.totalorder %v1410, %v423
          %v1412 = vsel %vm1411, 1, 0
          %1413 = vset.pattern.permute.xlu0 0
          %1414 = vperm.xlu0 %1413, %v1412
          %v1415 = vpop.permute.xlu0 %1414
          %vm1416 = vcmp.eq.s32.totalorder %v1415, 1
          %v1417 = vsel %vm1416, %v1409, 0.0
          %1418 = vrot.lane.b32.xlu0 %v1357, 96
          %v1419 = vpop.permute.xlu0 %1418
          %v1421 = vsel %vm1416, %v1409, %v1419
          %1423 = vrot.lane.b32.xlu0 %v1421, 32
          %v1424 = vpop.permute.xlu0 %1423
          %1426 = vst.msk [vmem:[#allocation2] sm:$0xff] %vm524, %v1424
          %v1427 = vsel %vm1416, %v1403, %v1391
          %1429 = vrot.lane.b32.xlu0 %v1427, 96
          %v1430 = vpop.permute.xlu0 %1429
          %1432 = vst.msk [vmem:[#allocation3] sm:$0xff] %vm524, %v1430
          %v1434 = vrot.slane %v1417, 1
          %v1435 = vrot.slane %v1417, 2
          %v1436 = vrot.slane %v1417, 3
          %v1437 = vrot.slane %v1417, 4
          %v1438 = vrot.slane %v1417, 5
          %v1439 = vrot.slane %v1417, 6
          %v1440 = vrot.slane %v1417, 7
          %v1441 = vperm.slane %v1417, 0
          %v1442 = vperm.slane %v1434, 0
          %v1443 = vperm.slane %v1435, 0
          %v1444 = vperm.slane %v1436, 0
          %v1445 = vperm.slane %v1437, 0
          %v1446 = vperm.slane %v1438, 0
          %v1447 = vperm.slane %v1439, 0
          %v1448 = vperm.slane %v1440, 0
          %1449 = vrot.lane.b32.xlu0 %v1441, 32
          %v1450 = vpop.permute.xlu0 %1449
          %1451 = vrot.lane.b32.xlu0 %v1442, 32
          %v1452 = vpop.permute.xlu0 %1451
          %1453 = vrot.lane.b32.xlu0 %v1443, 32
          %v1454 = vpop.permute.xlu0 %1453
          %1455 = vrot.lane.b32.xlu0 %v1444, 32
          %v1456 = vpop.permute.xlu0 %1455
          %1457 = vrot.lane.b32.xlu0 %v1445, 32
          %v1458 = vpop.permute.xlu0 %1457
          %1459 = vrot.lane.b32.xlu0 %v1446, 32
          %v1460 = vpop.permute.xlu0 %1459
          %1461 = vrot.lane.b32.xlu0 %v1447, 32
          %v1462 = vpop.permute.xlu0 %1461
          %1463 = vrot.lane.b32.xlu0 %v1448, 32
          %v1464 = vpop.permute.xlu0 %1463
          %1473 = vst.msk [vmem:[%s359 + $0x6] sm:$0x1] %vm638, %v1450
          %1474 = vst.msk [vmem:[%s359 + $0xe] sm:$0x1] %vm638, %v1452
          %1475 = vst.msk [vmem:[%s359 + $0x16] sm:$0x1] %vm638, %v1454
          %1476 = vst.msk [vmem:[%s359 + $0x1e] sm:$0x1] %vm638, %v1456
          %1477 = vst.msk [vmem:[%s359 + $0x26] sm:$0x1] %vm638, %v1458
          %1478 = vst.msk [vmem:[%s359 + $0x2e] sm:$0x1] %vm638, %v1460
          %1479 = vst.msk [vmem:[%s359 + $0x36] sm:$0x1] %vm638, %v1462
          %1480 = vst.msk [vmem:[%s359 + $0x3e] sm:$0x1] %vm638, %v1464
          %v1481 = vld [vmem:[%s409] sm:$0xff]
          %1482 = vrot.lane.b32.xlu0 %v1417, 32
          %v1483 = vpop.permute.xlu0 %1482
          %v1485 = vadd.f32 %v1481, %v1483
          %1486 = vst.msk [vmem:[%s409] sm:$0xff] %vm524, %v1485
          %v1487 = vld [vmem:[%s413] sm:$0xff]
          %v1488 = vmul.f32 %v1417, %v1417
          %1490 = vrot.lane.b32.xlu0 %v1488, 32
          %v1491 = vpop.permute.xlu0 %1490
          %v1493 = vadd.f32 %v1487, %v1491
          %1494 = vst.msk [vmem:[%s413] sm:$0xff] %vm524, %v1493
          %s1495 = sadd.s32 %s520, 7
          %v1496 = vld [vmem:[#allocation2] sm:$0xff]
          %v1497 = vld [vmem:[#allocation3] sm:$0xff]
          %v1498 = vld [vmem:[#allocation4 + $0x38] sm:$0xff]
          %v1500 = vsel %vm524, %v1496, 0
          %1502 = vmatpush.msra.mxu0 0.0
          %1503 = vmatpush.msra.mxu0 0.0
          %1504 = vmatpush.msra.mxu0 0.0
          %1505 = vmatpush.msra.mxu0 0.0
          %1506 = vmatpush.msra.mxu0 0.0
          %1507 = vmatpush.msra.mxu0 0.0
          %1508 = vmatpush.msra.mxu0 0.0
          %1509 = vmatpush.msra.mxu0 0.0
          %1510 = vmatpush.msra.mxu0 0.0
          %1511 = vmatpush.msra.mxu0 0.0
          %1512 = vmatpush.msra.mxu0 0.0
          %1513 = vmatpush.msra.mxu0 0.0
          %1514 = vmatpush.msra.mxu0 %v427
          %1515 = vmatpush.msra.mxu0 %v426
          %1516 = vmatpush.msra.mxu0 %v425
          %1517 = vmatpush.msra.mxu0 %v424
          %1518 = vmatmul.f32.gmra.mxu0 %v1500
          %v1519 = vpop.f32.mrf.mxu0
          %v1520 = vadd.f32 0.0, %v1519
          %1521 = vdwg.mxu0
          %v1522 = vadd.f32 %v1498, %v1520
          %v1523 = vmul.f32 %v1522, 0.5
          %v1524 = vtanh.pop %v1523
          %v1525 = vmul.f32 %v1524, 0.5
          %v1526 = vadd.f32 %v1525, 0.5
          %v1527 = vtanh.pop %v1522
          %1529 = vrot.lane.b32.xlu0 %v1497, 32
          %v1530 = vpop.permute.xlu0 %1529
          %v1532 = vmul.f32 %v1526, %v1530
          %1534 = vrot.lane.b32.xlu0 %v1527, 64
          %v1535 = vpop.permute.xlu0 %1534
          %v1537 = vmul.f32 %v1526, %v1535
          %1539 = vrot.lane.b32.xlu0 %v1537, 32
          %v1540 = vpop.permute.xlu0 %1539
          %v1542 = vadd.f32 %v1532, %v1540
          %v1543 = vtanh.pop %v1542
          %1545 = vrot.lane.b32.xlu0 %v1543, 64
          %v1546 = vpop.permute.xlu0 %1545
          %v1548 = vmul.f32 %v1526, %v1546
          %v1549 = vstv %s1495
          %vm1550 = vcmp.lt.s32.totalorder %v1549, %v423
          %v1551 = vsel %vm1550, 1, 0
          %1552 = vset.pattern.permute.xlu0 0
          %1553 = vperm.xlu0 %1552, %v1551
          %v1554 = vpop.permute.xlu0 %1553
          %vm1555 = vcmp.eq.s32.totalorder %v1554, 1
          %v1556 = vsel %vm1555, %v1548, 0.0
          %1557 = vrot.lane.b32.xlu0 %v1496, 96
          %v1558 = vpop.permute.xlu0 %1557
          %v1560 = vsel %vm1555, %v1548, %v1558
          %1562 = vrot.lane.b32.xlu0 %v1560, 32
          %v1563 = vpop.permute.xlu0 %1562
          %1565 = vst.msk [vmem:[#allocation2] sm:$0xff] %vm524, %v1563
          %v1566 = vsel %vm1555, %v1542, %v1530
          %1568 = vrot.lane.b32.xlu0 %v1566, 96
          %v1569 = vpop.permute.xlu0 %1568
          %1571 = vst.msk [vmem:[#allocation3] sm:$0xff] %vm524, %v1569
          %v1573 = vrot.slane %v1556, 1
          %v1574 = vrot.slane %v1556, 2
          %v1575 = vrot.slane %v1556, 3
          %v1576 = vrot.slane %v1556, 4
          %v1577 = vrot.slane %v1556, 5
          %v1578 = vrot.slane %v1556, 6
          %v1579 = vrot.slane %v1556, 7
          %v1580 = vperm.slane %v1556, 0
          %v1581 = vperm.slane %v1573, 0
          %v1582 = vperm.slane %v1574, 0
          %v1583 = vperm.slane %v1575, 0
          %v1584 = vperm.slane %v1576, 0
          %v1585 = vperm.slane %v1577, 0
          %v1586 = vperm.slane %v1578, 0
          %v1587 = vperm.slane %v1579, 0
          %1588 = vrot.lane.b32.xlu0 %v1580, 32
          %v1589 = vpop.permute.xlu0 %1588
          %1590 = vrot.lane.b32.xlu0 %v1581, 32
          %v1591 = vpop.permute.xlu0 %1590
          %1592 = vrot.lane.b32.xlu0 %v1582, 32
          %v1593 = vpop.permute.xlu0 %1592
          %1594 = vrot.lane.b32.xlu0 %v1583, 32
          %v1595 = vpop.permute.xlu0 %1594
          %1596 = vrot.lane.b32.xlu0 %v1584, 32
          %v1597 = vpop.permute.xlu0 %1596
          %1598 = vrot.lane.b32.xlu0 %v1585, 32
          %v1599 = vpop.permute.xlu0 %1598
          %1600 = vrot.lane.b32.xlu0 %v1586, 32
          %v1601 = vpop.permute.xlu0 %1600
          %1602 = vrot.lane.b32.xlu0 %v1587, 32
          %v1603 = vpop.permute.xlu0 %1602
          %1612 = vst.msk [vmem:[%s359 + $0x7] sm:$0x1] %vm638, %v1589
          %1613 = vst.msk [vmem:[%s359 + $0xf] sm:$0x1] %vm638, %v1591
          %1614 = vst.msk [vmem:[%s359 + $0x17] sm:$0x1] %vm638, %v1593
          %1615 = vst.msk [vmem:[%s359 + $0x1f] sm:$0x1] %vm638, %v1595
          %1616 = vst.msk [vmem:[%s359 + $0x27] sm:$0x1] %vm638, %v1597
          %1617 = vst.msk [vmem:[%s359 + $0x2f] sm:$0x1] %vm638, %v1599
          %1618 = vst.msk [vmem:[%s359 + $0x37] sm:$0x1] %vm638, %v1601
          %1619 = vst.msk [vmem:[%s359 + $0x3f] sm:$0x1] %vm638, %v1603
          %v1620 = vld [vmem:[%s409] sm:$0xff]
          %1621 = vrot.lane.b32.xlu0 %v1556, 32
          %v1622 = vpop.permute.xlu0 %1621
          %v1624 = vadd.f32 %v1620, %v1622
          %1625 = vst.msk [vmem:[%s409] sm:$0xff] %vm524, %v1624
          %v1626 = vld [vmem:[%s413] sm:$0xff]
          %v1627 = vmul.f32 %v1556, %v1556
          %1629 = vrot.lane.b32.xlu0 %v1627, 32
          %v1630 = vpop.permute.xlu0 %1629
          %v1632 = vadd.f32 %v1626, %v1630
          %1633 = vst.msk [vmem:[%s413] sm:$0xff] %vm524, %v1632
        $region48: #{rnn_bn_act_forward.2} parent=39 // pred_fallthru
          _
        %p1634 = scmp.eq.s32.totalorder %s23, 1
        // Predicated region
        $region49: #{rnn_bn_act_forward.2} parent=39 // pred_check
          %p1635 = pneg %p1634
        $region50: #{rnn_bn_act_forward.2} parent=39 // pred_check_branch
          %1637 = sbr.rel (%p1635) target = $region52
        $region51: #{rnn_bn_act_forward.2} parent=39 // pred_region
          %s1638 = ssub.s32 1, %s24
          %s1639 = smul.u32 %s1638, 8
          %s1640 = sadd.s32 %s1639, 7
          %v1641 = vld [vmem:[#allocation2] sm:$0xff]
          %v1642 = vld [vmem:[#allocation3] sm:$0xff]
          %v1643 = vld [vmem:[#allocation4 + $0x38] sm:$0xff]
          %vm1644 = vcmask 261120
          %v1646 = vsel %vm1644, %v1641, 0
          %1648 = vmatpush.msra.mxu0 0.0
          %1649 = vmatpush.msra.mxu0 0.0
          %1650 = vmatpush.msra.mxu0 0.0
          %1651 = vmatpush.msra.mxu0 0.0
          %1652 = vmatpush.msra.mxu0 0.0
          %1653 = vmatpush.msra.mxu0 0.0
          %1654 = vmatpush.msra.mxu0 0.0
          %1655 = vmatpush.msra.mxu0 0.0
          %1656 = vmatpush.msra.mxu0 0.0
          %1657 = vmatpush.msra.mxu0 0.0
          %1658 = vmatpush.msra.mxu0 0.0
          %1659 = vmatpush.msra.mxu0 0.0
          %1660 = vmatpush.msra.mxu0 %v427
          %1661 = vmatpush.msra.mxu0 %v426
          %1662 = vmatpush.msra.mxu0 %v425
          %1663 = vmatpush.msra.mxu0 %v424
          %1664 = vmatmul.f32.gmra.mxu0 %v1646
          %v1665 = vpop.f32.mrf.mxu0
          %v1666 = vadd.f32 0.0, %v1665
          %1667 = vdwg.mxu0
          %v1668 = vadd.f32 %v1643, %v1666
          %v1669 = vmul.f32 %v1668, 0.5
          %v1670 = vtanh.pop %v1669
          %v1671 = vmul.f32 %v1670, 0.5
          %v1672 = vadd.f32 %v1671, 0.5
          %v1673 = vtanh.pop %v1668
          %1675 = vrot.lane.b32.xlu0 %v1642, 32
          %v1676 = vpop.permute.xlu0 %1675
          %v1678 = vmul.f32 %v1672, %v1676
          %1680 = vrot.lane.b32.xlu0 %v1673, 64
          %v1681 = vpop.permute.xlu0 %1680
          %v1683 = vmul.f32 %v1672, %v1681
          %1685 = vrot.lane.b32.xlu0 %v1683, 32
          %v1686 = vpop.permute.xlu0 %1685
          %v1688 = vadd.f32 %v1678, %v1686
          %v1689 = vtanh.pop %v1688
          %1691 = vrot.lane.b32.xlu0 %v1689, 64
          %v1692 = vpop.permute.xlu0 %1691
          %v1694 = vmul.f32 %v1672, %v1692
          %v1695 = vstv %s1640
          %vm1696 = vcmp.lt.s32.totalorder %v1695, %v423
          %v1697 = vsel %vm1696, 1, 0
          %1698 = vset.pattern.permute.xlu0 0
          %1699 = vperm.xlu0 %1698, %v1697
          %v1700 = vpop.permute.xlu0 %1699
          %vm1701 = vcmp.eq.s32.totalorder %v1700, 1
          %v1702 = vsel %vm1701, %v1694, 0.0
          %1703 = vrot.lane.b32.xlu0 %v1641, 96
          %v1704 = vpop.permute.xlu0 %1703
          %v1706 = vsel %vm1701, %v1694, %v1704
          %1708 = vrot.lane.b32.xlu0 %v1706, 32
          %v1709 = vpop.permute.xlu0 %1708
          %1711 = vst.msk [vmem:[#allocation2] sm:$0xff] %vm1644, %v1709
          %v1712 = vsel %vm1701, %v1688, %v1676
          %1714 = vrot.lane.b32.xlu0 %v1712, 96
          %v1715 = vpop.permute.xlu0 %1714
          %1717 = vst.msk [vmem:[#allocation3] sm:$0xff] %vm1644, %v1715
          %v1719 = vrot.slane %v1702, 1
          %v1720 = vrot.slane %v1702, 2
          %v1721 = vrot.slane %v1702, 3
          %v1722 = vrot.slane %v1702, 4
          %v1723 = vrot.slane %v1702, 5
          %v1724 = vrot.slane %v1702, 6
          %v1725 = vrot.slane %v1702, 7
          %v1726 = vperm.slane %v1702, 0
          %v1727 = vperm.slane %v1719, 0
          %v1728 = vperm.slane %v1720, 0
          %v1729 = vperm.slane %v1721, 0
          %v1730 = vperm.slane %v1722, 0
          %v1731 = vperm.slane %v1723, 0
          %v1732 = vperm.slane %v1724, 0
          %v1733 = vperm.slane %v1725, 0
          %1734 = vrot.lane.b32.xlu0 %v1726, 32
          %v1735 = vpop.permute.xlu0 %1734
          %1736 = vrot.lane.b32.xlu0 %v1727, 32
          %v1737 = vpop.permute.xlu0 %1736
          %1738 = vrot.lane.b32.xlu0 %v1728, 32
          %v1739 = vpop.permute.xlu0 %1738
          %1740 = vrot.lane.b32.xlu0 %v1729, 32
          %v1741 = vpop.permute.xlu0 %1740
          %1742 = vrot.lane.b32.xlu0 %v1730, 32
          %v1743 = vpop.permute.xlu0 %1742
          %1744 = vrot.lane.b32.xlu0 %v1731, 32
          %v1745 = vpop.permute.xlu0 %1744
          %1746 = vrot.lane.b32.xlu0 %v1732, 32
          %v1747 = vpop.permute.xlu0 %1746
          %1748 = vrot.lane.b32.xlu0 %v1733, 32
          %v1749 = vpop.permute.xlu0 %1748
          %vm1758 = vcmask 253952
          %1759 = vst.msk [vmem:[%s359 + $0x7] sm:$0x1] %vm1758, %v1735
          %1760 = vst.msk [vmem:[%s359 + $0xf] sm:$0x1] %vm1758, %v1737
          %1761 = vst.msk [vmem:[%s359 + $0x17] sm:$0x1] %vm1758, %v1739
          %1762 = vst.msk [vmem:[%s359 + $0x1f] sm:$0x1] %vm1758, %v1741
          %1763 = vst.msk [vmem:[%s359 + $0x27] sm:$0x1] %vm1758, %v1743
          %1764 = vst.msk [vmem:[%s359 + $0x2f] sm:$0x1] %vm1758, %v1745
          %1765 = vst.msk [vmem:[%s359 + $0x37] sm:$0x1] %vm1758, %v1747
          %1766 = vst.msk [vmem:[%s359 + $0x3f] sm:$0x1] %vm1758, %v1749
          %v1767 = vld [vmem:[%s409] sm:$0xff]
          %1768 = vrot.lane.b32.xlu0 %v1702, 32
          %v1769 = vpop.permute.xlu0 %1768
          %v1771 = vadd.f32 %v1767, %v1769
          %1772 = vst.msk [vmem:[%s409] sm:$0xff] %vm1644, %v1771
          %v1773 = vld [vmem:[%s413] sm:$0xff]
          %v1774 = vmul.f32 %v1702, %v1702
          %1776 = vrot.lane.b32.xlu0 %v1774, 32
          %v1777 = vpop.permute.xlu0 %1776
          %v1779 = vadd.f32 %v1773, %v1777
          %1780 = vst.msk [vmem:[%s413] sm:$0xff] %vm1644, %v1779
          %s1781 = sadd.s32 %s1639, 6
          %v1782 = vld [vmem:[#allocation2] sm:$0xff]
          %v1783 = vld [vmem:[#allocation3] sm:$0xff]
          %v1784 = vld [vmem:[#allocation4 + $0x30] sm:$0xff]
          %v1786 = vsel %vm1644, %v1782, 0
          %1788 = vmatpush.msra.mxu0 0.0
          %1789 = vmatpush.msra.mxu0 0.0
          %1790 = vmatpush.msra.mxu0 0.0
          %1791 = vmatpush.msra.mxu0 0.0
          %1792 = vmatpush.msra.mxu0 0.0
          %1793 = vmatpush.msra.mxu0 0.0
          %1794 = vmatpush.msra.mxu0 0.0
          %1795 = vmatpush.msra.mxu0 0.0
          %1796 = vmatpush.msra.mxu0 0.0
          %1797 = vmatpush.msra.mxu0 0.0
          %1798 = vmatpush.msra.mxu0 0.0
          %1799 = vmatpush.msra.mxu0 0.0
          %1800 = vmatpush.msra.mxu0 %v427
          %1801 = vmatpush.msra.mxu0 %v426
          %1802 = vmatpush.msra.mxu0 %v425
          %1803 = vmatpush.msra.mxu0 %v424
          %1804 = vmatmul.f32.gmra.mxu0 %v1786
          %v1805 = vpop.f32.mrf.mxu0
          %v1806 = vadd.f32 0.0, %v1805
          %1807 = vdwg.mxu0
          %v1808 = vadd.f32 %v1784, %v1806
          %v1809 = vmul.f32 %v1808, 0.5
          %v1810 = vtanh.pop %v1809
          %v1811 = vmul.f32 %v1810, 0.5
          %v1812 = vadd.f32 %v1811, 0.5
          %v1813 = vtanh.pop %v1808
          %1815 = vrot.lane.b32.xlu0 %v1783, 32
          %v1816 = vpop.permute.xlu0 %1815
          %v1818 = vmul.f32 %v1812, %v1816
          %1820 = vrot.lane.b32.xlu0 %v1813, 64
          %v1821 = vpop.permute.xlu0 %1820
          %v1823 = vmul.f32 %v1812, %v1821
          %1825 = vrot.lane.b32.xlu0 %v1823, 32
          %v1826 = vpop.permute.xlu0 %1825
          %v1828 = vadd.f32 %v1818, %v1826
          %v1829 = vtanh.pop %v1828
          %1831 = vrot.lane.b32.xlu0 %v1829, 64
          %v1832 = vpop.permute.xlu0 %1831
          %v1834 = vmul.f32 %v1812, %v1832
          %v1835 = vstv %s1781
          %vm1836 = vcmp.lt.s32.totalorder %v1835, %v423
          %v1837 = vsel %vm1836, 1, 0
          %1838 = vset.pattern.permute.xlu0 0
          %1839 = vperm.xlu0 %1838, %v1837
          %v1840 = vpop.permute.xlu0 %1839
          %vm1841 = vcmp.eq.s32.totalorder %v1840, 1
          %v1842 = vsel %vm1841, %v1834, 0.0
          %1843 = vrot.lane.b32.xlu0 %v1782, 96
          %v1844 = vpop.permute.xlu0 %1843
          %v1846 = vsel %vm1841, %v1834, %v1844
          %1848 = vrot.lane.b32.xlu0 %v1846, 32
          %v1849 = vpop.permute.xlu0 %1848
          %1851 = vst.msk [vmem:[#allocation2] sm:$0xff] %vm1644, %v1849
          %v1852 = vsel %vm1841, %v1828, %v1816
          %1854 = vrot.lane.b32.xlu0 %v1852, 96
          %v1855 = vpop.permute.xlu0 %1854
          %1857 = vst.msk [vmem:[#allocation3] sm:$0xff] %vm1644, %v1855
          %v1859 = vrot.slane %v1842, 1
          %v1860 = vrot.slane %v1842, 2
          %v1861 = vrot.slane %v1842, 3
          %v1862 = vrot.slane %v1842, 4
          %v1863 = vrot.slane %v1842, 5
          %v1864 = vrot.slane %v1842, 6
          %v1865 = vrot.slane %v1842, 7
          %v1866 = vperm.slane %v1842, 0
          %v1867 = vperm.slane %v1859, 0
          %v1868 = vperm.slane %v1860, 0
          %v1869 = vperm.slane %v1861, 0
          %v1870 = vperm.slane %v1862, 0
          %v1871 = vperm.slane %v1863, 0
          %v1872 = vperm.slane %v1864, 0
          %v1873 = vperm.slane %v1865, 0
          %1874 = vrot.lane.b32.xlu0 %v1866, 32
          %v1875 = vpop.permute.xlu0 %1874
          %1876 = vrot.lane.b32.xlu0 %v1867, 32
          %v1877 = vpop.permute.xlu0 %1876
          %1878 = vrot.lane.b32.xlu0 %v1868, 32
          %v1879 = vpop.permute.xlu0 %1878
          %1880 = vrot.lane.b32.xlu0 %v1869, 32
          %v1881 = vpop.permute.xlu0 %1880
          %1882 = vrot.lane.b32.xlu0 %v1870, 32
          %v1883 = vpop.permute.xlu0 %1882
          %1884 = vrot.lane.b32.xlu0 %v1871, 32
          %v1885 = vpop.permute.xlu0 %1884
          %1886 = vrot.lane.b32.xlu0 %v1872, 32
          %v1887 = vpop.permute.xlu0 %1886
          %1888 = vrot.lane.b32.xlu0 %v1873, 32
          %v1889 = vpop.permute.xlu0 %1888
          %1898 = vst.msk [vmem:[%s359 + $0x6] sm:$0x1] %vm1758, %v1875
          %1899 = vst.msk [vmem:[%s359 + $0xe] sm:$0x1] %vm1758, %v1877
          %1900 = vst.msk [vmem:[%s359 + $0x16] sm:$0x1] %vm1758, %v1879
          %1901 = vst.msk [vmem:[%s359 + $0x1e] sm:$0x1] %vm1758, %v1881
          %1902 = vst.msk [vmem:[%s359 + $0x26] sm:$0x1] %vm1758, %v1883
          %1903 = vst.msk [vmem:[%s359 + $0x2e] sm:$0x1] %vm1758, %v1885
          %1904 = vst.msk [vmem:[%s359 + $0x36] sm:$0x1] %vm1758, %v1887
          %1905 = vst.msk [vmem:[%s359 + $0x3e] sm:$0x1] %vm1758, %v1889
          %v1906 = vld [vmem:[%s409] sm:$0xff]
          %1907 = vrot.lane.b32.xlu0 %v1842, 32
          %v1908 = vpop.permute.xlu0 %1907
          %v1910 = vadd.f32 %v1906, %v1908
          %1911 = vst.msk [vmem:[%s409] sm:$0xff] %vm1644, %v1910
          %v1912 = vld [vmem:[%s413] sm:$0xff]
          %v1913 = vmul.f32 %v1842, %v1842
          %1915 = vrot.lane.b32.xlu0 %v1913, 32
          %v1916 = vpop.permute.xlu0 %1915
          %v1918 = vadd.f32 %v1912, %v1916
          %1919 = vst.msk [vmem:[%s413] sm:$0xff] %vm1644, %v1918
          %s1920 = sadd.s32 %s1639, 5
          %v1921 = vld [vmem:[#allocation2] sm:$0xff]
          %v1922 = vld [vmem:[#allocation3] sm:$0xff]
          %v1923 = vld [vmem:[#allocation4 + $0x28] sm:$0xff]
          %v1925 = vsel %vm1644, %v1921, 0
          %1927 = vmatpush.msra.mxu0 0.0
          %1928 = vmatpush.msra.mxu0 0.0
          %1929 = vmatpush.msra.mxu0 0.0
          %1930 = vmatpush.msra.mxu0 0.0
          %1931 = vmatpush.msra.mxu0 0.0
          %1932 = vmatpush.msra.mxu0 0.0
          %1933 = vmatpush.msra.mxu0 0.0
          %1934 = vmatpush.msra.mxu0 0.0
          %1935 = vmatpush.msra.mxu0 0.0
          %1936 = vmatpush.msra.mxu0 0.0
          %1937 = vmatpush.msra.mxu0 0.0
          %1938 = vmatpush.msra.mxu0 0.0
          %1939 = vmatpush.msra.mxu0 %v427
          %1940 = vmatpush.msra.mxu0 %v426
          %1941 = vmatpush.msra.mxu0 %v425
          %1942 = vmatpush.msra.mxu0 %v424
          %1943 = vmatmul.f32.gmra.mxu0 %v1925
          %v1944 = vpop.f32.mrf.mxu0
          %v1945 = vadd.f32 0.0, %v1944
          %1946 = vdwg.mxu0
          %v1947 = vadd.f32 %v1923, %v1945
          %v1948 = vmul.f32 %v1947, 0.5
          %v1949 = vtanh.pop %v1948
          %v1950 = vmul.f32 %v1949, 0.5
          %v1951 = vadd.f32 %v1950, 0.5
          %v1952 = vtanh.pop %v1947
          %1954 = vrot.lane.b32.xlu0 %v1922, 32
          %v1955 = vpop.permute.xlu0 %1954
          %v1957 = vmul.f32 %v1951, %v1955
          %1959 = vrot.lane.b32.xlu0 %v1952, 64
          %v1960 = vpop.permute.xlu0 %1959
          %v1962 = vmul.f32 %v1951, %v1960
          %1964 = vrot.lane.b32.xlu0 %v1962, 32
          %v1965 = vpop.permute.xlu0 %1964
          %v1967 = vadd.f32 %v1957, %v1965
          %v1968 = vtanh.pop %v1967
          %1970 = vrot.lane.b32.xlu0 %v1968, 64
          %v1971 = vpop.permute.xlu0 %1970
          %v1973 = vmul.f32 %v1951, %v1971
          %v1974 = vstv %s1920
          %vm1975 = vcmp.lt.s32.totalorder %v1974, %v423
          %v1976 = vsel %vm1975, 1, 0
          %1977 = vset.pattern.permute.xlu0 0
          %1978 = vperm.xlu0 %1977, %v1976
          %v1979 = vpop.permute.xlu0 %1978
          %vm1980 = vcmp.eq.s32.totalorder %v1979, 1
          %v1981 = vsel %vm1980, %v1973, 0.0
          %1982 = vrot.lane.b32.xlu0 %v1921, 96
          %v1983 = vpop.permute.xlu0 %1982
          %v1985 = vsel %vm1980, %v1973, %v1983
          %1987 = vrot.lane.b32.xlu0 %v1985, 32
          %v1988 = vpop.permute.xlu0 %1987
          %1990 = vst.msk [vmem:[#allocation2] sm:$0xff] %vm1644, %v1988
          %v1991 = vsel %vm1980, %v1967, %v1955
          %1993 = vrot.lane.b32.xlu0 %v1991, 96
          %v1994 = vpop.permute.xlu0 %1993
          %1996 = vst.msk [vmem:[#allocation3] sm:$0xff] %vm1644, %v1994
          %v1998 = vrot.slane %v1981, 1
          %v1999 = vrot.slane %v1981, 2
          %v2000 = vrot.slane %v1981, 3
          %v2001 = vrot.slane %v1981, 4
          %v2002 = vrot.slane %v1981, 5
          %v2003 = vrot.slane %v1981, 6
          %v2004 = vrot.slane %v1981, 7
          %v2005 = vperm.slane %v1981, 0
          %v2006 = vperm.slane %v1998, 0
          %v2007 = vperm.slane %v1999, 0
          %v2008 = vperm.slane %v2000, 0
          %v2009 = vperm.slane %v2001, 0
          %v2010 = vperm.slane %v2002, 0
          %v2011 = vperm.slane %v2003, 0
          %v2012 = vperm.slane %v2004, 0
          %2013 = vrot.lane.b32.xlu0 %v2005, 32
          %v2014 = vpop.permute.xlu0 %2013
          %2015 = vrot.lane.b32.xlu0 %v2006, 32
          %v2016 = vpop.permute.xlu0 %2015
          %2017 = vrot.lane.b32.xlu0 %v2007, 32
          %v2018 = vpop.permute.xlu0 %2017
          %2019 = vrot.lane.b32.xlu0 %v2008, 32
          %v2020 = vpop.permute.xlu0 %2019
          %2021 = vrot.lane.b32.xlu0 %v2009, 32
          %v2022 = vpop.permute.xlu0 %2021
          %2023 = vrot.lane.b32.xlu0 %v2010, 32
          %v2024 = vpop.permute.xlu0 %2023
          %2025 = vrot.lane.b32.xlu0 %v2011, 32
          %v2026 = vpop.permute.xlu0 %2025
          %2027 = vrot.lane.b32.xlu0 %v2012, 32
          %v2028 = vpop.permute.xlu0 %2027
          %2037 = vst.msk [vmem:[%s359 + $0x5] sm:$0x1] %vm1758, %v2014
          %2038 = vst.msk [vmem:[%s359 + $0xd] sm:$0x1] %vm1758, %v2016
          %2039 = vst.msk [vmem:[%s359 + $0x15] sm:$0x1] %vm1758, %v2018
          %2040 = vst.msk [vmem:[%s359 + $0x1d] sm:$0x1] %vm1758, %v2020
          %2041 = vst.msk [vmem:[%s359 + $0x25] sm:$0x1] %vm1758, %v2022
          %2042 = vst.msk [vmem:[%s359 + $0x2d] sm:$0x1] %vm1758, %v2024
          %2043 = vst.msk [vmem:[%s359 + $0x35] sm:$0x1] %vm1758, %v2026
          %2044 = vst.msk [vmem:[%s359 + $0x3d] sm:$0x1] %vm1758, %v2028
          %v2045 = vld [vmem:[%s409] sm:$0xff]
          %2046 = vrot.lane.b32.xlu0 %v1981, 32
          %v2047 = vpop.permute.xlu0 %2046
          %v2049 = vadd.f32 %v2045, %v2047
          %2050 = vst.msk [vmem:[%s409] sm:$0xff] %vm1644, %v2049
          %v2051 = vld [vmem:[%s413] sm:$0xff]
          %v2052 = vmul.f32 %v1981, %v1981
          %2054 = vrot.lane.b32.xlu0 %v2052, 32
          %v2055 = vpop.permute.xlu0 %2054
          %v2057 = vadd.f32 %v2051, %v2055
          %2058 = vst.msk [vmem:[%s413] sm:$0xff] %vm1644, %v2057
          %s2059 = sadd.s32 %s1639, 4
          %v2060 = vld [vmem:[#allocation2] sm:$0xff]
          %v2061 = vld [vmem:[#allocation3] sm:$0xff]
          %v2062 = vld [vmem:[#allocation4 + $0x20] sm:$0xff]
          %v2064 = vsel %vm1644, %v2060, 0
          %2066 = vmatpush.msra.mxu0 0.0
          %2067 = vmatpush.msra.mxu0 0.0
          %2068 = vmatpush.msra.mxu0 0.0
          %2069 = vmatpush.msra.mxu0 0.0
          %2070 = vmatpush.msra.mxu0 0.0
          %2071 = vmatpush.msra.mxu0 0.0
          %2072 = vmatpush.msra.mxu0 0.0
          %2073 = vmatpush.msra.mxu0 0.0
          %2074 = vmatpush.msra.mxu0 0.0
          %2075 = vmatpush.msra.mxu0 0.0
          %2076 = vmatpush.msra.mxu0 0.0
          %2077 = vmatpush.msra.mxu0 0.0
          %2078 = vmatpush.msra.mxu0 %v427
          %2079 = vmatpush.msra.mxu0 %v426
          %2080 = vmatpush.msra.mxu0 %v425
          %2081 = vmatpush.msra.mxu0 %v424
          %2082 = vmatmul.f32.gmra.mxu0 %v2064
          %v2083 = vpop.f32.mrf.mxu0
          %v2084 = vadd.f32 0.0, %v2083
          %2085 = vdwg.mxu0
          %v2086 = vadd.f32 %v2062, %v2084
          %v2087 = vmul.f32 %v2086, 0.5
          %v2088 = vtanh.pop %v2087
          %v2089 = vmul.f32 %v2088, 0.5
          %v2090 = vadd.f32 %v2089, 0.5
          %v2091 = vtanh.pop %v2086
          %2093 = vrot.lane.b32.xlu0 %v2061, 32
          %v2094 = vpop.permute.xlu0 %2093
          %v2096 = vmul.f32 %v2090, %v2094
          %2098 = vrot.lane.b32.xlu0 %v2091, 64
          %v2099 = vpop.permute.xlu0 %2098
          %v2101 = vmul.f32 %v2090, %v2099
          %2103 = vrot.lane.b32.xlu0 %v2101, 32
          %v2104 = vpop.permute.xlu0 %2103
          %v2106 = vadd.f32 %v2096, %v2104
          %v2107 = vtanh.pop %v2106
          %2109 = vrot.lane.b32.xlu0 %v2107, 64
          %v2110 = vpop.permute.xlu0 %2109
          %v2112 = vmul.f32 %v2090, %v2110
          %v2113 = vstv %s2059
          %vm2114 = vcmp.lt.s32.totalorder %v2113, %v423
          %v2115 = vsel %vm2114, 1, 0
          %2116 = vset.pattern.permute.xlu0 0
          %2117 = vperm.xlu0 %2116, %v2115
          %v2118 = vpop.permute.xlu0 %2117
          %vm2119 = vcmp.eq.s32.totalorder %v2118, 1
          %v2120 = vsel %vm2119, %v2112, 0.0
          %2121 = vrot.lane.b32.xlu0 %v2060, 96
          %v2122 = vpop.permute.xlu0 %2121
          %v2124 = vsel %vm2119, %v2112, %v2122
          %2126 = vrot.lane.b32.xlu0 %v2124, 32
          %v2127 = vpop.permute.xlu0 %2126
          %2129 = vst.msk [vmem:[#allocation2] sm:$0xff] %vm1644, %v2127
          %v2130 = vsel %vm2119, %v2106, %v2094
          %2132 = vrot.lane.b32.xlu0 %v2130, 96
          %v2133 = vpop.permute.xlu0 %2132
          %2135 = vst.msk [vmem:[#allocation3] sm:$0xff] %vm1644, %v2133
          %v2137 = vrot.slane %v2120, 1
          %v2138 = vrot.slane %v2120, 2
          %v2139 = vrot.slane %v2120, 3
          %v2140 = vrot.slane %v2120, 4
          %v2141 = vrot.slane %v2120, 5
          %v2142 = vrot.slane %v2120, 6
          %v2143 = vrot.slane %v2120, 7
          %v2144 = vperm.slane %v2120, 0
          %v2145 = vperm.slane %v2137, 0
          %v2146 = vperm.slane %v2138, 0
          %v2147 = vperm.slane %v2139, 0
          %v2148 = vperm.slane %v2140, 0
          %v2149 = vperm.slane %v2141, 0
          %v2150 = vperm.slane %v2142, 0
          %v2151 = vperm.slane %v2143, 0
          %2152 = vrot.lane.b32.xlu0 %v2144, 32
          %v2153 = vpop.permute.xlu0 %2152
          %2154 = vrot.lane.b32.xlu0 %v2145, 32
          %v2155 = vpop.permute.xlu0 %2154
          %2156 = vrot.lane.b32.xlu0 %v2146, 32
          %v2157 = vpop.permute.xlu0 %2156
          %2158 = vrot.lane.b32.xlu0 %v2147, 32
          %v2159 = vpop.permute.xlu0 %2158
          %2160 = vrot.lane.b32.xlu0 %v2148, 32
          %v2161 = vpop.permute.xlu0 %2160
          %2162 = vrot.lane.b32.xlu0 %v2149, 32
          %v2163 = vpop.permute.xlu0 %2162
          %2164 = vrot.lane.b32.xlu0 %v2150, 32
          %v2165 = vpop.permute.xlu0 %2164
          %2166 = vrot.lane.b32.xlu0 %v2151, 32
          %v2167 = vpop.permute.xlu0 %2166
          %2176 = vst.msk [vmem:[%s359 + $0x4] sm:$0x1] %vm1758, %v2153
          %2177 = vst.msk [vmem:[%s359 + $0xc] sm:$0x1] %vm1758, %v2155
          %2178 = vst.msk [vmem:[%s359 + $0x14] sm:$0x1] %vm1758, %v2157
          %2179 = vst.msk [vmem:[%s359 + $0x1c] sm:$0x1] %vm1758, %v2159
          %2180 = vst.msk [vmem:[%s359 + $0x24] sm:$0x1] %vm1758, %v2161
          %2181 = vst.msk [vmem:[%s359 + $0x2c] sm:$0x1] %vm1758, %v2163
          %2182 = vst.msk [vmem:[%s359 + $0x34] sm:$0x1] %vm1758, %v2165
          %2183 = vst.msk [vmem:[%s359 + $0x3c] sm:$0x1] %vm1758, %v2167
          %v2184 = vld [vmem:[%s409] sm:$0xff]
          %2185 = vrot.lane.b32.xlu0 %v2120, 32
          %v2186 = vpop.permute.xlu0 %2185
          %v2188 = vadd.f32 %v2184, %v2186
          %2189 = vst.msk [vmem:[%s409] sm:$0xff] %vm1644, %v2188
          %v2190 = vld [vmem:[%s413] sm:$0xff]
          %v2191 = vmul.f32 %v2120, %v2120
          %2193 = vrot.lane.b32.xlu0 %v2191, 32
          %v2194 = vpop.permute.xlu0 %2193
          %v2196 = vadd.f32 %v2190, %v2194
          %2197 = vst.msk [vmem:[%s413] sm:$0xff] %vm1644, %v2196
          %s2198 = sadd.s32 %s1639, 3
          %v2199 = vld [vmem:[#allocation2] sm:$0xff]
          %v2200 = vld [vmem:[#allocation3] sm:$0xff]
          %v2201 = vld [vmem:[#allocation4 + $0x18] sm:$0xff]
          %v2203 = vsel %vm1644, %v2199, 0
          %2205 = vmatpush.msra.mxu0 0.0
          %2206 = vmatpush.msra.mxu0 0.0
          %2207 = vmatpush.msra.mxu0 0.0
          %2208 = vmatpush.msra.mxu0 0.0
          %2209 = vmatpush.msra.mxu0 0.0
          %2210 = vmatpush.msra.mxu0 0.0
          %2211 = vmatpush.msra.mxu0 0.0
          %2212 = vmatpush.msra.mxu0 0.0
          %2213 = vmatpush.msra.mxu0 0.0
          %2214 = vmatpush.msra.mxu0 0.0
          %2215 = vmatpush.msra.mxu0 0.0
          %2216 = vmatpush.msra.mxu0 0.0
          %2217 = vmatpush.msra.mxu0 %v427
          %2218 = vmatpush.msra.mxu0 %v426
          %2219 = vmatpush.msra.mxu0 %v425
          %2220 = vmatpush.msra.mxu0 %v424
          %2221 = vmatmul.f32.gmra.mxu0 %v2203
          %v2222 = vpop.f32.mrf.mxu0
          %v2223 = vadd.f32 0.0, %v2222
          %2224 = vdwg.mxu0
          %v2225 = vadd.f32 %v2201, %v2223
          %v2226 = vmul.f32 %v2225, 0.5
          %v2227 = vtanh.pop %v2226
          %v2228 = vmul.f32 %v2227, 0.5
          %v2229 = vadd.f32 %v2228, 0.5
          %v2230 = vtanh.pop %v2225
          %2232 = vrot.lane.b32.xlu0 %v2200, 32
          %v2233 = vpop.permute.xlu0 %2232
          %v2235 = vmul.f32 %v2229, %v2233
          %2237 = vrot.lane.b32.xlu0 %v2230, 64
          %v2238 = vpop.permute.xlu0 %2237
          %v2240 = vmul.f32 %v2229, %v2238
          %2242 = vrot.lane.b32.xlu0 %v2240, 32
          %v2243 = vpop.permute.xlu0 %2242
          %v2245 = vadd.f32 %v2235, %v2243
          %v2246 = vtanh.pop %v2245
          %2248 = vrot.lane.b32.xlu0 %v2246, 64
          %v2249 = vpop.permute.xlu0 %2248
          %v2251 = vmul.f32 %v2229, %v2249
          %v2252 = vstv %s2198
          %vm2253 = vcmp.lt.s32.totalorder %v2252, %v423
          %v2254 = vsel %vm2253, 1, 0
          %2255 = vset.pattern.permute.xlu0 0
          %2256 = vperm.xlu0 %2255, %v2254
          %v2257 = vpop.permute.xlu0 %2256
          %vm2258 = vcmp.eq.s32.totalorder %v2257, 1
          %v2259 = vsel %vm2258, %v2251, 0.0
          %2260 = vrot.lane.b32.xlu0 %v2199, 96
          %v2261 = vpop.permute.xlu0 %2260
          %v2263 = vsel %vm2258, %v2251, %v2261
          %2265 = vrot.lane.b32.xlu0 %v2263, 32
          %v2266 = vpop.permute.xlu0 %2265
          %2268 = vst.msk [vmem:[#allocation2] sm:$0xff] %vm1644, %v2266
          %v2269 = vsel %vm2258, %v2245, %v2233
          %2271 = vrot.lane.b32.xlu0 %v2269, 96
          %v2272 = vpop.permute.xlu0 %2271
          %2274 = vst.msk [vmem:[#allocation3] sm:$0xff] %vm1644, %v2272
          %v2276 = vrot.slane %v2259, 1
          %v2277 = vrot.slane %v2259, 2
          %v2278 = vrot.slane %v2259, 3
          %v2279 = vrot.slane %v2259, 4
          %v2280 = vrot.slane %v2259, 5
          %v2281 = vrot.slane %v2259, 6
          %v2282 = vrot.slane %v2259, 7
          %v2283 = vperm.slane %v2259, 0
          %v2284 = vperm.slane %v2276, 0
          %v2285 = vperm.slane %v2277, 0
          %v2286 = vperm.slane %v2278, 0
          %v2287 = vperm.slane %v2279, 0
          %v2288 = vperm.slane %v2280, 0
          %v2289 = vperm.slane %v2281, 0
          %v2290 = vperm.slane %v2282, 0
          %2291 = vrot.lane.b32.xlu0 %v2283, 32
          %v2292 = vpop.permute.xlu0 %2291
          %2293 = vrot.lane.b32.xlu0 %v2284, 32
          %v2294 = vpop.permute.xlu0 %2293
          %2295 = vrot.lane.b32.xlu0 %v2285, 32
          %v2296 = vpop.permute.xlu0 %2295
          %2297 = vrot.lane.b32.xlu0 %v2286, 32
          %v2298 = vpop.permute.xlu0 %2297
          %2299 = vrot.lane.b32.xlu0 %v2287, 32
          %v2300 = vpop.permute.xlu0 %2299
          %2301 = vrot.lane.b32.xlu0 %v2288, 32
          %v2302 = vpop.permute.xlu0 %2301
          %2303 = vrot.lane.b32.xlu0 %v2289, 32
          %v2304 = vpop.permute.xlu0 %2303
          %2305 = vrot.lane.b32.xlu0 %v2290, 32
          %v2306 = vpop.permute.xlu0 %2305
          %2315 = vst.msk [vmem:[%s359 + $0x3] sm:$0x1] %vm1758, %v2292
          %2316 = vst.msk [vmem:[%s359 + $0xb] sm:$0x1] %vm1758, %v2294
          %2317 = vst.msk [vmem:[%s359 + $0x13] sm:$0x1] %vm1758, %v2296
          %2318 = vst.msk [vmem:[%s359 + $0x1b] sm:$0x1] %vm1758, %v2298
          %2319 = vst.msk [vmem:[%s359 + $0x23] sm:$0x1] %vm1758, %v2300
          %2320 = vst.msk [vmem:[%s359 + $0x2b] sm:$0x1] %vm1758, %v2302
          %2321 = vst.msk [vmem:[%s359 + $0x33] sm:$0x1] %vm1758, %v2304
          %2322 = vst.msk [vmem:[%s359 + $0x3b] sm:$0x1] %vm1758, %v2306
          %v2323 = vld [vmem:[%s409] sm:$0xff]
          %2324 = vrot.lane.b32.xlu0 %v2259, 32
          %v2325 = vpop.permute.xlu0 %2324
          %v2327 = vadd.f32 %v2323, %v2325
          %2328 = vst.msk [vmem:[%s409] sm:$0xff] %vm1644, %v2327
          %v2329 = vld [vmem:[%s413] sm:$0xff]
          %v2330 = vmul.f32 %v2259, %v2259
          %2332 = vrot.lane.b32.xlu0 %v2330, 32
          %v2333 = vpop.permute.xlu0 %2332
          %v2335 = vadd.f32 %v2329, %v2333
          %2336 = vst.msk [vmem:[%s413] sm:$0xff] %vm1644, %v2335
          %s2337 = sadd.s32 %s1639, 2
          %v2338 = vld [vmem:[#allocation2] sm:$0xff]
          %v2339 = vld [vmem:[#allocation3] sm:$0xff]
          %v2340 = vld [vmem:[#allocation4 + $0x10] sm:$0xff]
          %v2342 = vsel %vm1644, %v2338, 0
          %2344 = vmatpush.msra.mxu0 0.0
          %2345 = vmatpush.msra.mxu0 0.0
          %2346 = vmatpush.msra.mxu0 0.0
          %2347 = vmatpush.msra.mxu0 0.0
          %2348 = vmatpush.msra.mxu0 0.0
          %2349 = vmatpush.msra.mxu0 0.0
          %2350 = vmatpush.msra.mxu0 0.0
          %2351 = vmatpush.msra.mxu0 0.0
          %2352 = vmatpush.msra.mxu0 0.0
          %2353 = vmatpush.msra.mxu0 0.0
          %2354 = vmatpush.msra.mxu0 0.0
          %2355 = vmatpush.msra.mxu0 0.0
          %2356 = vmatpush.msra.mxu0 %v427
          %2357 = vmatpush.msra.mxu0 %v426
          %2358 = vmatpush.msra.mxu0 %v425
          %2359 = vmatpush.msra.mxu0 %v424
          %2360 = vmatmul.f32.gmra.mxu0 %v2342
          %v2361 = vpop.f32.mrf.mxu0
          %v2362 = vadd.f32 0.0, %v2361
          %2363 = vdwg.mxu0
          %v2364 = vadd.f32 %v2340, %v2362
          %v2365 = vmul.f32 %v2364, 0.5
          %v2366 = vtanh.pop %v2365
          %v2367 = vmul.f32 %v2366, 0.5
          %v2368 = vadd.f32 %v2367, 0.5
          %v2369 = vtanh.pop %v2364
          %2371 = vrot.lane.b32.xlu0 %v2339, 32
          %v2372 = vpop.permute.xlu0 %2371
          %v2374 = vmul.f32 %v2368, %v2372
          %2376 = vrot.lane.b32.xlu0 %v2369, 64
          %v2377 = vpop.permute.xlu0 %2376
          %v2379 = vmul.f32 %v2368, %v2377
          %2381 = vrot.lane.b32.xlu0 %v2379, 32
          %v2382 = vpop.permute.xlu0 %2381
          %v2384 = vadd.f32 %v2374, %v2382
          %v2385 = vtanh.pop %v2384
          %2387 = vrot.lane.b32.xlu0 %v2385, 64
          %v2388 = vpop.permute.xlu0 %2387
          %v2390 = vmul.f32 %v2368, %v2388
          %v2391 = vstv %s2337
          %vm2392 = vcmp.lt.s32.totalorder %v2391, %v423
          %v2393 = vsel %vm2392, 1, 0
          %2394 = vset.pattern.permute.xlu0 0
          %2395 = vperm.xlu0 %2394, %v2393
          %v2396 = vpop.permute.xlu0 %2395
          %vm2397 = vcmp.eq.s32.totalorder %v2396, 1
          %v2398 = vsel %vm2397, %v2390, 0.0
          %2399 = vrot.lane.b32.xlu0 %v2338, 96
          %v2400 = vpop.permute.xlu0 %2399
          %v2402 = vsel %vm2397, %v2390, %v2400
          %2404 = vrot.lane.b32.xlu0 %v2402, 32
          %v2405 = vpop.permute.xlu0 %2404
          %2407 = vst.msk [vmem:[#allocation2] sm:$0xff] %vm1644, %v2405
          %v2408 = vsel %vm2397, %v2384, %v2372
          %2410 = vrot.lane.b32.xlu0 %v2408, 96
          %v2411 = vpop.permute.xlu0 %2410
          %2413 = vst.msk [vmem:[#allocation3] sm:$0xff] %vm1644, %v2411
          %v2415 = vrot.slane %v2398, 1
          %v2416 = vrot.slane %v2398, 2
          %v2417 = vrot.slane %v2398, 3
          %v2418 = vrot.slane %v2398, 4
          %v2419 = vrot.slane %v2398, 5
          %v2420 = vrot.slane %v2398, 6
          %v2421 = vrot.slane %v2398, 7
          %v2422 = vperm.slane %v2398, 0
          %v2423 = vperm.slane %v2415, 0
          %v2424 = vperm.slane %v2416, 0
          %v2425 = vperm.slane %v2417, 0
          %v2426 = vperm.slane %v2418, 0
          %v2427 = vperm.slane %v2419, 0
          %v2428 = vperm.slane %v2420, 0
          %v2429 = vperm.slane %v2421, 0
          %2430 = vrot.lane.b32.xlu0 %v2422, 32
          %v2431 = vpop.permute.xlu0 %2430
          %2432 = vrot.lane.b32.xlu0 %v2423, 32
          %v2433 = vpop.permute.xlu0 %2432
          %2434 = vrot.lane.b32.xlu0 %v2424, 32
          %v2435 = vpop.permute.xlu0 %2434
          %2436 = vrot.lane.b32.xlu0 %v2425, 32
          %v2437 = vpop.permute.xlu0 %2436
          %2438 = vrot.lane.b32.xlu0 %v2426, 32
          %v2439 = vpop.permute.xlu0 %2438
          %2440 = vrot.lane.b32.xlu0 %v2427, 32
          %v2441 = vpop.permute.xlu0 %2440
          %2442 = vrot.lane.b32.xlu0 %v2428, 32
          %v2443 = vpop.permute.xlu0 %2442
          %2444 = vrot.lane.b32.xlu0 %v2429, 32
          %v2445 = vpop.permute.xlu0 %2444
          %2454 = vst.msk [vmem:[%s359 + $0x2] sm:$0x1] %vm1758, %v2431
          %2455 = vst.msk [vmem:[%s359 + $0xa] sm:$0x1] %vm1758, %v2433
          %2456 = vst.msk [vmem:[%s359 + $0x12] sm:$0x1] %vm1758, %v2435
          %2457 = vst.msk [vmem:[%s359 + $0x1a] sm:$0x1] %vm1758, %v2437
          %2458 = vst.msk [vmem:[%s359 + $0x22] sm:$0x1] %vm1758, %v2439
          %2459 = vst.msk [vmem:[%s359 + $0x2a] sm:$0x1] %vm1758, %v2441
          %2460 = vst.msk [vmem:[%s359 + $0x32] sm:$0x1] %vm1758, %v2443
          %2461 = vst.msk [vmem:[%s359 + $0x3a] sm:$0x1] %vm1758, %v2445
          %v2462 = vld [vmem:[%s409] sm:$0xff]
          %2463 = vrot.lane.b32.xlu0 %v2398, 32
          %v2464 = vpop.permute.xlu0 %2463
          %v2466 = vadd.f32 %v2462, %v2464
          %2467 = vst.msk [vmem:[%s409] sm:$0xff] %vm1644, %v2466
          %v2468 = vld [vmem:[%s413] sm:$0xff]
          %v2469 = vmul.f32 %v2398, %v2398
          %2471 = vrot.lane.b32.xlu0 %v2469, 32
          %v2472 = vpop.permute.xlu0 %2471
          %v2474 = vadd.f32 %v2468, %v2472
          %2475 = vst.msk [vmem:[%s413] sm:$0xff] %vm1644, %v2474
          %s2476 = sadd.s32 %s1639, 1
          %v2477 = vld [vmem:[#allocation2] sm:$0xff]
          %v2478 = vld [vmem:[#allocation3] sm:$0xff]
          %v2479 = vld [vmem:[#allocation4 + $0x8] sm:$0xff]
          %v2481 = vsel %vm1644, %v2477, 0
          %2483 = vmatpush.msra.mxu0 0.0
          %2484 = vmatpush.msra.mxu0 0.0
          %2485 = vmatpush.msra.mxu0 0.0
          %2486 = vmatpush.msra.mxu0 0.0
          %2487 = vmatpush.msra.mxu0 0.0
          %2488 = vmatpush.msra.mxu0 0.0
          %2489 = vmatpush.msra.mxu0 0.0
          %2490 = vmatpush.msra.mxu0 0.0
          %2491 = vmatpush.msra.mxu0 0.0
          %2492 = vmatpush.msra.mxu0 0.0
          %2493 = vmatpush.msra.mxu0 0.0
          %2494 = vmatpush.msra.mxu0 0.0
          %2495 = vmatpush.msra.mxu0 %v427
          %2496 = vmatpush.msra.mxu0 %v426
          %2497 = vmatpush.msra.mxu0 %v425
          %2498 = vmatpush.msra.mxu0 %v424
          %2499 = vmatmul.f32.gmra.mxu0 %v2481
          %v2500 = vpop.f32.mrf.mxu0
          %v2501 = vadd.f32 0.0, %v2500
          %2502 = vdwg.mxu0
          %v2503 = vadd.f32 %v2479, %v2501
          %v2504 = vmul.f32 %v2503, 0.5
          %v2505 = vtanh.pop %v2504
          %v2506 = vmul.f32 %v2505, 0.5
          %v2507 = vadd.f32 %v2506, 0.5
          %v2508 = vtanh.pop %v2503
          %2510 = vrot.lane.b32.xlu0 %v2478, 32
          %v2511 = vpop.permute.xlu0 %2510
          %v2513 = vmul.f32 %v2507, %v2511
          %2515 = vrot.lane.b32.xlu0 %v2508, 64
          %v2516 = vpop.permute.xlu0 %2515
          %v2518 = vmul.f32 %v2507, %v2516
          %2520 = vrot.lane.b32.xlu0 %v2518, 32
          %v2521 = vpop.permute.xlu0 %2520
          %v2523 = vadd.f32 %v2513, %v2521
          %v2524 = vtanh.pop %v2523
          %2526 = vrot.lane.b32.xlu0 %v2524, 64
          %v2527 = vpop.permute.xlu0 %2526
          %v2529 = vmul.f32 %v2507, %v2527
          %v2530 = vstv %s2476
          %vm2531 = vcmp.lt.s32.totalorder %v2530, %v423
          %v2532 = vsel %vm2531, 1, 0
          %2533 = vset.pattern.permute.xlu0 0
          %2534 = vperm.xlu0 %2533, %v2532
          %v2535 = vpop.permute.xlu0 %2534
          %vm2536 = vcmp.eq.s32.totalorder %v2535, 1
          %v2537 = vsel %vm2536, %v2529, 0.0
          %2538 = vrot.lane.b32.xlu0 %v2477, 96
          %v2539 = vpop.permute.xlu0 %2538
          %v2541 = vsel %vm2536, %v2529, %v2539
          %2543 = vrot.lane.b32.xlu0 %v2541, 32
          %v2544 = vpop.permute.xlu0 %2543
          %2546 = vst.msk [vmem:[#allocation2] sm:$0xff] %vm1644, %v2544
          %v2547 = vsel %vm2536, %v2523, %v2511
          %2549 = vrot.lane.b32.xlu0 %v2547, 96
          %v2550 = vpop.permute.xlu0 %2549
          %2552 = vst.msk [vmem:[#allocation3] sm:$0xff] %vm1644, %v2550
          %v2554 = vrot.slane %v2537, 1
          %v2555 = vrot.slane %v2537, 2
          %v2556 = vrot.slane %v2537, 3
          %v2557 = vrot.slane %v2537, 4
          %v2558 = vrot.slane %v2537, 5
          %v2559 = vrot.slane %v2537, 6
          %v2560 = vrot.slane %v2537, 7
          %v2561 = vperm.slane %v2537, 0
          %v2562 = vperm.slane %v2554, 0
          %v2563 = vperm.slane %v2555, 0
          %v2564 = vperm.slane %v2556, 0
          %v2565 = vperm.slane %v2557, 0
          %v2566 = vperm.slane %v2558, 0
          %v2567 = vperm.slane %v2559, 0
          %v2568 = vperm.slane %v2560, 0
          %2569 = vrot.lane.b32.xlu0 %v2561, 32
          %v2570 = vpop.permute.xlu0 %2569
          %2571 = vrot.lane.b32.xlu0 %v2562, 32
          %v2572 = vpop.permute.xlu0 %2571
          %2573 = vrot.lane.b32.xlu0 %v2563, 32
          %v2574 = vpop.permute.xlu0 %2573
          %2575 = vrot.lane.b32.xlu0 %v2564, 32
          %v2576 = vpop.permute.xlu0 %2575
          %2577 = vrot.lane.b32.xlu0 %v2565, 32
          %v2578 = vpop.permute.xlu0 %2577
          %2579 = vrot.lane.b32.xlu0 %v2566, 32
          %v2580 = vpop.permute.xlu0 %2579
          %2581 = vrot.lane.b32.xlu0 %v2567, 32
          %v2582 = vpop.permute.xlu0 %2581
          %2583 = vrot.lane.b32.xlu0 %v2568, 32
          %v2584 = vpop.permute.xlu0 %2583
          %2593 = vst.msk [vmem:[%s359 + $0x1] sm:$0x1] %vm1758, %v2570
          %2594 = vst.msk [vmem:[%s359 + $0x9] sm:$0x1] %vm1758, %v2572
          %2595 = vst.msk [vmem:[%s359 + $0x11] sm:$0x1] %vm1758, %v2574
          %2596 = vst.msk [vmem:[%s359 + $0x19] sm:$0x1] %vm1758, %v2576
          %2597 = vst.msk [vmem:[%s359 + $0x21] sm:$0x1] %vm1758, %v2578
          %2598 = vst.msk [vmem:[%s359 + $0x29] sm:$0x1] %vm1758, %v2580
          %2599 = vst.msk [vmem:[%s359 + $0x31] sm:$0x1] %vm1758, %v2582
          %2600 = vst.msk [vmem:[%s359 + $0x39] sm:$0x1] %vm1758, %v2584
          %v2601 = vld [vmem:[%s409] sm:$0xff]
          %2602 = vrot.lane.b32.xlu0 %v2537, 32
          %v2603 = vpop.permute.xlu0 %2602
          %v2605 = vadd.f32 %v2601, %v2603
          %2606 = vst.msk [vmem:[%s409] sm:$0xff] %vm1644, %v2605
          %v2607 = vld [vmem:[%s413] sm:$0xff]
          %v2608 = vmul.f32 %v2537, %v2537
          %2610 = vrot.lane.b32.xlu0 %v2608, 32
          %v2611 = vpop.permute.xlu0 %2610
          %v2613 = vadd.f32 %v2607, %v2611
          %2614 = vst.msk [vmem:[%s413] sm:$0xff] %vm1644, %v2613
          %v2615 = vld [vmem:[#allocation2] sm:$0xff]
          %v2616 = vld [vmem:[#allocation3] sm:$0xff]
          %v2617 = vld [vmem:[#allocation4] sm:$0xff]
          %v2619 = vsel %vm1644, %v2615, 0
          %2621 = vmatpush.msra.mxu0 0.0
          %2622 = vmatpush.msra.mxu0 0.0
          %2623 = vmatpush.msra.mxu0 0.0
          %2624 = vmatpush.msra.mxu0 0.0
          %2625 = vmatpush.msra.mxu0 0.0
          %2626 = vmatpush.msra.mxu0 0.0
          %2627 = vmatpush.msra.mxu0 0.0
          %2628 = vmatpush.msra.mxu0 0.0
          %2629 = vmatpush.msra.mxu0 0.0
          %2630 = vmatpush.msra.mxu0 0.0
          %2631 = vmatpush.msra.mxu0 0.0
          %2632 = vmatpush.msra.mxu0 0.0
          %2633 = vmatpush.msra.mxu0 %v427
          %2634 = vmatpush.msra.mxu0 %v426
          %2635 = vmatpush.msra.mxu0 %v425
          %2636 = vmatpush.msra.mxu0 %v424
          %2637 = vmatmul.f32.gmra.mxu0 %v2619
          %v2638 = vpop.f32.mrf.mxu0
          %v2639 = vadd.f32 0.0, %v2638
          %2640 = vdwg.mxu0
          %v2641 = vadd.f32 %v2617, %v2639
          %v2642 = vmul.f32 %v2641, 0.5
          %v2643 = vtanh.pop %v2642
          %v2644 = vmul.f32 %v2643, 0.5
          %v2645 = vadd.f32 %v2644, 0.5
          %v2646 = vtanh.pop %v2641
          %2648 = vrot.lane.b32.xlu0 %v2616, 32
          %v2649 = vpop.permute.xlu0 %2648
          %v2651 = vmul.f32 %v2645, %v2649
          %2653 = vrot.lane.b32.xlu0 %v2646, 64
          %v2654 = vpop.permute.xlu0 %2653
          %v2656 = vmul.f32 %v2645, %v2654
          %2658 = vrot.lane.b32.xlu0 %v2656, 32
          %v2659 = vpop.permute.xlu0 %2658
          %v2661 = vadd.f32 %v2651, %v2659
          %v2662 = vtanh.pop %v2661
          %2664 = vrot.lane.b32.xlu0 %v2662, 64
          %v2665 = vpop.permute.xlu0 %2664
          %v2667 = vmul.f32 %v2645, %v2665
          %v2668 = vstv %s1639
          %vm2669 = vcmp.lt.s32.totalorder %v2668, %v423
          %v2670 = vsel %vm2669, 1, 0
          %2671 = vset.pattern.permute.xlu0 0
          %2672 = vperm.xlu0 %2671, %v2670
          %v2673 = vpop.permute.xlu0 %2672
          %vm2674 = vcmp.eq.s32.totalorder %v2673, 1
          %v2675 = vsel %vm2674, %v2667, 0.0
          %2676 = vrot.lane.b32.xlu0 %v2615, 96
          %v2677 = vpop.permute.xlu0 %2676
          %v2679 = vsel %vm2674, %v2667, %v2677
          %2681 = vrot.lane.b32.xlu0 %v2679, 32
          %v2682 = vpop.permute.xlu0 %2681
          %2684 = vst.msk [vmem:[#allocation2] sm:$0xff] %vm1644, %v2682
          %v2685 = vsel %vm2674, %v2661, %v2649
          %2687 = vrot.lane.b32.xlu0 %v2685, 96
          %v2688 = vpop.permute.xlu0 %2687
          %2690 = vst.msk [vmem:[#allocation3] sm:$0xff] %vm1644, %v2688
          %v2692 = vrot.slane %v2675, 1
          %v2693 = vrot.slane %v2675, 2
          %v2694 = vrot.slane %v2675, 3
          %v2695 = vrot.slane %v2675, 4
          %v2696 = vrot.slane %v2675, 5
          %v2697 = vrot.slane %v2675, 6
          %v2698 = vrot.slane %v2675, 7
          %v2699 = vperm.slane %v2675, 0
          %v2700 = vperm.slane %v2692, 0
          %v2701 = vperm.slane %v2693, 0
          %v2702 = vperm.slane %v2694, 0
          %v2703 = vperm.slane %v2695, 0
          %v2704 = vperm.slane %v2696, 0
          %v2705 = vperm.slane %v2697, 0
          %v2706 = vperm.slane %v2698, 0
          %2707 = vrot.lane.b32.xlu0 %v2699, 32
          %v2708 = vpop.permute.xlu0 %2707
          %2709 = vrot.lane.b32.xlu0 %v2700, 32
          %v2710 = vpop.permute.xlu0 %2709
          %2711 = vrot.lane.b32.xlu0 %v2701, 32
          %v2712 = vpop.permute.xlu0 %2711
          %2713 = vrot.lane.b32.xlu0 %v2702, 32
          %v2714 = vpop.permute.xlu0 %2713
          %2715 = vrot.lane.b32.xlu0 %v2703, 32
          %v2716 = vpop.permute.xlu0 %2715
          %2717 = vrot.lane.b32.xlu0 %v2704, 32
          %v2718 = vpop.permute.xlu0 %2717
          %2719 = vrot.lane.b32.xlu0 %v2705, 32
          %v2720 = vpop.permute.xlu0 %2719
          %2721 = vrot.lane.b32.xlu0 %v2706, 32
          %v2722 = vpop.permute.xlu0 %2721
          %2731 = vst.msk [vmem:[%s359] sm:$0x1] %vm1758, %v2708
          %2732 = vst.msk [vmem:[%s359 + $0x8] sm:$0x1] %vm1758, %v2710
          %2733 = vst.msk [vmem:[%s359 + $0x10] sm:$0x1] %vm1758, %v2712
          %2734 = vst.msk [vmem:[%s359 + $0x18] sm:$0x1] %vm1758, %v2714
          %2735 = vst.msk [vmem:[%s359 + $0x20] sm:$0x1] %vm1758, %v2716
          %2736 = vst.msk [vmem:[%s359 + $0x28] sm:$0x1] %vm1758, %v2718
          %2737 = vst.msk [vmem:[%s359 + $0x30] sm:$0x1] %vm1758, %v2720
          %2738 = vst.msk [vmem:[%s359 + $0x38] sm:$0x1] %vm1758, %v2722
          %v2739 = vld [vmem:[%s409] sm:$0xff]
          %2740 = vrot.lane.b32.xlu0 %v2675, 32
          %v2741 = vpop.permute.xlu0 %2740
          %v2743 = vadd.f32 %v2739, %v2741
          %2744 = vst.msk [vmem:[%s409] sm:$0xff] %vm1644, %v2743
          %v2745 = vld [vmem:[%s413] sm:$0xff]
          %v2746 = vmul.f32 %v2675, %v2675
          %2748 = vrot.lane.b32.xlu0 %v2746, 32
          %v2749 = vpop.permute.xlu0 %2748
          %v2751 = vadd.f32 %v2745, %v2749
          %2752 = vst.msk [vmem:[%s413] sm:$0xff] %vm1644, %v2751
        $region52: #{rnn_bn_act_forward.2} parent=39 // pred_fallthru
          _
        %s2753 = sand.u32 %s186, 1
        %s2754 = sand.u32 %s186, 1
        %s2755 = smul.addr %s2754, 64
        %s2756 = scalar_lea.vmem [#allocation5], %s2755
        %p2757 = scmp.lt.s32.totalorder %s23, 1
        %s2758 = scalar_select %p2757, %s23, 1
        %s2759 = smul.addr %s2758, 8
        %s2760 = scalar_lea.vmem %s6, %s2759
        %p2761 = scmp.lt.s32.totalorder %s23, 1
        %s2762 = scalar_select %p2761, %s23, 1
        %s2763 = smul.addr %s2762, 8
        %s2764 = scalar_lea.vmem %s7, %s2763
        // Predicated region
        $region53: #{rnn_bn_act_forward.2} parent=39 // pred_check
          %p2765 = pneg %p196
        $region54: #{rnn_bn_act_forward.2} parent=39 // pred_check_branch
          %2767 = sbr.rel (%p2765) target = $region56
        $region55: #{rnn_bn_act_forward.2} parent=39 // pred_region
          %s2768 = ssub.s32 1, %s23
          %s2769 = smul.u32 %s2768, %s24
          %s2770 = ssub.s32 1, %s24
          %s2771 = smul.u32 %s23, %s2770
          %s2772 = sadd.s32 %s2769, %s2771
          %s2773 = smul.addr %s23, 16
          %s2774 = sadd.s32 %s2772, %s2773
          %s2775 = smul.addr %s2774, 8
          %s2776 = scalar_lea.vmem %s5, %s2775
          // Predicated region
          $region57: #{rnn_bn_act_forward.2} parent=55 // pred_check
            _
          $region58: #{rnn_bn_act_forward.2} parent=55 // pred_check_branch
            %2778 = sbr.rel (0) target = $region60
          $region59: #{rnn_bn_act_forward.2} parent=55 // pred_region
            // Predicated region
            $region61: #{rnn_bn_act_forward.2} parent=59 // pred_check
              _
            $region62: #{rnn_bn_act_forward.2} parent=59 // pred_check_branch
              %2780 = sbr.rel (0) target = $region64
            $region63: #{rnn_bn_act_forward.2} parent=59 // pred_region
              // Predicated region
              $region76: #{rnn_bn_act_forward.2} parent=63 // pred_check
                _
              $region77: #{rnn_bn_act_forward.2} parent=63 // pred_check_branch
                %2810 = sbr.rel (0) target = $region79
              $region78: #{rnn_bn_act_forward.2} parent=63 // pred_region
                loop: start=0, step=1, limit=1
                $region80: #{rnn_bn_act_forward.2} parent=78 // loop_pre_header
                  _
                $region81: #{rnn_bn_act_forward.2} parent=78 // loop_header
                  %s2812 = sphi 0, %s2816
                  %p2813 = scmp.ge.s32.totalorder %s2812, 1
                  %s2817 = sphi %s2756, %s2756
                  %s2818 = sphi %s2776, %s2776
                $region82: #{rnn_bn_act_forward.2} parent=78 // loop_header_branch
                  %2815 = sbr.rel (%p2813) target = $region86
                $region83: #{rnn_bn_act_forward.2} parent=78 // loop_body
                  %v2819 = vld [vmem:[%s2817] sm:$0xff]
                  %2820 = vst [vmem:[%s2818] sm:$0xff] %v2819
                  %v2821 = vld [vmem:[%s2817 + $0x8] sm:$0xff]
                  %2822 = vst [vmem:[%s2818 + $0x10] sm:$0xff] %v2821
                  %v2823 = vld [vmem:[%s2817 + $0x10] sm:$0xff]
                  %2824 = vst [vmem:[%s2818 + $0x20] sm:$0xff] %v2823
                  %v2825 = vld [vmem:[%s2817 + $0x18] sm:$0xff]
                  %2826 = vst [vmem:[%s2818 + $0x30] sm:$0xff] %v2825
                  %v2827 = vld [vmem:[%s2817 + $0x20] sm:$0xff]
                  %2828 = vst [vmem:[%s2818 + $0x40] sm:$0xff] %v2827
                  %v2829 = vld [vmem:[%s2817 + $0x28] sm:$0xff]
                  %2830 = vst [vmem:[%s2818 + $0x50] sm:$0xff] %v2829
                  %v2831 = vld [vmem:[%s2817 + $0x30] sm:$0xff]
                  %2832 = vst [vmem:[%s2818 + $0x60] sm:$0xff] %v2831
                  %v2833 = vld [vmem:[%s2817 + $0x38] sm:$0xff]
                  %2834 = vst [vmem:[%s2818 + $0x70] sm:$0xff] %v2833
                $region84: #{rnn_bn_act_forward.2} parent=78 // loop_footer
                  %s2816 = sadd.s32 1, %s2812
                $region85: #{rnn_bn_act_forward.2} parent=78 // loop_footer_branch
                  %2811 = sbr.rel target = $region81
                $region86: #{rnn_bn_act_forward.2} parent=78 // loop_exit
                  _
              $region79: #{rnn_bn_act_forward.2} parent=63 // pred_fallthru
                _
              // Predicated region
              $region87: #{rnn_bn_act_forward.2} parent=63 // pred_check
                _
              $region88: #{rnn_bn_act_forward.2} parent=63 // pred_check_branch
                %2836 = sbr.rel target = $region90
              $region89: #{rnn_bn_act_forward.2} parent=63 // pred_region
                _
              $region90: #{rnn_bn_act_forward.2} parent=63 // pred_fallthru
                _
            $region64: #{rnn_bn_act_forward.2} parent=59 // pred_fallthru
              _
            // Predicated region
            $region65: #{rnn_bn_act_forward.2} parent=59 // pred_check
              _
            $region66: #{rnn_bn_act_forward.2} parent=59 // pred_check_branch
              %2782 = sbr.rel target = $region68
            $region67: #{rnn_bn_act_forward.2} parent=59 // pred_region
              %s2784 = ssub.s32 256, 1
              loop: start=0, step=1, limit=1
              $region69: #{rnn_bn_act_forward.2} parent=67 // loop_pre_header
                _
              $region70: #{rnn_bn_act_forward.2} parent=67 // loop_header
                %s2786 = sphi 0, %s2790
                %p2787 = scmp.ge.s32.totalorder %s2786, 1
                %s2791 = sphi %s2756, %s2756
                %s2792 = sphi %s2776, %s2776
              $region71: #{rnn_bn_act_forward.2} parent=67 // loop_header_branch
                %2789 = sbr.rel (%p2787) target = $region75
              $region72: #{rnn_bn_act_forward.2} parent=67 // loop_body
                %v2793 = vld [vmem:[%s2791] sm:%s2784]
                %2794 = vst [vmem:[%s2792] sm:%s2784] %v2793
                %v2795 = vld [vmem:[%s2791 + $0x8] sm:%s2784]
                %2796 = vst [vmem:[%s2792 + $0x10] sm:%s2784] %v2795
                %v2797 = vld [vmem:[%s2791 + $0x10] sm:%s2784]
                %2798 = vst [vmem:[%s2792 + $0x20] sm:%s2784] %v2797
                %v2799 = vld [vmem:[%s2791 + $0x18] sm:%s2784]
                %2800 = vst [vmem:[%s2792 + $0x30] sm:%s2784] %v2799
                %v2801 = vld [vmem:[%s2791 + $0x20] sm:%s2784]
                %2802 = vst [vmem:[%s2792 + $0x40] sm:%s2784] %v2801
                %v2803 = vld [vmem:[%s2791 + $0x28] sm:%s2784]
                %2804 = vst [vmem:[%s2792 + $0x50] sm:%s2784] %v2803
                %v2805 = vld [vmem:[%s2791 + $0x30] sm:%s2784]
                %2806 = vst [vmem:[%s2792 + $0x60] sm:%s2784] %v2805
                %v2807 = vld [vmem:[%s2791 + $0x38] sm:%s2784]
                %2808 = vst [vmem:[%s2792 + $0x70] sm:%s2784] %v2807
              $region73: #{rnn_bn_act_forward.2} parent=67 // loop_footer
                %s2790 = sadd.s32 1, %s2786
              $region74: #{rnn_bn_act_forward.2} parent=67 // loop_footer_branch
                %2785 = sbr.rel target = $region70
              $region75: #{rnn_bn_act_forward.2} parent=67 // loop_exit
                _
            $region68: #{rnn_bn_act_forward.2} parent=59 // pred_fallthru
              _
          $region60: #{rnn_bn_act_forward.2} parent=55 // pred_fallthru
            _
          %2837 = vnop
        $region56: #{rnn_bn_act_forward.2} parent=39 // pred_fallthru
          _
        // Predicated region
        $region91: #{rnn_bn_act_forward.2} parent=39 // pred_check
          %p2838 = pneg %p222
        $region92: #{rnn_bn_act_forward.2} parent=39 // pred_check_branch
          %2840 = sbr.rel (%p2838) target = $region94
        $region93: #{rnn_bn_act_forward.2} parent=39 // pred_region
          _
        $region94: #{rnn_bn_act_forward.2} parent=39 // pred_fallthru
          _
        // Predicated region
        $region95: #{rnn_bn_act_forward.2} parent=39 // pred_check
          %p2841 = pneg %p248
        $region96: #{rnn_bn_act_forward.2} parent=39 // pred_check_branch
          %2843 = sbr.rel (%p2841) target = $region98
        $region97: #{rnn_bn_act_forward.2} parent=39 // pred_region
          _
        $region98: #{rnn_bn_act_forward.2} parent=39 // pred_fallthru
          _
      $region40: #{rnn_bn_act_forward.2} parent=5 // pred_fallthru
        _
      %p2844 = scmp.le.s32.totalorder 2, %s14
      // Predicated region
      $region99: #{rnn_bn_act_forward.2} parent=5 // pred_check
        %p2845 = pneg %p2844
      $region100: #{rnn_bn_act_forward.2} parent=5 // pred_check_branch
        %2847 = sbr.rel (%p2845) target = $region102
      $region101: #{rnn_bn_act_forward.2} parent=5 // pred_region
        %s2848 = ssub.s32 %s14, 2
        // Predicated region
        $region103: #{rnn_bn_act_forward.2} parent=101 // pred_check
          %p2849 = pneg %p202
        $region104: #{rnn_bn_act_forward.2} parent=101 // pred_check_branch
          %2851 = sbr.rel (%p2849) target = $region106
        $region105: #{rnn_bn_act_forward.2} parent=101 // pred_region
          %s2852 = sand.u32 %s187, 1
          %s2853 = sand.u32 %s187, 1
          %s2854 = smul.addr %s2853, 64
          %s2855 = scalar_lea.vmem [#allocation5], %s2854
        $region106: #{rnn_bn_act_forward.2} parent=101 // pred_fallthru
          _
        // Predicated region
        $region107: #{rnn_bn_act_forward.2} parent=101 // pred_check
          %p2856 = pneg %p228
        $region108: #{rnn_bn_act_forward.2} parent=101 // pred_check_branch
          %2858 = sbr.rel (%p2856) target = $region110
        $region109: #{rnn_bn_act_forward.2} parent=101 // pred_region
          %p2859 = scmp.lt.s32.totalorder %s25, 1
          %s2860 = scalar_select %p2859, %s25, 1
          %s2861 = smul.addr %s2860, 8
          %s2862 = scalar_lea.vmem %s6, %s2861
        $region110: #{rnn_bn_act_forward.2} parent=101 // pred_fallthru
          _
        // Predicated region
        $region111: #{rnn_bn_act_forward.2} parent=101 // pred_check
          %p2863 = pneg %p254
        $region112: #{rnn_bn_act_forward.2} parent=101 // pred_check_branch
          %2865 = sbr.rel (%p2863) target = $region114
        $region113: #{rnn_bn_act_forward.2} parent=101 // pred_region
          %p2866 = scmp.lt.s32.totalorder %s25, 1
          %s2867 = scalar_select %p2866, %s25, 1
          %s2868 = smul.addr %s2867, 8
          %s2869 = scalar_lea.vmem %s7, %s2868
        $region114: #{rnn_bn_act_forward.2} parent=101 // pred_fallthru
          _
      $region102: #{rnn_bn_act_forward.2} parent=5 // pred_fallthru
        _
    $region6: #{rnn_bn_act_forward.2} parent=1 // loop_footer
      %s18 = sadd.s32 1, %s14
    $region7: #{rnn_bn_act_forward.2} parent=1 // loop_footer_branch
      %13 = sbr.rel target = $region3
    $region8: #{rnn_bn_act_forward.2} parent=1 // loop_exit
      _

</llo_original>
